<compile_context>
chip_gen: v7x
topology: tpu7x:2x2x1
jax: 0.10.0
libtpu: 0.0.40
codegen_flags: <defaults>
</compile_context>

<pallas_src>
import math

import jax
import jax.numpy as jnp
from jax.experimental import pallas as pl
from jax.experimental.pallas import tpu as pltpu

DIMENSION = 4
HIDDEN = 7
EPS = 0.01
SOFTPLUS_THRESHOLD = 20.0  # torch.nn.Softplus default threshold
LANES = 128

# Packed parameter layout (all float32, row-major, in this exact order):
#   W_in[7,4], b_in[7],
#   4 x ( Wp[7,7] (already reparameterized), bp[7], Wl[7,4], bl[7] ),
#   W_out[1,7] (already reparameterized), b_out[1], Wl_out[1,4], bl_out[1]
PACKED_LEN = (HIDDEN * DIMENSION + HIDDEN
              + 4 * (HIDDEN * HIDDEN + HIDDEN + HIDDEN * DIMENSION + HIDDEN)
              + HIDDEN + 1 + DIMENSION + 1)  # = 412


# ----------------------------- math helpers --------------------------------

def _softplus(x):
    # torch.nn.Softplus(beta=1, threshold=20): linear above the threshold.
    return jnp.where(
        x > SOFTPLUS_THRESHOLD,
        x,
        jnp.log1p(jnp.exp(jnp.minimum(x, SOFTPLUS_THRESHOLD))),
    )


def _neg_reparam(w):
    # NegativeLinear: W >= 0 -> -exp(-W - eps);  W < 0 -> W - exp(-eps)
    return jnp.where(
        w >= 0.0,
        -jnp.exp(-w - EPS),
        w - jnp.float32(math.exp(-EPS)),
    )


# --------------------------------- kernel ----------------------------------

def entropy_kernel(params_ref, x0_ref, out_ref):
    # params_ref: [PACKED_LEN] f32 in SMEM (scalar reads, static indices)
    # x0_ref:     [DIMENSION, tile_rows, 128] f32 in VMEM
    # out_ref:    [tile_rows, 128] f32 in VMEM
    x0_feats = [x0_ref[d] for d in range(DIMENSION)]  # each [tile_rows, 128]

    pos = [0]

    def scalar():
        v = params_ref[pos[0]]
        pos[0] += 1
        return v

    def read_matrix(n_out, n_in):
        return [[scalar() for _ in range(n_in)] for _ in range(n_out)]

    def read_vector(n):
        return [scalar() for _ in range(n)]

    def apply(w_rows, feats, init=None):
        # y[h] = (init[h] +) sum_k w_rows[h][k] * feats[k]
        # scalar-broadcast FMAs on the VPU over the lane-wide batch.
        outs = []
        for h in range(len(w_rows)):
            acc = init[h] if init is not None else None
            for k, f in enumerate(feats):
                term = w_rows[h][k] * f
                acc = term if acc is None else acc + term
            outs.append(acc)
        return outs

    # input layer: x = -softplus(W_in @ x0 + b_in)
    w_in = read_matrix(HIDDEN, DIMENSION)
    b_in = read_vector(HIDDEN)
    pre = apply(w_in, x0_feats)
    x = [-_softplus(pre[h] + b_in[h]) for h in range(HIDDEN)]

    # four propagation + lateral blocks (prop weights already reparameterized)
    for _ in range(4):
        wp = read_matrix(HIDDEN, HIDDEN)
        bp = read_vector(HIDDEN)
        wl = read_matrix(HIDDEN, DIMENSION)
        bl = read_vector(HIDDEN)
        pre = apply(wp, x)
        pre = apply(wl, x0_feats, init=pre)
        x = [-_softplus(pre[h] + (bp[h] + bl[h])) for h in range(HIDDEN)]

    # output block
    w_out = read_matrix(1, HIDDEN)
    b_out = read_vector(1)
    wl_out = read_matrix(1, DIMENSION)
    bl_out = read_vector(1)
    pre = apply(w_out, x)
    pre = apply(wl_out, x0_feats, init=pre)
    out_ref[...] = -_softplus(pre[0] + (b_out[0] + bl_out[0]))


# -------------------------------- wrapper ----------------------------------

def pack_params(p):
    """Pack all weights/biases (prop weights pre-reparameterized) into one slab."""
    parts = [p["w_in"].reshape(-1), p["b_in"].reshape(-1)]
    for i in (1, 2, 3, 4):
        parts += [
            _neg_reparam(p[f"wp{i}"]).reshape(-1), p[f"bp{i}"].reshape(-1),
            p[f"wl{i}"].reshape(-1), p[f"bl{i}"].reshape(-1),
        ]
    parts += [
        _neg_reparam(p["w_out"]).reshape(-1), p["b_out"].reshape(-1),
        p["wl_out"].reshape(-1), p["bl_out"].reshape(-1),
    ]
    packed = jnp.concatenate(parts).astype(jnp.float32)
    assert packed.shape == (PACKED_LEN,)
    return packed


def entropy_network_forward(x0, params, *, tile_rows=64):
    """x0: [N, DIMENSION] float32 -> [N, 1] float32."""
    n, dim = x0.shape
    assert dim == DIMENSION
    assert tile_rows % 8 == 0, "tile_rows must be a multiple of 8 (sublane tiling)"

    packed = pack_params(params)

    # Layout plumbing: batch on lanes. Pad N up to a whole number of tiles.
    r = -(-n // LANES)                     # ceil(N / 128)
    tr = min(tile_rows, r)                 # either full extent or multiple of 8
    r_pad = -(-r // tr) * tr
    n_pad = r_pad * LANES

    x0_pad = jnp.pad(x0.astype(jnp.float32), ((0, n_pad - n), (0, 0)))
    x0_t = x0_pad.T.reshape(DIMENSION, r_pad, LANES)

    out = pl.pallas_call(
        entropy_kernel,
        out_shape=jax.ShapeDtypeStruct((r_pad, LANES), jnp.float32),
        grid_spec=pltpu.PrefetchScalarGridSpec(
            num_scalar_prefetch=0,
            grid=(r_pad // tr,),
            in_specs=[
                # One packed parameter slab, whole-array resident in SMEM.
                pl.BlockSpec(memory_space=pltpu.MemorySpace.SMEM),
                # x0 tile: [DIM, tile_rows, 128], batch on lanes.
                pl.BlockSpec((DIMENSION, tr, LANES), lambda i: (0, i, 0)),
            ],
            out_specs=pl.BlockSpec((tr, LANES), lambda i: (i, 0)),
        ),
        compiler_params=pltpu.CompilerParams(
            dimension_semantics=("parallel",),
            # Tiles are small (<1 MiB/step); default scoped VMEM is plenty.
        ),
    )(packed, x0_t)

    # Back to [N, 1]; element n sits at (n // 128, n % 128).
    return out.reshape(n_pad, 1)[:n]


# --------------------------- parameter init (synthetic) --------------------

def _kaiming_normal(key, out_f, in_f):
    # kaiming_normal_ default: fan_in mode, gain = sqrt(2)
    std = math.sqrt(2.0 / in_f)
    return std * jax.random.normal(key, (out_f, in_f), dtype=jnp.float32)


def init_params(key):
    keys = jax.random.split(key, 11)

    def lin(k, out_f, in_f):
        return _kaiming_normal(k, out_f, in_f), jnp.zeros((out_f,), jnp.float32)

    p = {}
    p["w_in"], p["b_in"] = lin(keys[0], HIDDEN, DIMENSION)
    p["wp1"], p["bp1"] = lin(keys[1], HIDDEN, HIDDEN)
    p["wl1"], p["bl1"] = lin(keys[2], HIDDEN, DIMENSION)
    p["wp2"], p["bp2"] = lin(keys[3], HIDDEN, HIDDEN)
    p["wl2"], p["bl2"] = lin(keys[4], HIDDEN, DIMENSION)
    p["wp3"], p["bp3"] = lin(keys[5], HIDDEN, HIDDEN)
    p["wl3"], p["bl3"] = lin(keys[6], HIDDEN, DIMENSION)
    p["wp4"], p["bp4"] = lin(keys[7], HIDDEN, HIDDEN)
    p["wl4"], p["bl4"] = lin(keys[8], HIDDEN, DIMENSION)
    p["w_out"], p["b_out"] = lin(keys[9], 1, HIDDEN)
    p["wl_out"], p["bl_out"] = lin(keys[10], 1, DIMENSION)
    return p


# ------------------------------ pure-JAX reference --------------------------

def reference_forward(x0, p):
    def lin(x, w, b):
        return x @ w.T + b

    x = -_softplus(lin(x0, p["w_in"], p["b_in"]))
    for i in (1, 2, 3, 4):
        x = -_softplus(x @ _neg_reparam(p[f"wp{i}"]).T + p[f"bp{i}"]
                       + lin(x0, p[f"wl{i}"], p[f"bl{i}"]))
    return -_softplus(x @ _neg_reparam(p["w_out"]).T + p["b_out"]
                      + lin(x0, p["wl_out"], p["bl_out"]))


# ----------------------------------- main -----------------------------------

if __name__ == "__main__":
    key = jax.random.PRNGKey(0)
    k_params, k_x1, k_x2 = jax.random.split(key, 3)

    params = init_params(k_params)

    # Small demo batch: "concentrations" input of shape [N, DIMENSION].
    x_small = jax.random.uniform(k_x1, (16, DIMENSION), dtype=jnp.float32)
    out_small = jax.block_until_ready(entropy_network_forward(x_small, params))
    ref_small = reference_forward(x_small, params)
    assert out_small.shape == (16, 1)
    assert jnp.allclose(out_small, ref_small, atol=1e-5, rtol=1e-5)

    # A batch that is not a multiple of the tile, to exercise the padded,
    # multi-step ("parallel") grid path.
    x_big = jax.random.uniform(k_x2, (2000, DIMENSION), dtype=jnp.float32)
    out_big = jax.block_until_ready(
        entropy_network_forward(x_big, params, tile_rows=8))
    ref_big = reference_forward(x_big, params)
    assert out_big.shape == (2000, 1)
    assert jnp.allclose(out_big, ref_big, atol=1e-5, rtol=1e-5)

    print("KERNEL_OK")
</pallas_src>

<mosaic_0001>
module attributes {stable_mosaic.version = 11 : i64} {
  func.func @entropy_kernel(%arg0: i32, %arg1: memref<412xf32, #tpu.memory_space<smem>>, %arg2: memref<4x1x128xf32, #tpu.memory_space<vmem>>, %arg3: memref<1x128xf32, #tpu.memory_space<vmem>>) attributes {dimension_semantics = [#tpu.dimension_semantics<parallel>], iteration_bounds = array<i64: 1>, scalar_prefetch = 0 : i64, scratch_operands = 0 : i64, tpu.core_type = #tpu.core_type<tc>, window_params = [{transform_indices = @transform_0, window_bounds = array<i64: 412>}, {transform_indices = @transform_1, window_bounds = array<i64: 4, 1, 128>}, {transform_indices = @transform_2, window_bounds = array<i64: 1, 128>}]} {
    %c0 = arith.constant 0 : index
    %c0_0 = arith.constant 0 : index
    %c0_1 = arith.constant 0 : index
    %0 = vector.load %arg2[%c0, %c0_0, %c0_1] : memref<4x1x128xf32, #tpu.memory_space<vmem>>, vector<1x1x128xf32>
    %1 = vector.shape_cast %0 : vector<1x1x128xf32> to vector<1x128xf32>
    %c1 = arith.constant 1 : index
    %c0_2 = arith.constant 0 : index
    %c0_3 = arith.constant 0 : index
    %2 = vector.load %arg2[%c1, %c0_2, %c0_3] : memref<4x1x128xf32, #tpu.memory_space<vmem>>, vector<1x1x128xf32>
    %3 = vector.shape_cast %2 : vector<1x1x128xf32> to vector<1x128xf32>
    %c2 = arith.constant 2 : index
    %c0_4 = arith.constant 0 : index
    %c0_5 = arith.constant 0 : index
    %4 = vector.load %arg2[%c2, %c0_4, %c0_5] : memref<4x1x128xf32, #tpu.memory_space<vmem>>, vector<1x1x128xf32>
    %5 = vector.shape_cast %4 : vector<1x1x128xf32> to vector<1x128xf32>
    %c3 = arith.constant 3 : index
    %c0_6 = arith.constant 0 : index
    %c0_7 = arith.constant 0 : index
    %6 = vector.load %arg2[%c3, %c0_6, %c0_7] : memref<4x1x128xf32, #tpu.memory_space<vmem>>, vector<1x1x128xf32>
    %7 = vector.shape_cast %6 : vector<1x1x128xf32> to vector<1x128xf32>
    %c0_8 = arith.constant 0 : index
    %8 = memref.load %arg1[%c0_8] : memref<412xf32, #tpu.memory_space<smem>>
    %c1_9 = arith.constant 1 : index
    %9 = memref.load %arg1[%c1_9] : memref<412xf32, #tpu.memory_space<smem>>
    %c2_10 = arith.constant 2 : index
    %10 = memref.load %arg1[%c2_10] : memref<412xf32, #tpu.memory_space<smem>>
    %c3_11 = arith.constant 3 : index
    %11 = memref.load %arg1[%c3_11] : memref<412xf32, #tpu.memory_space<smem>>
    %c4 = arith.constant 4 : index
    %12 = memref.load %arg1[%c4] : memref<412xf32, #tpu.memory_space<smem>>
    %c5 = arith.constant 5 : index
    %13 = memref.load %arg1[%c5] : memref<412xf32, #tpu.memory_space<smem>>
    %c6 = arith.constant 6 : index
    %14 = memref.load %arg1[%c6] : memref<412xf32, #tpu.memory_space<smem>>
    %c7 = arith.constant 7 : index
    %15 = memref.load %arg1[%c7] : memref<412xf32, #tpu.memory_space<smem>>
    %c8 = arith.constant 8 : index
    %16 = memref.load %arg1[%c8] : memref<412xf32, #tpu.memory_space<smem>>
    %c9 = arith.constant 9 : index
    %17 = memref.load %arg1[%c9] : memref<412xf32, #tpu.memory_space<smem>>
    %c10 = arith.constant 10 : index
    %18 = memref.load %arg1[%c10] : memref<412xf32, #tpu.memory_space<smem>>
    %c11 = arith.constant 11 : index
    %19 = memref.load %arg1[%c11] : memref<412xf32, #tpu.memory_space<smem>>
    %c12 = arith.constant 12 : index
    %20 = memref.load %arg1[%c12] : memref<412xf32, #tpu.memory_space<smem>>
    %c13 = arith.constant 13 : index
    %21 = memref.load %arg1[%c13] : memref<412xf32, #tpu.memory_space<smem>>
    %c14 = arith.constant 14 : index
    %22 = memref.load %arg1[%c14] : memref<412xf32, #tpu.memory_space<smem>>
    %c15 = arith.constant 15 : index
    %23 = memref.load %arg1[%c15] : memref<412xf32, #tpu.memory_space<smem>>
    %c16 = arith.constant 16 : index
    %24 = memref.load %arg1[%c16] : memref<412xf32, #tpu.memory_space<smem>>
    %c17 = arith.constant 17 : index
    %25 = memref.load %arg1[%c17] : memref<412xf32, #tpu.memory_space<smem>>
    %c18 = arith.constant 18 : index
    %26 = memref.load %arg1[%c18] : memref<412xf32, #tpu.memory_space<smem>>
    %c19 = arith.constant 19 : index
    %27 = memref.load %arg1[%c19] : memref<412xf32, #tpu.memory_space<smem>>
    %c20 = arith.constant 20 : index
    %28 = memref.load %arg1[%c20] : memref<412xf32, #tpu.memory_space<smem>>
    %c21 = arith.constant 21 : index
    %29 = memref.load %arg1[%c21] : memref<412xf32, #tpu.memory_space<smem>>
    %c22 = arith.constant 22 : index
    %30 = memref.load %arg1[%c22] : memref<412xf32, #tpu.memory_space<smem>>
    %c23 = arith.constant 23 : index
    %31 = memref.load %arg1[%c23] : memref<412xf32, #tpu.memory_space<smem>>
    %c24 = arith.constant 24 : index
    %32 = memref.load %arg1[%c24] : memref<412xf32, #tpu.memory_space<smem>>
    %c25 = arith.constant 25 : index
    %33 = memref.load %arg1[%c25] : memref<412xf32, #tpu.memory_space<smem>>
    %c26 = arith.constant 26 : index
    %34 = memref.load %arg1[%c26] : memref<412xf32, #tpu.memory_space<smem>>
    %c27 = arith.constant 27 : index
    %35 = memref.load %arg1[%c27] : memref<412xf32, #tpu.memory_space<smem>>
    %c28 = arith.constant 28 : index
    %36 = memref.load %arg1[%c28] : memref<412xf32, #tpu.memory_space<smem>>
    %c29 = arith.constant 29 : index
    %37 = memref.load %arg1[%c29] : memref<412xf32, #tpu.memory_space<smem>>
    %c30 = arith.constant 30 : index
    %38 = memref.load %arg1[%c30] : memref<412xf32, #tpu.memory_space<smem>>
    %c31 = arith.constant 31 : index
    %39 = memref.load %arg1[%c31] : memref<412xf32, #tpu.memory_space<smem>>
    %c32 = arith.constant 32 : index
    %40 = memref.load %arg1[%c32] : memref<412xf32, #tpu.memory_space<smem>>
    %c33 = arith.constant 33 : index
    %41 = memref.load %arg1[%c33] : memref<412xf32, #tpu.memory_space<smem>>
    %c34 = arith.constant 34 : index
    %42 = memref.load %arg1[%c34] : memref<412xf32, #tpu.memory_space<smem>>
    %43 = vector.broadcast %8 : f32 to vector<1x128xf32>
    %44 = arith.mulf %43, %1 : vector<1x128xf32>
    %45 = vector.broadcast %9 : f32 to vector<1x128xf32>
    %46 = arith.mulf %45, %3 : vector<1x128xf32>
    %47 = arith.addf %44, %46 : vector<1x128xf32>
    %48 = vector.broadcast %10 : f32 to vector<1x128xf32>
    %49 = arith.mulf %48, %5 : vector<1x128xf32>
    %50 = arith.addf %47, %49 : vector<1x128xf32>
    %51 = vector.broadcast %11 : f32 to vector<1x128xf32>
    %52 = arith.mulf %51, %7 : vector<1x128xf32>
    %53 = arith.addf %50, %52 : vector<1x128xf32>
    %54 = vector.broadcast %12 : f32 to vector<1x128xf32>
    %55 = arith.mulf %54, %1 : vector<1x128xf32>
    %56 = vector.broadcast %13 : f32 to vector<1x128xf32>
    %57 = arith.mulf %56, %3 : vector<1x128xf32>
    %58 = arith.addf %55, %57 : vector<1x128xf32>
    %59 = vector.broadcast %14 : f32 to vector<1x128xf32>
    %60 = arith.mulf %59, %5 : vector<1x128xf32>
    %61 = arith.addf %58, %60 : vector<1x128xf32>
    %62 = vector.broadcast %15 : f32 to vector<1x128xf32>
    %63 = arith.mulf %62, %7 : vector<1x128xf32>
    %64 = arith.addf %61, %63 : vector<1x128xf32>
    %65 = vector.broadcast %16 : f32 to vector<1x128xf32>
    %66 = arith.mulf %65, %1 : vector<1x128xf32>
    %67 = vector.broadcast %17 : f32 to vector<1x128xf32>
    %68 = arith.mulf %67, %3 : vector<1x128xf32>
    %69 = arith.addf %66, %68 : vector<1x128xf32>
    %70 = vector.broadcast %18 : f32 to vector<1x128xf32>
    %71 = arith.mulf %70, %5 : vector<1x128xf32>
    %72 = arith.addf %69, %71 : vector<1x128xf32>
    %73 = vector.broadcast %19 : f32 to vector<1x128xf32>
    %74 = arith.mulf %73, %7 : vector<1x128xf32>
    %75 = arith.addf %72, %74 : vector<1x128xf32>
    %76 = vector.broadcast %20 : f32 to vector<1x128xf32>
    %77 = arith.mulf %76, %1 : vector<1x128xf32>
    %78 = vector.broadcast %21 : f32 to vector<1x128xf32>
    %79 = arith.mulf %78, %3 : vector<1x128xf32>
    %80 = arith.addf %77, %79 : vector<1x128xf32>
    %81 = vector.broadcast %22 : f32 to vector<1x128xf32>
    %82 = arith.mulf %81, %5 : vector<1x128xf32>
    %83 = arith.addf %80, %82 : vector<1x128xf32>
    %84 = vector.broadcast %23 : f32 to vector<1x128xf32>
    %85 = arith.mulf %84, %7 : vector<1x128xf32>
    %86 = arith.addf %83, %85 : vector<1x128xf32>
    %87 = vector.broadcast %24 : f32 to vector<1x128xf32>
    %88 = arith.mulf %87, %1 : vector<1x128xf32>
    %89 = vector.broadcast %25 : f32 to vector<1x128xf32>
    %90 = arith.mulf %89, %3 : vector<1x128xf32>
    %91 = arith.addf %88, %90 : vector<1x128xf32>
    %92 = vector.broadcast %26 : f32 to vector<1x128xf32>
    %93 = arith.mulf %92, %5 : vector<1x128xf32>
    %94 = arith.addf %91, %93 : vector<1x128xf32>
    %95 = vector.broadcast %27 : f32 to vector<1x128xf32>
    %96 = arith.mulf %95, %7 : vector<1x128xf32>
    %97 = arith.addf %94, %96 : vector<1x128xf32>
    %98 = vector.broadcast %28 : f32 to vector<1x128xf32>
    %99 = arith.mulf %98, %1 : vector<1x128xf32>
    %100 = vector.broadcast %29 : f32 to vector<1x128xf32>
    %101 = arith.mulf %100, %3 : vector<1x128xf32>
    %102 = arith.addf %99, %101 : vector<1x128xf32>
    %103 = vector.broadcast %30 : f32 to vector<1x128xf32>
    %104 = arith.mulf %103, %5 : vector<1x128xf32>
    %105 = arith.addf %102, %104 : vector<1x128xf32>
    %106 = vector.broadcast %31 : f32 to vector<1x128xf32>
    %107 = arith.mulf %106, %7 : vector<1x128xf32>
    %108 = arith.addf %105, %107 : vector<1x128xf32>
    %109 = vector.broadcast %32 : f32 to vector<1x128xf32>
    %110 = arith.mulf %109, %1 : vector<1x128xf32>
    %111 = vector.broadcast %33 : f32 to vector<1x128xf32>
    %112 = arith.mulf %111, %3 : vector<1x128xf32>
    %113 = arith.addf %110, %112 : vector<1x128xf32>
    %114 = vector.broadcast %34 : f32 to vector<1x128xf32>
    %115 = arith.mulf %114, %5 : vector<1x128xf32>
    %116 = arith.addf %113, %115 : vector<1x128xf32>
    %117 = vector.broadcast %35 : f32 to vector<1x128xf32>
    %118 = arith.mulf %117, %7 : vector<1x128xf32>
    %119 = arith.addf %116, %118 : vector<1x128xf32>
    %120 = vector.broadcast %36 : f32 to vector<1x128xf32>
    %121 = arith.addf %53, %120 : vector<1x128xf32>
    %cst = arith.constant 2.000000e+01 : f32
    %122 = vector.broadcast %cst : f32 to vector<1x128xf32>
    %123 = arith.cmpf ogt, %121, %122 : vector<1x128xf32>
    %cst_12 = arith.constant 2.000000e+01 : f32
    %124 = vector.broadcast %cst_12 : f32 to vector<1x128xf32>
    %125 = arith.minimumf %121, %124 : vector<1x128xf32>
    %126 = math.exp %125 : vector<1x128xf32>
    %127 = math.log1p %126 : vector<1x128xf32>
    %128 = arith.select %123, %121, %127 : vector<1x128xi1>, vector<1x128xf32>
    %cst_13 = arith.constant 0.000000e+00 : f32
    %129 = vector.broadcast %cst_13 : f32 to vector<1x128xf32>
    %130 = arith.subf %129, %128 : vector<1x128xf32>
    %131 = vector.broadcast %37 : f32 to vector<1x128xf32>
    %132 = arith.addf %64, %131 : vector<1x128xf32>
    %cst_14 = arith.constant 2.000000e+01 : f32
    %133 = vector.broadcast %cst_14 : f32 to vector<1x128xf32>
    %134 = arith.cmpf ogt, %132, %133 : vector<1x128xf32>
    %cst_15 = arith.constant 2.000000e+01 : f32
    %135 = vector.broadcast %cst_15 : f32 to vector<1x128xf32>
    %136 = arith.minimumf %132, %135 : vector<1x128xf32>
    %137 = math.exp %136 : vector<1x128xf32>
    %138 = math.log1p %137 : vector<1x128xf32>
    %139 = arith.select %134, %132, %138 : vector<1x128xi1>, vector<1x128xf32>
    %cst_16 = arith.constant 0.000000e+00 : f32
    %140 = vector.broadcast %cst_16 : f32 to vector<1x128xf32>
    %141 = arith.subf %140, %139 : vector<1x128xf32>
    %142 = vector.broadcast %38 : f32 to vector<1x128xf32>
    %143 = arith.addf %75, %142 : vector<1x128xf32>
    %cst_17 = arith.constant 2.000000e+01 : f32
    %144 = vector.broadcast %cst_17 : f32 to vector<1x128xf32>
    %145 = arith.cmpf ogt, %143, %144 : vector<1x128xf32>
    %cst_18 = arith.constant 2.000000e+01 : f32
    %146 = vector.broadcast %cst_18 : f32 to vector<1x128xf32>
    %147 = arith.minimumf %143, %146 : vector<1x128xf32>
    %148 = math.exp %147 : vector<1x128xf32>
    %149 = math.log1p %148 : vector<1x128xf32>
    %150 = arith.select %145, %143, %149 : vector<1x128xi1>, vector<1x128xf32>
    %cst_19 = arith.constant 0.000000e+00 : f32
    %151 = vector.broadcast %cst_19 : f32 to vector<1x128xf32>
    %152 = arith.subf %151, %150 : vector<1x128xf32>
    %153 = vector.broadcast %39 : f32 to vector<1x128xf32>
    %154 = arith.addf %86, %153 : vector<1x128xf32>
    %cst_20 = arith.constant 2.000000e+01 : f32
    %155 = vector.broadcast %cst_20 : f32 to vector<1x128xf32>
    %156 = arith.cmpf ogt, %154, %155 : vector<1x128xf32>
    %cst_21 = arith.constant 2.000000e+01 : f32
    %157 = vector.broadcast %cst_21 : f32 to vector<1x128xf32>
    %158 = arith.minimumf %154, %157 : vector<1x128xf32>
    %159 = math.exp %158 : vector<1x128xf32>
    %160 = math.log1p %159 : vector<1x128xf32>
    %161 = arith.select %156, %154, %160 : vector<1x128xi1>, vector<1x128xf32>
    %cst_22 = arith.constant 0.000000e+00 : f32
    %162 = vector.broadcast %cst_22 : f32 to vector<1x128xf32>
    %163 = arith.subf %162, %161 : vector<1x128xf32>
    %164 = vector.broadcast %40 : f32 to vector<1x128xf32>
    %165 = arith.addf %97, %164 : vector<1x128xf32>
    %cst_23 = arith.constant 2.000000e+01 : f32
    %166 = vector.broadcast %cst_23 : f32 to vector<1x128xf32>
    %167 = arith.cmpf ogt, %165, %166 : vector<1x128xf32>
    %cst_24 = arith.constant 2.000000e+01 : f32
    %168 = vector.broadcast %cst_24 : f32 to vector<1x128xf32>
    %169 = arith.minimumf %165, %168 : vector<1x128xf32>
    %170 = math.exp %169 : vector<1x128xf32>
    %171 = math.log1p %170 : vector<1x128xf32>
    %172 = arith.select %167, %165, %171 : vector<1x128xi1>, vector<1x128xf32>
    %cst_25 = arith.constant 0.000000e+00 : f32
    %173 = vector.broadcast %cst_25 : f32 to vector<1x128xf32>
    %174 = arith.subf %173, %172 : vector<1x128xf32>
    %175 = vector.broadcast %41 : f32 to vector<1x128xf32>
    %176 = arith.addf %108, %175 : vector<1x128xf32>
    %cst_26 = arith.constant 2.000000e+01 : f32
    %177 = vector.broadcast %cst_26 : f32 to vector<1x128xf32>
    %178 = arith.cmpf ogt, %176, %177 : vector<1x128xf32>
    %cst_27 = arith.constant 2.000000e+01 : f32
    %179 = vector.broadcast %cst_27 : f32 to vector<1x128xf32>
    %180 = arith.minimumf %176, %179 : vector<1x128xf32>
    %181 = math.exp %180 : vector<1x128xf32>
    %182 = math.log1p %181 : vector<1x128xf32>
    %183 = arith.select %178, %176, %182 : vector<1x128xi1>, vector<1x128xf32>
    %cst_28 = arith.constant 0.000000e+00 : f32
    %184 = vector.broadcast %cst_28 : f32 to vector<1x128xf32>
    %185 = arith.subf %184, %183 : vector<1x128xf32>
    %186 = vector.broadcast %42 : f32 to vector<1x128xf32>
    %187 = arith.addf %119, %186 : vector<1x128xf32>
    %cst_29 = arith.constant 2.000000e+01 : f32
    %188 = vector.broadcast %cst_29 : f32 to vector<1x128xf32>
    %189 = arith.cmpf ogt, %187, %188 : vector<1x128xf32>
    %cst_30 = arith.constant 2.000000e+01 : f32
    %190 = vector.broadcast %cst_30 : f32 to vector<1x128xf32>
    %191 = arith.minimumf %187, %190 : vector<1x128xf32>
    %192 = math.exp %191 : vector<1x128xf32>
    %193 = math.log1p %192 : vector<1x128xf32>
    %194 = arith.select %189, %187, %193 : vector<1x128xi1>, vector<1x128xf32>
    %cst_31 = arith.constant 0.000000e+00 : f32
    %195 = vector.broadcast %cst_31 : f32 to vector<1x128xf32>
    %196 = arith.subf %195, %194 : vector<1x128xf32>
    %c35 = arith.constant 35 : index
    %197 = memref.load %arg1[%c35] : memref<412xf32, #tpu.memory_space<smem>>
    %c36 = arith.constant 36 : index
    %198 = memref.load %arg1[%c36] : memref<412xf32, #tpu.memory_space<smem>>
    %c37 = arith.constant 37 : index
    %199 = memref.load %arg1[%c37] : memref<412xf32, #tpu.memory_space<smem>>
    %c38 = arith.constant 38 : index
    %200 = memref.load %arg1[%c38] : memref<412xf32, #tpu.memory_space<smem>>
    %c39 = arith.constant 39 : index
    %201 = memref.load %arg1[%c39] : memref<412xf32, #tpu.memory_space<smem>>
    %c40 = arith.constant 40 : index
    %202 = memref.load %arg1[%c40] : memref<412xf32, #tpu.memory_space<smem>>
    %c41 = arith.constant 41 : index
    %203 = memref.load %arg1[%c41] : memref<412xf32, #tpu.memory_space<smem>>
    %c42 = arith.constant 42 : index
    %204 = memref.load %arg1[%c42] : memref<412xf32, #tpu.memory_space<smem>>
    %c43 = arith.constant 43 : index
    %205 = memref.load %arg1[%c43] : memref<412xf32, #tpu.memory_space<smem>>
    %c44 = arith.constant 44 : index
    %206 = memref.load %arg1[%c44] : memref<412xf32, #tpu.memory_space<smem>>
    %c45 = arith.constant 45 : index
    %207 = memref.load %arg1[%c45] : memref<412xf32, #tpu.memory_space<smem>>
    %c46 = arith.constant 46 : index
    %208 = memref.load %arg1[%c46] : memref<412xf32, #tpu.memory_space<smem>>
    %c47 = arith.constant 47 : index
    %209 = memref.load %arg1[%c47] : memref<412xf32, #tpu.memory_space<smem>>
    %c48 = arith.constant 48 : index
    %210 = memref.load %arg1[%c48] : memref<412xf32, #tpu.memory_space<smem>>
    %c49 = arith.constant 49 : index
    %211 = memref.load %arg1[%c49] : memref<412xf32, #tpu.memory_space<smem>>
    %c50 = arith.constant 50 : index
    %212 = memref.load %arg1[%c50] : memref<412xf32, #tpu.memory_space<smem>>
    %c51 = arith.constant 51 : index
    %213 = memref.load %arg1[%c51] : memref<412xf32, #tpu.memory_space<smem>>
    %c52 = arith.constant 52 : index
    %214 = memref.load %arg1[%c52] : memref<412xf32, #tpu.memory_space<smem>>
    %c53 = arith.constant 53 : index
    %215 = memref.load %arg1[%c53] : memref<412xf32, #tpu.memory_space<smem>>
    %c54 = arith.constant 54 : index
    %216 = memref.load %arg1[%c54] : memref<412xf32, #tpu.memory_space<smem>>
    %c55 = arith.constant 55 : index
    %217 = memref.load %arg1[%c55] : memref<412xf32, #tpu.memory_space<smem>>
    %c56 = arith.constant 56 : index
    %218 = memref.load %arg1[%c56] : memref<412xf32, #tpu.memory_space<smem>>
    %c57 = arith.constant 57 : index
    %219 = memref.load %arg1[%c57] : memref<412xf32, #tpu.memory_space<smem>>
    %c58 = arith.constant 58 : index
    %220 = memref.load %arg1[%c58] : memref<412xf32, #tpu.memory_space<smem>>
    %c59 = arith.constant 59 : index
    %221 = memref.load %arg1[%c59] : memref<412xf32, #tpu.memory_space<smem>>
    %c60 = arith.constant 60 : index
    %222 = memref.load %arg1[%c60] : memref<412xf32, #tpu.memory_space<smem>>
    %c61 = arith.constant 61 : index
    %223 = memref.load %arg1[%c61] : memref<412xf32, #tpu.memory_space<smem>>
    %c62 = arith.constant 62 : index
    %224 = memref.load %arg1[%c62] : memref<412xf32, #tpu.memory_space<smem>>
    %c63 = arith.constant 63 : index
    %225 = memref.load %arg1[%c63] : memref<412xf32, #tpu.memory_space<smem>>
    %c64 = arith.constant 64 : index
    %226 = memref.load %arg1[%c64] : memref<412xf32, #tpu.memory_space<smem>>
    %c65 = arith.constant 65 : index
    %227 = memref.load %arg1[%c65] : memref<412xf32, #tpu.memory_space<smem>>
    %c66 = arith.constant 66 : index
    %228 = memref.load %arg1[%c66] : memref<412xf32, #tpu.memory_space<smem>>
    %c67 = arith.constant 67 : index
    %229 = memref.load %arg1[%c67] : memref<412xf32, #tpu.memory_space<smem>>
    %c68 = arith.constant 68 : index
    %230 = memref.load %arg1[%c68] : memref<412xf32, #tpu.memory_space<smem>>
    %c69 = arith.constant 69 : index
    %231 = memref.load %arg1[%c69] : memref<412xf32, #tpu.memory_space<smem>>
    %c70 = arith.constant 70 : index
    %232 = memref.load %arg1[%c70] : memref<412xf32, #tpu.memory_space<smem>>
    %c71 = arith.constant 71 : index
    %233 = memref.load %arg1[%c71] : memref<412xf32, #tpu.memory_space<smem>>
    %c72 = arith.constant 72 : index
    %234 = memref.load %arg1[%c72] : memref<412xf32, #tpu.memory_space<smem>>
    %c73 = arith.constant 73 : index
    %235 = memref.load %arg1[%c73] : memref<412xf32, #tpu.memory_space<smem>>
    %c74 = arith.constant 74 : index
    %236 = memref.load %arg1[%c74] : memref<412xf32, #tpu.memory_space<smem>>
    %c75 = arith.constant 75 : index
    %237 = memref.load %arg1[%c75] : memref<412xf32, #tpu.memory_space<smem>>
    %c76 = arith.constant 76 : index
    %238 = memref.load %arg1[%c76] : memref<412xf32, #tpu.memory_space<smem>>
    %c77 = arith.constant 77 : index
    %239 = memref.load %arg1[%c77] : memref<412xf32, #tpu.memory_space<smem>>
    %c78 = arith.constant 78 : index
    %240 = memref.load %arg1[%c78] : memref<412xf32, #tpu.memory_space<smem>>
    %c79 = arith.constant 79 : index
    %241 = memref.load %arg1[%c79] : memref<412xf32, #tpu.memory_space<smem>>
    %c80 = arith.constant 80 : index
    %242 = memref.load %arg1[%c80] : memref<412xf32, #tpu.memory_space<smem>>
    %c81 = arith.constant 81 : index
    %243 = memref.load %arg1[%c81] : memref<412xf32, #tpu.memory_space<smem>>
    %c82 = arith.constant 82 : index
    %244 = memref.load %arg1[%c82] : memref<412xf32, #tpu.memory_space<smem>>
    %c83 = arith.constant 83 : index
    %245 = memref.load %arg1[%c83] : memref<412xf32, #tpu.memory_space<smem>>
    %c84 = arith.constant 84 : index
    %246 = memref.load %arg1[%c84] : memref<412xf32, #tpu.memory_space<smem>>
    %c85 = arith.constant 85 : index
    %247 = memref.load %arg1[%c85] : memref<412xf32, #tpu.memory_space<smem>>
    %c86 = arith.constant 86 : index
    %248 = memref.load %arg1[%c86] : memref<412xf32, #tpu.memory_space<smem>>
    %c87 = arith.constant 87 : index
    %249 = memref.load %arg1[%c87] : memref<412xf32, #tpu.memory_space<smem>>
    %c88 = arith.constant 88 : index
    %250 = memref.load %arg1[%c88] : memref<412xf32, #tpu.memory_space<smem>>
    %c89 = arith.constant 89 : index
    %251 = memref.load %arg1[%c89] : memref<412xf32, #tpu.memory_space<smem>>
    %c90 = arith.constant 90 : index
    %252 = memref.load %arg1[%c90] : memref<412xf32, #tpu.memory_space<smem>>
    %c91 = arith.constant 91 : index
    %253 = memref.load %arg1[%c91] : memref<412xf32, #tpu.memory_space<smem>>
    %c92 = arith.constant 92 : index
    %254 = memref.load %arg1[%c92] : memref<412xf32, #tpu.memory_space<smem>>
    %c93 = arith.constant 93 : index
    %255 = memref.load %arg1[%c93] : memref<412xf32, #tpu.memory_space<smem>>
    %c94 = arith.constant 94 : index
    %256 = memref.load %arg1[%c94] : memref<412xf32, #tpu.memory_space<smem>>
    %c95 = arith.constant 95 : index
    %257 = memref.load %arg1[%c95] : memref<412xf32, #tpu.memory_space<smem>>
    %c96 = arith.constant 96 : index
    %258 = memref.load %arg1[%c96] : memref<412xf32, #tpu.memory_space<smem>>
    %c97 = arith.constant 97 : index
    %259 = memref.load %arg1[%c97] : memref<412xf32, #tpu.memory_space<smem>>
    %c98 = arith.constant 98 : index
    %260 = memref.load %arg1[%c98] : memref<412xf32, #tpu.memory_space<smem>>
    %c99 = arith.constant 99 : index
    %261 = memref.load %arg1[%c99] : memref<412xf32, #tpu.memory_space<smem>>
    %c100 = arith.constant 100 : index
    %262 = memref.load %arg1[%c100] : memref<412xf32, #tpu.memory_space<smem>>
    %c101 = arith.constant 101 : index
    %263 = memref.load %arg1[%c101] : memref<412xf32, #tpu.memory_space<smem>>
    %c102 = arith.constant 102 : index
    %264 = memref.load %arg1[%c102] : memref<412xf32, #tpu.memory_space<smem>>
    %c103 = arith.constant 103 : index
    %265 = memref.load %arg1[%c103] : memref<412xf32, #tpu.memory_space<smem>>
    %c104 = arith.constant 104 : index
    %266 = memref.load %arg1[%c104] : memref<412xf32, #tpu.memory_space<smem>>
    %c105 = arith.constant 105 : index
    %267 = memref.load %arg1[%c105] : memref<412xf32, #tpu.memory_space<smem>>
    %c106 = arith.constant 106 : index
    %268 = memref.load %arg1[%c106] : memref<412xf32, #tpu.memory_space<smem>>
    %c107 = arith.constant 107 : index
    %269 = memref.load %arg1[%c107] : memref<412xf32, #tpu.memory_space<smem>>
    %c108 = arith.constant 108 : index
    %270 = memref.load %arg1[%c108] : memref<412xf32, #tpu.memory_space<smem>>
    %c109 = arith.constant 109 : index
    %271 = memref.load %arg1[%c109] : memref<412xf32, #tpu.memory_space<smem>>
    %c110 = arith.constant 110 : index
    %272 = memref.load %arg1[%c110] : memref<412xf32, #tpu.memory_space<smem>>
    %c111 = arith.constant 111 : index
    %273 = memref.load %arg1[%c111] : memref<412xf32, #tpu.memory_space<smem>>
    %c112 = arith.constant 112 : index
    %274 = memref.load %arg1[%c112] : memref<412xf32, #tpu.memory_space<smem>>
    %c113 = arith.constant 113 : index
    %275 = memref.load %arg1[%c113] : memref<412xf32, #tpu.memory_space<smem>>
    %c114 = arith.constant 114 : index
    %276 = memref.load %arg1[%c114] : memref<412xf32, #tpu.memory_space<smem>>
    %c115 = arith.constant 115 : index
    %277 = memref.load %arg1[%c115] : memref<412xf32, #tpu.memory_space<smem>>
    %c116 = arith.constant 116 : index
    %278 = memref.load %arg1[%c116] : memref<412xf32, #tpu.memory_space<smem>>
    %c117 = arith.constant 117 : index
    %279 = memref.load %arg1[%c117] : memref<412xf32, #tpu.memory_space<smem>>
    %c118 = arith.constant 118 : index
    %280 = memref.load %arg1[%c118] : memref<412xf32, #tpu.memory_space<smem>>
    %c119 = arith.constant 119 : index
    %281 = memref.load %arg1[%c119] : memref<412xf32, #tpu.memory_space<smem>>
    %c120 = arith.constant 120 : index
    %282 = memref.load %arg1[%c120] : memref<412xf32, #tpu.memory_space<smem>>
    %c121 = arith.constant 121 : index
    %283 = memref.load %arg1[%c121] : memref<412xf32, #tpu.memory_space<smem>>
    %c122 = arith.constant 122 : index
    %284 = memref.load %arg1[%c122] : memref<412xf32, #tpu.memory_space<smem>>
    %c123 = arith.constant 123 : index
    %285 = memref.load %arg1[%c123] : memref<412xf32, #tpu.memory_space<smem>>
    %c124 = arith.constant 124 : index
    %286 = memref.load %arg1[%c124] : memref<412xf32, #tpu.memory_space<smem>>
    %c125 = arith.constant 125 : index
    %287 = memref.load %arg1[%c125] : memref<412xf32, #tpu.memory_space<smem>>
    %288 = vector.broadcast %197 : f32 to vector<1x128xf32>
    %289 = arith.mulf %288, %130 : vector<1x128xf32>
    %290 = vector.broadcast %198 : f32 to vector<1x128xf32>
    %291 = arith.mulf %290, %141 : vector<1x128xf32>
    %292 = arith.addf %289, %291 : vector<1x128xf32>
    %293 = vector.broadcast %199 : f32 to vector<1x128xf32>
    %294 = arith.mulf %293, %152 : vector<1x128xf32>
    %295 = arith.addf %292, %294 : vector<1x128xf32>
    %296 = vector.broadcast %200 : f32 to vector<1x128xf32>
    %297 = arith.mulf %296, %163 : vector<1x128xf32>
    %298 = arith.addf %295, %297 : vector<1x128xf32>
    %299 = vector.broadcast %201 : f32 to vector<1x128xf32>
    %300 = arith.mulf %299, %174 : vector<1x128xf32>
    %301 = arith.addf %298, %300 : vector<1x128xf32>
    %302 = vector.broadcast %202 : f32 to vector<1x128xf32>
    %303 = arith.mulf %302, %185 : vector<1x128xf32>
    %304 = arith.addf %301, %303 : vector<1x128xf32>
    %305 = vector.broadcast %203 : f32 to vector<1x128xf32>
    %306 = arith.mulf %305, %196 : vector<1x128xf32>
    %307 = arith.addf %304, %306 : vector<1x128xf32>
    %308 = vector.broadcast %204 : f32 to vector<1x128xf32>
    %309 = arith.mulf %308, %130 : vector<1x128xf32>
    %310 = vector.broadcast %205 : f32 to vector<1x128xf32>
    %311 = arith.mulf %310, %141 : vector<1x128xf32>
    %312 = arith.addf %309, %311 : vector<1x128xf32>
    %313 = vector.broadcast %206 : f32 to vector<1x128xf32>
    %314 = arith.mulf %313, %152 : vector<1x128xf32>
    %315 = arith.addf %312, %314 : vector<1x128xf32>
    %316 = vector.broadcast %207 : f32 to vector<1x128xf32>
    %317 = arith.mulf %316, %163 : vector<1x128xf32>
    %318 = arith.addf %315, %317 : vector<1x128xf32>
    %319 = vector.broadcast %208 : f32 to vector<1x128xf32>
    %320 = arith.mulf %319, %174 : vector<1x128xf32>
    %321 = arith.addf %318, %320 : vector<1x128xf32>
    %322 = vector.broadcast %209 : f32 to vector<1x128xf32>
    %323 = arith.mulf %322, %185 : vector<1x128xf32>
    %324 = arith.addf %321, %323 : vector<1x128xf32>
    %325 = vector.broadcast %210 : f32 to vector<1x128xf32>
    %326 = arith.mulf %325, %196 : vector<1x128xf32>
    %327 = arith.addf %324, %326 : vector<1x128xf32>
    %328 = vector.broadcast %211 : f32 to vector<1x128xf32>
    %329 = arith.mulf %328, %130 : vector<1x128xf32>
    %330 = vector.broadcast %212 : f32 to vector<1x128xf32>
    %331 = arith.mulf %330, %141 : vector<1x128xf32>
    %332 = arith.addf %329, %331 : vector<1x128xf32>
    %333 = vector.broadcast %213 : f32 to vector<1x128xf32>
    %334 = arith.mulf %333, %152 : vector<1x128xf32>
    %335 = arith.addf %332, %334 : vector<1x128xf32>
    %336 = vector.broadcast %214 : f32 to vector<1x128xf32>
    %337 = arith.mulf %336, %163 : vector<1x128xf32>
    %338 = arith.addf %335, %337 : vector<1x128xf32>
    %339 = vector.broadcast %215 : f32 to vector<1x128xf32>
    %340 = arith.mulf %339, %174 : vector<1x128xf32>
    %341 = arith.addf %338, %340 : vector<1x128xf32>
    %342 = vector.broadcast %216 : f32 to vector<1x128xf32>
    %343 = arith.mulf %342, %185 : vector<1x128xf32>
    %344 = arith.addf %341, %343 : vector<1x128xf32>
    %345 = vector.broadcast %217 : f32 to vector<1x128xf32>
    %346 = arith.mulf %345, %196 : vector<1x128xf32>
    %347 = arith.addf %344, %346 : vector<1x128xf32>
    %348 = vector.broadcast %218 : f32 to vector<1x128xf32>
    %349 = arith.mulf %348, %130 : vector<1x128xf32>
    %350 = vector.broadcast %219 : f32 to vector<1x128xf32>
    %351 = arith.mulf %350, %141 : vector<1x128xf32>
    %352 = arith.addf %349, %351 : vector<1x128xf32>
    %353 = vector.broadcast %220 : f32 to vector<1x128xf32>
    %354 = arith.mulf %353, %152 : vector<1x128xf32>
    %355 = arith.addf %352, %354 : vector<1x128xf32>
    %356 = vector.broadcast %221 : f32 to vector<1x128xf32>
    %357 = arith.mulf %356, %163 : vector<1x128xf32>
    %358 = arith.addf %355, %357 : vector<1x128xf32>
    %359 = vector.broadcast %222 : f32 to vector<1x128xf32>
    %360 = arith.mulf %359, %174 : vector<1x128xf32>
    %361 = arith.addf %358, %360 : vector<1x128xf32>
    %362 = vector.broadcast %223 : f32 to vector<1x128xf32>
    %363 = arith.mulf %362, %185 : vector<1x128xf32>
    %364 = arith.addf %361, %363 : vector<1x128xf32>
    %365 = vector.broadcast %224 : f32 to vector<1x128xf32>
    %366 = arith.mulf %365, %196 : vector<1x128xf32>
    %367 = arith.addf %364, %366 : vector<1x128xf32>
    %368 = vector.broadcast %225 : f32 to vector<1x128xf32>
    %369 = arith.mulf %368, %130 : vector<1x128xf32>
    %370 = vector.broadcast %226 : f32 to vector<1x128xf32>
    %371 = arith.mulf %370, %141 : vector<1x128xf32>
    %372 = arith.addf %369, %371 : vector<1x128xf32>
    %373 = vector.broadcast %227 : f32 to vector<1x128xf32>
    %374 = arith.mulf %373, %152 : vector<1x128xf32>
    %375 = arith.addf %372, %374 : vector<1x128xf32>
    %376 = vector.broadcast %228 : f32 to vector<1x128xf32>
    %377 = arith.mulf %376, %163 : vector<1x128xf32>
    %378 = arith.addf %375, %377 : vector<1x128xf32>
    %379 = vector.broadcast %229 : f32 to vector<1x128xf32>
    %380 = arith.mulf %379, %174 : vector<1x128xf32>
    %381 = arith.addf %378, %380 : vector<1x128xf32>
    %382 = vector.broadcast %230 : f32 to vector<1x128xf32>
    %383 = arith.mulf %382, %185 : vector<1x128xf32>
    %384 = arith.addf %381, %383 : vector<1x128xf32>
    %385 = vector.broadcast %231 : f32 to vector<1x128xf32>
    %386 = arith.mulf %385, %196 : vector<1x128xf32>
    %387 = arith.addf %384, %386 : vector<1x128xf32>
    %388 = vector.broadcast %232 : f32 to vector<1x128xf32>
    %389 = arith.mulf %388, %130 : vector<1x128xf32>
    %390 = vector.broadcast %233 : f32 to vector<1x128xf32>
    %391 = arith.mulf %390, %141 : vector<1x128xf32>
    %392 = arith.addf %389, %391 : vector<1x128xf32>
    %393 = vector.broadcast %234 : f32 to vector<1x128xf32>
    %394 = arith.mulf %393, %152 : vector<1x128xf32>
    %395 = arith.addf %392, %394 : vector<1x128xf32>
    %396 = vector.broadcast %235 : f32 to vector<1x128xf32>
    %397 = arith.mulf %396, %163 : vector<1x128xf32>
    %398 = arith.addf %395, %397 : vector<1x128xf32>
    %399 = vector.broadcast %236 : f32 to vector<1x128xf32>
    %400 = arith.mulf %399, %174 : vector<1x128xf32>
    %401 = arith.addf %398, %400 : vector<1x128xf32>
    %402 = vector.broadcast %237 : f32 to vector<1x128xf32>
    %403 = arith.mulf %402, %185 : vector<1x128xf32>
    %404 = arith.addf %401, %403 : vector<1x128xf32>
    %405 = vector.broadcast %238 : f32 to vector<1x128xf32>
    %406 = arith.mulf %405, %196 : vector<1x128xf32>
    %407 = arith.addf %404, %406 : vector<1x128xf32>
    %408 = vector.broadcast %239 : f32 to vector<1x128xf32>
    %409 = arith.mulf %408, %130 : vector<1x128xf32>
    %410 = vector.broadcast %240 : f32 to vector<1x128xf32>
    %411 = arith.mulf %410, %141 : vector<1x128xf32>
    %412 = arith.addf %409, %411 : vector<1x128xf32>
    %413 = vector.broadcast %241 : f32 to vector<1x128xf32>
    %414 = arith.mulf %413, %152 : vector<1x128xf32>
    %415 = arith.addf %412, %414 : vector<1x128xf32>
    %416 = vector.broadcast %242 : f32 to vector<1x128xf32>
    %417 = arith.mulf %416, %163 : vector<1x128xf32>
    %418 = arith.addf %415, %417 : vector<1x128xf32>
    %419 = vector.broadcast %243 : f32 to vector<1x128xf32>
    %420 = arith.mulf %419, %174 : vector<1x128xf32>
    %421 = arith.addf %418, %420 : vector<1x128xf32>
    %422 = vector.broadcast %244 : f32 to vector<1x128xf32>
    %423 = arith.mulf %422, %185 : vector<1x128xf32>
    %424 = arith.addf %421, %423 : vector<1x128xf32>
    %425 = vector.broadcast %245 : f32 to vector<1x128xf32>
    %426 = arith.mulf %425, %196 : vector<1x128xf32>
    %427 = arith.addf %424, %426 : vector<1x128xf32>
    %428 = vector.broadcast %253 : f32 to vector<1x128xf32>
    %429 = arith.mulf %428, %1 : vector<1x128xf32>
    %430 = arith.addf %307, %429 : vector<1x128xf32>
    %431 = vector.broadcast %254 : f32 to vector<1x128xf32>
    %432 = arith.mulf %431, %3 : vector<1x128xf32>
    %433 = arith.addf %430, %432 : vector<1x128xf32>
    %434 = vector.broadcast %255 : f32 to vector<1x128xf32>
    %435 = arith.mulf %434, %5 : vector<1x128xf32>
    %436 = arith.addf %433, %435 : vector<1x128xf32>
    %437 = vector.broadcast %256 : f32 to vector<1x128xf32>
    %438 = arith.mulf %437, %7 : vector<1x128xf32>
    %439 = arith.addf %436, %438 : vector<1x128xf32>
    %440 = vector.broadcast %257 : f32 to vector<1x128xf32>
    %441 = arith.mulf %440, %1 : vector<1x128xf32>
    %442 = arith.addf %327, %441 : vector<1x128xf32>
    %443 = vector.broadcast %258 : f32 to vector<1x128xf32>
    %444 = arith.mulf %443, %3 : vector<1x128xf32>
    %445 = arith.addf %442, %444 : vector<1x128xf32>
    %446 = vector.broadcast %259 : f32 to vector<1x128xf32>
    %447 = arith.mulf %446, %5 : vector<1x128xf32>
    %448 = arith.addf %445, %447 : vector<1x128xf32>
    %449 = vector.broadcast %260 : f32 to vector<1x128xf32>
    %450 = arith.mulf %449, %7 : vector<1x128xf32>
    %451 = arith.addf %448, %450 : vector<1x128xf32>
    %452 = vector.broadcast %261 : f32 to vector<1x128xf32>
    %453 = arith.mulf %452, %1 : vector<1x128xf32>
    %454 = arith.addf %347, %453 : vector<1x128xf32>
    %455 = vector.broadcast %262 : f32 to vector<1x128xf32>
    %456 = arith.mulf %455, %3 : vector<1x128xf32>
    %457 = arith.addf %454, %456 : vector<1x128xf32>
    %458 = vector.broadcast %263 : f32 to vector<1x128xf32>
    %459 = arith.mulf %458, %5 : vector<1x128xf32>
    %460 = arith.addf %457, %459 : vector<1x128xf32>
    %461 = vector.broadcast %264 : f32 to vector<1x128xf32>
    %462 = arith.mulf %461, %7 : vector<1x128xf32>
    %463 = arith.addf %460, %462 : vector<1x128xf32>
    %464 = vector.broadcast %265 : f32 to vector<1x128xf32>
    %465 = arith.mulf %464, %1 : vector<1x128xf32>
    %466 = arith.addf %367, %465 : vector<1x128xf32>
    %467 = vector.broadcast %266 : f32 to vector<1x128xf32>
    %468 = arith.mulf %467, %3 : vector<1x128xf32>
    %469 = arith.addf %466, %468 : vector<1x128xf32>
    %470 = vector.broadcast %267 : f32 to vector<1x128xf32>
    %471 = arith.mulf %470, %5 : vector<1x128xf32>
    %472 = arith.addf %469, %471 : vector<1x128xf32>
    %473 = vector.broadcast %268 : f32 to vector<1x128xf32>
    %474 = arith.mulf %473, %7 : vector<1x128xf32>
    %475 = arith.addf %472, %474 : vector<1x128xf32>
    %476 = vector.broadcast %269 : f32 to vector<1x128xf32>
    %477 = arith.mulf %476, %1 : vector<1x128xf32>
    %478 = arith.addf %387, %477 : vector<1x128xf32>
    %479 = vector.broadcast %270 : f32 to vector<1x128xf32>
    %480 = arith.mulf %479, %3 : vector<1x128xf32>
    %481 = arith.addf %478, %480 : vector<1x128xf32>
    %482 = vector.broadcast %271 : f32 to vector<1x128xf32>
    %483 = arith.mulf %482, %5 : vector<1x128xf32>
    %484 = arith.addf %481, %483 : vector<1x128xf32>
    %485 = vector.broadcast %272 : f32 to vector<1x128xf32>
    %486 = arith.mulf %485, %7 : vector<1x128xf32>
    %487 = arith.addf %484, %486 : vector<1x128xf32>
    %488 = vector.broadcast %273 : f32 to vector<1x128xf32>
    %489 = arith.mulf %488, %1 : vector<1x128xf32>
    %490 = arith.addf %407, %489 : vector<1x128xf32>
    %491 = vector.broadcast %274 : f32 to vector<1x128xf32>
    %492 = arith.mulf %491, %3 : vector<1x128xf32>
    %493 = arith.addf %490, %492 : vector<1x128xf32>
    %494 = vector.broadcast %275 : f32 to vector<1x128xf32>
    %495 = arith.mulf %494, %5 : vector<1x128xf32>
    %496 = arith.addf %493, %495 : vector<1x128xf32>
    %497 = vector.broadcast %276 : f32 to vector<1x128xf32>
    %498 = arith.mulf %497, %7 : vector<1x128xf32>
    %499 = arith.addf %496, %498 : vector<1x128xf32>
    %500 = vector.broadcast %277 : f32 to vector<1x128xf32>
    %501 = arith.mulf %500, %1 : vector<1x128xf32>
    %502 = arith.addf %427, %501 : vector<1x128xf32>
    %503 = vector.broadcast %278 : f32 to vector<1x128xf32>
    %504 = arith.mulf %503, %3 : vector<1x128xf32>
    %505 = arith.addf %502, %504 : vector<1x128xf32>
    %506 = vector.broadcast %279 : f32 to vector<1x128xf32>
    %507 = arith.mulf %506, %5 : vector<1x128xf32>
    %508 = arith.addf %505, %507 : vector<1x128xf32>
    %509 = vector.broadcast %280 : f32 to vector<1x128xf32>
    %510 = arith.mulf %509, %7 : vector<1x128xf32>
    %511 = arith.addf %508, %510 : vector<1x128xf32>
    %512 = arith.addf %246, %281 : f32
    %513 = vector.broadcast %512 : f32 to vector<1x128xf32>
    %514 = arith.addf %439, %513 : vector<1x128xf32>
    %cst_32 = arith.constant 2.000000e+01 : f32
    %515 = vector.broadcast %cst_32 : f32 to vector<1x128xf32>
    %516 = arith.cmpf ogt, %514, %515 : vector<1x128xf32>
    %cst_33 = arith.constant 2.000000e+01 : f32
    %517 = vector.broadcast %cst_33 : f32 to vector<1x128xf32>
    %518 = arith.minimumf %514, %517 : vector<1x128xf32>
    %519 = math.exp %518 : vector<1x128xf32>
    %520 = math.log1p %519 : vector<1x128xf32>
    %521 = arith.select %516, %514, %520 : vector<1x128xi1>, vector<1x128xf32>
    %cst_34 = arith.constant 0.000000e+00 : f32
    %522 = vector.broadcast %cst_34 : f32 to vector<1x128xf32>
    %523 = arith.subf %522, %521 : vector<1x128xf32>
    %524 = arith.addf %247, %282 : f32
    %525 = vector.broadcast %524 : f32 to vector<1x128xf32>
    %526 = arith.addf %451, %525 : vector<1x128xf32>
    %cst_35 = arith.constant 2.000000e+01 : f32
    %527 = vector.broadcast %cst_35 : f32 to vector<1x128xf32>
    %528 = arith.cmpf ogt, %526, %527 : vector<1x128xf32>
    %cst_36 = arith.constant 2.000000e+01 : f32
    %529 = vector.broadcast %cst_36 : f32 to vector<1x128xf32>
    %530 = arith.minimumf %526, %529 : vector<1x128xf32>
    %531 = math.exp %530 : vector<1x128xf32>
    %532 = math.log1p %531 : vector<1x128xf32>
    %533 = arith.select %528, %526, %532 : vector<1x128xi1>, vector<1x128xf32>
    %cst_37 = arith.constant 0.000000e+00 : f32
    %534 = vector.broadcast %cst_37 : f32 to vector<1x128xf32>
    %535 = arith.subf %534, %533 : vector<1x128xf32>
    %536 = arith.addf %248, %283 : f32
    %537 = vector.broadcast %536 : f32 to vector<1x128xf32>
    %538 = arith.addf %463, %537 : vector<1x128xf32>
    %cst_38 = arith.constant 2.000000e+01 : f32
    %539 = vector.broadcast %cst_38 : f32 to vector<1x128xf32>
    %540 = arith.cmpf ogt, %538, %539 : vector<1x128xf32>
    %cst_39 = arith.constant 2.000000e+01 : f32
    %541 = vector.broadcast %cst_39 : f32 to vector<1x128xf32>
    %542 = arith.minimumf %538, %541 : vector<1x128xf32>
    %543 = math.exp %542 : vector<1x128xf32>
    %544 = math.log1p %543 : vector<1x128xf32>
    %545 = arith.select %540, %538, %544 : vector<1x128xi1>, vector<1x128xf32>
    %cst_40 = arith.constant 0.000000e+00 : f32
    %546 = vector.broadcast %cst_40 : f32 to vector<1x128xf32>
    %547 = arith.subf %546, %545 : vector<1x128xf32>
    %548 = arith.addf %249, %284 : f32
    %549 = vector.broadcast %548 : f32 to vector<1x128xf32>
    %550 = arith.addf %475, %549 : vector<1x128xf32>
    %cst_41 = arith.constant 2.000000e+01 : f32
    %551 = vector.broadcast %cst_41 : f32 to vector<1x128xf32>
    %552 = arith.cmpf ogt, %550, %551 : vector<1x128xf32>
    %cst_42 = arith.constant 2.000000e+01 : f32
    %553 = vector.broadcast %cst_42 : f32 to vector<1x128xf32>
    %554 = arith.minimumf %550, %553 : vector<1x128xf32>
    %555 = math.exp %554 : vector<1x128xf32>
    %556 = math.log1p %555 : vector<1x128xf32>
    %557 = arith.select %552, %550, %556 : vector<1x128xi1>, vector<1x128xf32>
    %cst_43 = arith.constant 0.000000e+00 : f32
    %558 = vector.broadcast %cst_43 : f32 to vector<1x128xf32>
    %559 = arith.subf %558, %557 : vector<1x128xf32>
    %560 = arith.addf %250, %285 : f32
    %561 = vector.broadcast %560 : f32 to vector<1x128xf32>
    %562 = arith.addf %487, %561 : vector<1x128xf32>
    %cst_44 = arith.constant 2.000000e+01 : f32
    %563 = vector.broadcast %cst_44 : f32 to vector<1x128xf32>
    %564 = arith.cmpf ogt, %562, %563 : vector<1x128xf32>
    %cst_45 = arith.constant 2.000000e+01 : f32
    %565 = vector.broadcast %cst_45 : f32 to vector<1x128xf32>
    %566 = arith.minimumf %562, %565 : vector<1x128xf32>
    %567 = math.exp %566 : vector<1x128xf32>
    %568 = math.log1p %567 : vector<1x128xf32>
    %569 = arith.select %564, %562, %568 : vector<1x128xi1>, vector<1x128xf32>
    %cst_46 = arith.constant 0.000000e+00 : f32
    %570 = vector.broadcast %cst_46 : f32 to vector<1x128xf32>
    %571 = arith.subf %570, %569 : vector<1x128xf32>
    %572 = arith.addf %251, %286 : f32
    %573 = vector.broadcast %572 : f32 to vector<1x128xf32>
    %574 = arith.addf %499, %573 : vector<1x128xf32>
    %cst_47 = arith.constant 2.000000e+01 : f32
    %575 = vector.broadcast %cst_47 : f32 to vector<1x128xf32>
    %576 = arith.cmpf ogt, %574, %575 : vector<1x128xf32>
    %cst_48 = arith.constant 2.000000e+01 : f32
    %577 = vector.broadcast %cst_48 : f32 to vector<1x128xf32>
    %578 = arith.minimumf %574, %577 : vector<1x128xf32>
    %579 = math.exp %578 : vector<1x128xf32>
    %580 = math.log1p %579 : vector<1x128xf32>
    %581 = arith.select %576, %574, %580 : vector<1x128xi1>, vector<1x128xf32>
    %cst_49 = arith.constant 0.000000e+00 : f32
    %582 = vector.broadcast %cst_49 : f32 to vector<1x128xf32>
    %583 = arith.subf %582, %581 : vector<1x128xf32>
    %584 = arith.addf %252, %287 : f32
    %585 = vector.broadcast %584 : f32 to vector<1x128xf32>
    %586 = arith.addf %511, %585 : vector<1x128xf32>
    %cst_50 = arith.constant 2.000000e+01 : f32
    %587 = vector.broadcast %cst_50 : f32 to vector<1x128xf32>
    %588 = arith.cmpf ogt, %586, %587 : vector<1x128xf32>
    %cst_51 = arith.constant 2.000000e+01 : f32
    %589 = vector.broadcast %cst_51 : f32 to vector<1x128xf32>
    %590 = arith.minimumf %586, %589 : vector<1x128xf32>
    %591 = math.exp %590 : vector<1x128xf32>
    %592 = math.log1p %591 : vector<1x128xf32>
    %593 = arith.select %588, %586, %592 : vector<1x128xi1>, vector<1x128xf32>
    %cst_52 = arith.constant 0.000000e+00 : f32
    %594 = vector.broadcast %cst_52 : f32 to vector<1x128xf32>
    %595 = arith.subf %594, %593 : vector<1x128xf32>
    %c126 = arith.constant 126 : index
    %596 = memref.load %arg1[%c126] : memref<412xf32, #tpu.memory_space<smem>>
    %c127 = arith.constant 127 : index
    %597 = memref.load %arg1[%c127] : memref<412xf32, #tpu.memory_space<smem>>
    %c128 = arith.constant 128 : index
    %598 = memref.load %arg1[%c128] : memref<412xf32, #tpu.memory_space<smem>>
    %c129 = arith.constant 129 : index
    %599 = memref.load %arg1[%c129] : memref<412xf32, #tpu.memory_space<smem>>
    %c130 = arith.constant 130 : index
    %600 = memref.load %arg1[%c130] : memref<412xf32, #tpu.memory_space<smem>>
    %c131 = arith.constant 131 : index
    %601 = memref.load %arg1[%c131] : memref<412xf32, #tpu.memory_space<smem>>
    %c132 = arith.constant 132 : index
    %602 = memref.load %arg1[%c132] : memref<412xf32, #tpu.memory_space<smem>>
    %c133 = arith.constant 133 : index
    %603 = memref.load %arg1[%c133] : memref<412xf32, #tpu.memory_space<smem>>
    %c134 = arith.constant 134 : index
    %604 = memref.load %arg1[%c134] : memref<412xf32, #tpu.memory_space<smem>>
    %c135 = arith.constant 135 : index
    %605 = memref.load %arg1[%c135] : memref<412xf32, #tpu.memory_space<smem>>
    %c136 = arith.constant 136 : index
    %606 = memref.load %arg1[%c136] : memref<412xf32, #tpu.memory_space<smem>>
    %c137 = arith.constant 137 : index
    %607 = memref.load %arg1[%c137] : memref<412xf32, #tpu.memory_space<smem>>
    %c138 = arith.constant 138 : index
    %608 = memref.load %arg1[%c138] : memref<412xf32, #tpu.memory_space<smem>>
    %c139 = arith.constant 139 : index
    %609 = memref.load %arg1[%c139] : memref<412xf32, #tpu.memory_space<smem>>
    %c140 = arith.constant 140 : index
    %610 = memref.load %arg1[%c140] : memref<412xf32, #tpu.memory_space<smem>>
    %c141 = arith.constant 141 : index
    %611 = memref.load %arg1[%c141] : memref<412xf32, #tpu.memory_space<smem>>
    %c142 = arith.constant 142 : index
    %612 = memref.load %arg1[%c142] : memref<412xf32, #tpu.memory_space<smem>>
    %c143 = arith.constant 143 : index
    %613 = memref.load %arg1[%c143] : memref<412xf32, #tpu.memory_space<smem>>
    %c144 = arith.constant 144 : index
    %614 = memref.load %arg1[%c144] : memref<412xf32, #tpu.memory_space<smem>>
    %c145 = arith.constant 145 : index
    %615 = memref.load %arg1[%c145] : memref<412xf32, #tpu.memory_space<smem>>
    %c146 = arith.constant 146 : index
    %616 = memref.load %arg1[%c146] : memref<412xf32, #tpu.memory_space<smem>>
    %c147 = arith.constant 147 : index
    %617 = memref.load %arg1[%c147] : memref<412xf32, #tpu.memory_space<smem>>
    %c148 = arith.constant 148 : index
    %618 = memref.load %arg1[%c148] : memref<412xf32, #tpu.memory_space<smem>>
    %c149 = arith.constant 149 : index
    %619 = memref.load %arg1[%c149] : memref<412xf32, #tpu.memory_space<smem>>
    %c150 = arith.constant 150 : index
    %620 = memref.load %arg1[%c150] : memref<412xf32, #tpu.memory_space<smem>>
    %c151 = arith.constant 151 : index
    %621 = memref.load %arg1[%c151] : memref<412xf32, #tpu.memory_space<smem>>
    %c152 = arith.constant 152 : index
    %622 = memref.load %arg1[%c152] : memref<412xf32, #tpu.memory_space<smem>>
    %c153 = arith.constant 153 : index
    %623 = memref.load %arg1[%c153] : memref<412xf32, #tpu.memory_space<smem>>
    %c154 = arith.constant 154 : index
    %624 = memref.load %arg1[%c154] : memref<412xf32, #tpu.memory_space<smem>>
    %c155 = arith.constant 155 : index
    %625 = memref.load %arg1[%c155] : memref<412xf32, #tpu.memory_space<smem>>
    %c156 = arith.constant 156 : index
    %626 = memref.load %arg1[%c156] : memref<412xf32, #tpu.memory_space<smem>>
    %c157 = arith.constant 157 : index
    %627 = memref.load %arg1[%c157] : memref<412xf32, #tpu.memory_space<smem>>
    %c158 = arith.constant 158 : index
    %628 = memref.load %arg1[%c158] : memref<412xf32, #tpu.memory_space<smem>>
    %c159 = arith.constant 159 : index
    %629 = memref.load %arg1[%c159] : memref<412xf32, #tpu.memory_space<smem>>
    %c160 = arith.constant 160 : index
    %630 = memref.load %arg1[%c160] : memref<412xf32, #tpu.memory_space<smem>>
    %c161 = arith.constant 161 : index
    %631 = memref.load %arg1[%c161] : memref<412xf32, #tpu.memory_space<smem>>
    %c162 = arith.constant 162 : index
    %632 = memref.load %arg1[%c162] : memref<412xf32, #tpu.memory_space<smem>>
    %c163 = arith.constant 163 : index
    %633 = memref.load %arg1[%c163] : memref<412xf32, #tpu.memory_space<smem>>
    %c164 = arith.constant 164 : index
    %634 = memref.load %arg1[%c164] : memref<412xf32, #tpu.memory_space<smem>>
    %c165 = arith.constant 165 : index
    %635 = memref.load %arg1[%c165] : memref<412xf32, #tpu.memory_space<smem>>
    %c166 = arith.constant 166 : index
    %636 = memref.load %arg1[%c166] : memref<412xf32, #tpu.memory_space<smem>>
    %c167 = arith.constant 167 : index
    %637 = memref.load %arg1[%c167] : memref<412xf32, #tpu.memory_space<smem>>
    %c168 = arith.constant 168 : index
    %638 = memref.load %arg1[%c168] : memref<412xf32, #tpu.memory_space<smem>>
    %c169 = arith.constant 169 : index
    %639 = memref.load %arg1[%c169] : memref<412xf32, #tpu.memory_space<smem>>
    %c170 = arith.constant 170 : index
    %640 = memref.load %arg1[%c170] : memref<412xf32, #tpu.memory_space<smem>>
    %c171 = arith.constant 171 : index
    %641 = memref.load %arg1[%c171] : memref<412xf32, #tpu.memory_space<smem>>
    %c172 = arith.constant 172 : index
    %642 = memref.load %arg1[%c172] : memref<412xf32, #tpu.memory_space<smem>>
    %c173 = arith.constant 173 : index
    %643 = memref.load %arg1[%c173] : memref<412xf32, #tpu.memory_space<smem>>
    %c174 = arith.constant 174 : index
    %644 = memref.load %arg1[%c174] : memref<412xf32, #tpu.memory_space<smem>>
    %c175 = arith.constant 175 : index
    %645 = memref.load %arg1[%c175] : memref<412xf32, #tpu.memory_space<smem>>
    %c176 = arith.constant 176 : index
    %646 = memref.load %arg1[%c176] : memref<412xf32, #tpu.memory_space<smem>>
    %c177 = arith.constant 177 : index
    %647 = memref.load %arg1[%c177] : memref<412xf32, #tpu.memory_space<smem>>
    %c178 = arith.constant 178 : index
    %648 = memref.load %arg1[%c178] : memref<412xf32, #tpu.memory_space<smem>>
    %c179 = arith.constant 179 : index
    %649 = memref.load %arg1[%c179] : memref<412xf32, #tpu.memory_space<smem>>
    %c180 = arith.constant 180 : index
    %650 = memref.load %arg1[%c180] : memref<412xf32, #tpu.memory_space<smem>>
    %c181 = arith.constant 181 : index
    %651 = memref.load %arg1[%c181] : memref<412xf32, #tpu.memory_space<smem>>
    %c182 = arith.constant 182 : index
    %652 = memref.load %arg1[%c182] : memref<412xf32, #tpu.memory_space<smem>>
    %c183 = arith.constant 183 : index
    %653 = memref.load %arg1[%c183] : memref<412xf32, #tpu.memory_space<smem>>
    %c184 = arith.constant 184 : index
    %654 = memref.load %arg1[%c184] : memref<412xf32, #tpu.memory_space<smem>>
    %c185 = arith.constant 185 : index
    %655 = memref.load %arg1[%c185] : memref<412xf32, #tpu.memory_space<smem>>
    %c186 = arith.constant 186 : index
    %656 = memref.load %arg1[%c186] : memref<412xf32, #tpu.memory_space<smem>>
    %c187 = arith.constant 187 : index
    %657 = memref.load %arg1[%c187] : memref<412xf32, #tpu.memory_space<smem>>
    %c188 = arith.constant 188 : index
    %658 = memref.load %arg1[%c188] : memref<412xf32, #tpu.memory_space<smem>>
    %c189 = arith.constant 189 : index
    %659 = memref.load %arg1[%c189] : memref<412xf32, #tpu.memory_space<smem>>
    %c190 = arith.constant 190 : index
    %660 = memref.load %arg1[%c190] : memref<412xf32, #tpu.memory_space<smem>>
    %c191 = arith.constant 191 : index
    %661 = memref.load %arg1[%c191] : memref<412xf32, #tpu.memory_space<smem>>
    %c192 = arith.constant 192 : index
    %662 = memref.load %arg1[%c192] : memref<412xf32, #tpu.memory_space<smem>>
    %c193 = arith.constant 193 : index
    %663 = memref.load %arg1[%c193] : memref<412xf32, #tpu.memory_space<smem>>
    %c194 = arith.constant 194 : index
    %664 = memref.load %arg1[%c194] : memref<412xf32, #tpu.memory_space<smem>>
    %c195 = arith.constant 195 : index
    %665 = memref.load %arg1[%c195] : memref<412xf32, #tpu.memory_space<smem>>
    %c196 = arith.constant 196 : index
    %666 = memref.load %arg1[%c196] : memref<412xf32, #tpu.memory_space<smem>>
    %c197 = arith.constant 197 : index
    %667 = memref.load %arg1[%c197] : memref<412xf32, #tpu.memory_space<smem>>
    %c198 = arith.constant 198 : index
    %668 = memref.load %arg1[%c198] : memref<412xf32, #tpu.memory_space<smem>>
    %c199 = arith.constant 199 : index
    %669 = memref.load %arg1[%c199] : memref<412xf32, #tpu.memory_space<smem>>
    %c200 = arith.constant 200 : index
    %670 = memref.load %arg1[%c200] : memref<412xf32, #tpu.memory_space<smem>>
    %c201 = arith.constant 201 : index
    %671 = memref.load %arg1[%c201] : memref<412xf32, #tpu.memory_space<smem>>
    %c202 = arith.constant 202 : index
    %672 = memref.load %arg1[%c202] : memref<412xf32, #tpu.memory_space<smem>>
    %c203 = arith.constant 203 : index
    %673 = memref.load %arg1[%c203] : memref<412xf32, #tpu.memory_space<smem>>
    %c204 = arith.constant 204 : index
    %674 = memref.load %arg1[%c204] : memref<412xf32, #tpu.memory_space<smem>>
    %c205 = arith.constant 205 : index
    %675 = memref.load %arg1[%c205] : memref<412xf32, #tpu.memory_space<smem>>
    %c206 = arith.constant 206 : index
    %676 = memref.load %arg1[%c206] : memref<412xf32, #tpu.memory_space<smem>>
    %c207 = arith.constant 207 : index
    %677 = memref.load %arg1[%c207] : memref<412xf32, #tpu.memory_space<smem>>
    %c208 = arith.constant 208 : index
    %678 = memref.load %arg1[%c208] : memref<412xf32, #tpu.memory_space<smem>>
    %c209 = arith.constant 209 : index
    %679 = memref.load %arg1[%c209] : memref<412xf32, #tpu.memory_space<smem>>
    %c210 = arith.constant 210 : index
    %680 = memref.load %arg1[%c210] : memref<412xf32, #tpu.memory_space<smem>>
    %c211 = arith.constant 211 : index
    %681 = memref.load %arg1[%c211] : memref<412xf32, #tpu.memory_space<smem>>
    %c212 = arith.constant 212 : index
    %682 = memref.load %arg1[%c212] : memref<412xf32, #tpu.memory_space<smem>>
    %c213 = arith.constant 213 : index
    %683 = memref.load %arg1[%c213] : memref<412xf32, #tpu.memory_space<smem>>
    %c214 = arith.constant 214 : index
    %684 = memref.load %arg1[%c214] : memref<412xf32, #tpu.memory_space<smem>>
    %c215 = arith.constant 215 : index
    %685 = memref.load %arg1[%c215] : memref<412xf32, #tpu.memory_space<smem>>
    %c216 = arith.constant 216 : index
    %686 = memref.load %arg1[%c216] : memref<412xf32, #tpu.memory_space<smem>>
    %687 = vector.broadcast %596 : f32 to vector<1x128xf32>
    %688 = arith.mulf %687, %523 : vector<1x128xf32>
    %689 = vector.broadcast %597 : f32 to vector<1x128xf32>
    %690 = arith.mulf %689, %535 : vector<1x128xf32>
    %691 = arith.addf %688, %690 : vector<1x128xf32>
    %692 = vector.broadcast %598 : f32 to vector<1x128xf32>
    %693 = arith.mulf %692, %547 : vector<1x128xf32>
    %694 = arith.addf %691, %693 : vector<1x128xf32>
    %695 = vector.broadcast %599 : f32 to vector<1x128xf32>
    %696 = arith.mulf %695, %559 : vector<1x128xf32>
    %697 = arith.addf %694, %696 : vector<1x128xf32>
    %698 = vector.broadcast %600 : f32 to vector<1x128xf32>
    %699 = arith.mulf %698, %571 : vector<1x128xf32>
    %700 = arith.addf %697, %699 : vector<1x128xf32>
    %701 = vector.broadcast %601 : f32 to vector<1x128xf32>
    %702 = arith.mulf %701, %583 : vector<1x128xf32>
    %703 = arith.addf %700, %702 : vector<1x128xf32>
    %704 = vector.broadcast %602 : f32 to vector<1x128xf32>
    %705 = arith.mulf %704, %595 : vector<1x128xf32>
    %706 = arith.addf %703, %705 : vector<1x128xf32>
    %707 = vector.broadcast %603 : f32 to vector<1x128xf32>
    %708 = arith.mulf %707, %523 : vector<1x128xf32>
    %709 = vector.broadcast %604 : f32 to vector<1x128xf32>
    %710 = arith.mulf %709, %535 : vector<1x128xf32>
    %711 = arith.addf %708, %710 : vector<1x128xf32>
    %712 = vector.broadcast %605 : f32 to vector<1x128xf32>
    %713 = arith.mulf %712, %547 : vector<1x128xf32>
    %714 = arith.addf %711, %713 : vector<1x128xf32>
    %715 = vector.broadcast %606 : f32 to vector<1x128xf32>
    %716 = arith.mulf %715, %559 : vector<1x128xf32>
    %717 = arith.addf %714, %716 : vector<1x128xf32>
    %718 = vector.broadcast %607 : f32 to vector<1x128xf32>
    %719 = arith.mulf %718, %571 : vector<1x128xf32>
    %720 = arith.addf %717, %719 : vector<1x128xf32>
    %721 = vector.broadcast %608 : f32 to vector<1x128xf32>
    %722 = arith.mulf %721, %583 : vector<1x128xf32>
    %723 = arith.addf %720, %722 : vector<1x128xf32>
    %724 = vector.broadcast %609 : f32 to vector<1x128xf32>
    %725 = arith.mulf %724, %595 : vector<1x128xf32>
    %726 = arith.addf %723, %725 : vector<1x128xf32>
    %727 = vector.broadcast %610 : f32 to vector<1x128xf32>
    %728 = arith.mulf %727, %523 : vector<1x128xf32>
    %729 = vector.broadcast %611 : f32 to vector<1x128xf32>
    %730 = arith.mulf %729, %535 : vector<1x128xf32>
    %731 = arith.addf %728, %730 : vector<1x128xf32>
    %732 = vector.broadcast %612 : f32 to vector<1x128xf32>
    %733 = arith.mulf %732, %547 : vector<1x128xf32>
    %734 = arith.addf %731, %733 : vector<1x128xf32>
    %735 = vector.broadcast %613 : f32 to vector<1x128xf32>
    %736 = arith.mulf %735, %559 : vector<1x128xf32>
    %737 = arith.addf %734, %736 : vector<1x128xf32>
    %738 = vector.broadcast %614 : f32 to vector<1x128xf32>
    %739 = arith.mulf %738, %571 : vector<1x128xf32>
    %740 = arith.addf %737, %739 : vector<1x128xf32>
    %741 = vector.broadcast %615 : f32 to vector<1x128xf32>
    %742 = arith.mulf %741, %583 : vector<1x128xf32>
    %743 = arith.addf %740, %742 : vector<1x128xf32>
    %744 = vector.broadcast %616 : f32 to vector<1x128xf32>
    %745 = arith.mulf %744, %595 : vector<1x128xf32>
    %746 = arith.addf %743, %745 : vector<1x128xf32>
    %747 = vector.broadcast %617 : f32 to vector<1x128xf32>
    %748 = arith.mulf %747, %523 : vector<1x128xf32>
    %749 = vector.broadcast %618 : f32 to vector<1x128xf32>
    %750 = arith.mulf %749, %535 : vector<1x128xf32>
    %751 = arith.addf %748, %750 : vector<1x128xf32>
    %752 = vector.broadcast %619 : f32 to vector<1x128xf32>
    %753 = arith.mulf %752, %547 : vector<1x128xf32>
    %754 = arith.addf %751, %753 : vector<1x128xf32>
    %755 = vector.broadcast %620 : f32 to vector<1x128xf32>
    %756 = arith.mulf %755, %559 : vector<1x128xf32>
    %757 = arith.addf %754, %756 : vector<1x128xf32>
    %758 = vector.broadcast %621 : f32 to vector<1x128xf32>
    %759 = arith.mulf %758, %571 : vector<1x128xf32>
    %760 = arith.addf %757, %759 : vector<1x128xf32>
    %761 = vector.broadcast %622 : f32 to vector<1x128xf32>
    %762 = arith.mulf %761, %583 : vector<1x128xf32>
    %763 = arith.addf %760, %762 : vector<1x128xf32>
    %764 = vector.broadcast %623 : f32 to vector<1x128xf32>
    %765 = arith.mulf %764, %595 : vector<1x128xf32>
    %766 = arith.addf %763, %765 : vector<1x128xf32>
    %767 = vector.broadcast %624 : f32 to vector<1x128xf32>
    %768 = arith.mulf %767, %523 : vector<1x128xf32>
    %769 = vector.broadcast %625 : f32 to vector<1x128xf32>
    %770 = arith.mulf %769, %535 : vector<1x128xf32>
    %771 = arith.addf %768, %770 : vector<1x128xf32>
    %772 = vector.broadcast %626 : f32 to vector<1x128xf32>
    %773 = arith.mulf %772, %547 : vector<1x128xf32>
    %774 = arith.addf %771, %773 : vector<1x128xf32>
    %775 = vector.broadcast %627 : f32 to vector<1x128xf32>
    %776 = arith.mulf %775, %559 : vector<1x128xf32>
    %777 = arith.addf %774, %776 : vector<1x128xf32>
    %778 = vector.broadcast %628 : f32 to vector<1x128xf32>
    %779 = arith.mulf %778, %571 : vector<1x128xf32>
    %780 = arith.addf %777, %779 : vector<1x128xf32>
    %781 = vector.broadcast %629 : f32 to vector<1x128xf32>
    %782 = arith.mulf %781, %583 : vector<1x128xf32>
    %783 = arith.addf %780, %782 : vector<1x128xf32>
    %784 = vector.broadcast %630 : f32 to vector<1x128xf32>
    %785 = arith.mulf %784, %595 : vector<1x128xf32>
    %786 = arith.addf %783, %785 : vector<1x128xf32>
    %787 = vector.broadcast %631 : f32 to vector<1x128xf32>
    %788 = arith.mulf %787, %523 : vector<1x128xf32>
    %789 = vector.broadcast %632 : f32 to vector<1x128xf32>
    %790 = arith.mulf %789, %535 : vector<1x128xf32>
    %791 = arith.addf %788, %790 : vector<1x128xf32>
    %792 = vector.broadcast %633 : f32 to vector<1x128xf32>
    %793 = arith.mulf %792, %547 : vector<1x128xf32>
    %794 = arith.addf %791, %793 : vector<1x128xf32>
    %795 = vector.broadcast %634 : f32 to vector<1x128xf32>
    %796 = arith.mulf %795, %559 : vector<1x128xf32>
    %797 = arith.addf %794, %796 : vector<1x128xf32>
    %798 = vector.broadcast %635 : f32 to vector<1x128xf32>
    %799 = arith.mulf %798, %571 : vector<1x128xf32>
    %800 = arith.addf %797, %799 : vector<1x128xf32>
    %801 = vector.broadcast %636 : f32 to vector<1x128xf32>
    %802 = arith.mulf %801, %583 : vector<1x128xf32>
    %803 = arith.addf %800, %802 : vector<1x128xf32>
    %804 = vector.broadcast %637 : f32 to vector<1x128xf32>
    %805 = arith.mulf %804, %595 : vector<1x128xf32>
    %806 = arith.addf %803, %805 : vector<1x128xf32>
    %807 = vector.broadcast %638 : f32 to vector<1x128xf32>
    %808 = arith.mulf %807, %523 : vector<1x128xf32>
    %809 = vector.broadcast %639 : f32 to vector<1x128xf32>
    %810 = arith.mulf %809, %535 : vector<1x128xf32>
    %811 = arith.addf %808, %810 : vector<1x128xf32>
    %812 = vector.broadcast %640 : f32 to vector<1x128xf32>
    %813 = arith.mulf %812, %547 : vector<1x128xf32>
    %814 = arith.addf %811, %813 : vector<1x128xf32>
    %815 = vector.broadcast %641 : f32 to vector<1x128xf32>
    %816 = arith.mulf %815, %559 : vector<1x128xf32>
    %817 = arith.addf %814, %816 : vector<1x128xf32>
    %818 = vector.broadcast %642 : f32 to vector<1x128xf32>
    %819 = arith.mulf %818, %571 : vector<1x128xf32>
    %820 = arith.addf %817, %819 : vector<1x128xf32>
    %821 = vector.broadcast %643 : f32 to vector<1x128xf32>
    %822 = arith.mulf %821, %583 : vector<1x128xf32>
    %823 = arith.addf %820, %822 : vector<1x128xf32>
    %824 = vector.broadcast %644 : f32 to vector<1x128xf32>
    %825 = arith.mulf %824, %595 : vector<1x128xf32>
    %826 = arith.addf %823, %825 : vector<1x128xf32>
    %827 = vector.broadcast %652 : f32 to vector<1x128xf32>
    %828 = arith.mulf %827, %1 : vector<1x128xf32>
    %829 = arith.addf %706, %828 : vector<1x128xf32>
    %830 = vector.broadcast %653 : f32 to vector<1x128xf32>
    %831 = arith.mulf %830, %3 : vector<1x128xf32>
    %832 = arith.addf %829, %831 : vector<1x128xf32>
    %833 = vector.broadcast %654 : f32 to vector<1x128xf32>
    %834 = arith.mulf %833, %5 : vector<1x128xf32>
    %835 = arith.addf %832, %834 : vector<1x128xf32>
    %836 = vector.broadcast %655 : f32 to vector<1x128xf32>
    %837 = arith.mulf %836, %7 : vector<1x128xf32>
    %838 = arith.addf %835, %837 : vector<1x128xf32>
    %839 = vector.broadcast %656 : f32 to vector<1x128xf32>
    %840 = arith.mulf %839, %1 : vector<1x128xf32>
    %841 = arith.addf %726, %840 : vector<1x128xf32>
    %842 = vector.broadcast %657 : f32 to vector<1x128xf32>
    %843 = arith.mulf %842, %3 : vector<1x128xf32>
    %844 = arith.addf %841, %843 : vector<1x128xf32>
    %845 = vector.broadcast %658 : f32 to vector<1x128xf32>
    %846 = arith.mulf %845, %5 : vector<1x128xf32>
    %847 = arith.addf %844, %846 : vector<1x128xf32>
    %848 = vector.broadcast %659 : f32 to vector<1x128xf32>
    %849 = arith.mulf %848, %7 : vector<1x128xf32>
    %850 = arith.addf %847, %849 : vector<1x128xf32>
    %851 = vector.broadcast %660 : f32 to vector<1x128xf32>
    %852 = arith.mulf %851, %1 : vector<1x128xf32>
    %853 = arith.addf %746, %852 : vector<1x128xf32>
    %854 = vector.broadcast %661 : f32 to vector<1x128xf32>
    %855 = arith.mulf %854, %3 : vector<1x128xf32>
    %856 = arith.addf %853, %855 : vector<1x128xf32>
    %857 = vector.broadcast %662 : f32 to vector<1x128xf32>
    %858 = arith.mulf %857, %5 : vector<1x128xf32>
    %859 = arith.addf %856, %858 : vector<1x128xf32>
    %860 = vector.broadcast %663 : f32 to vector<1x128xf32>
    %861 = arith.mulf %860, %7 : vector<1x128xf32>
    %862 = arith.addf %859, %861 : vector<1x128xf32>
    %863 = vector.broadcast %664 : f32 to vector<1x128xf32>
    %864 = arith.mulf %863, %1 : vector<1x128xf32>
    %865 = arith.addf %766, %864 : vector<1x128xf32>
    %866 = vector.broadcast %665 : f32 to vector<1x128xf32>
    %867 = arith.mulf %866, %3 : vector<1x128xf32>
    %868 = arith.addf %865, %867 : vector<1x128xf32>
    %869 = vector.broadcast %666 : f32 to vector<1x128xf32>
    %870 = arith.mulf %869, %5 : vector<1x128xf32>
    %871 = arith.addf %868, %870 : vector<1x128xf32>
    %872 = vector.broadcast %667 : f32 to vector<1x128xf32>
    %873 = arith.mulf %872, %7 : vector<1x128xf32>
    %874 = arith.addf %871, %873 : vector<1x128xf32>
    %875 = vector.broadcast %668 : f32 to vector<1x128xf32>
    %876 = arith.mulf %875, %1 : vector<1x128xf32>
    %877 = arith.addf %786, %876 : vector<1x128xf32>
    %878 = vector.broadcast %669 : f32 to vector<1x128xf32>
    %879 = arith.mulf %878, %3 : vector<1x128xf32>
    %880 = arith.addf %877, %879 : vector<1x128xf32>
    %881 = vector.broadcast %670 : f32 to vector<1x128xf32>
    %882 = arith.mulf %881, %5 : vector<1x128xf32>
    %883 = arith.addf %880, %882 : vector<1x128xf32>
    %884 = vector.broadcast %671 : f32 to vector<1x128xf32>
    %885 = arith.mulf %884, %7 : vector<1x128xf32>
    %886 = arith.addf %883, %885 : vector<1x128xf32>
    %887 = vector.broadcast %672 : f32 to vector<1x128xf32>
    %888 = arith.mulf %887, %1 : vector<1x128xf32>
    %889 = arith.addf %806, %888 : vector<1x128xf32>
    %890 = vector.broadcast %673 : f32 to vector<1x128xf32>
    %891 = arith.mulf %890, %3 : vector<1x128xf32>
    %892 = arith.addf %889, %891 : vector<1x128xf32>
    %893 = vector.broadcast %674 : f32 to vector<1x128xf32>
    %894 = arith.mulf %893, %5 : vector<1x128xf32>
    %895 = arith.addf %892, %894 : vector<1x128xf32>
    %896 = vector.broadcast %675 : f32 to vector<1x128xf32>
    %897 = arith.mulf %896, %7 : vector<1x128xf32>
    %898 = arith.addf %895, %897 : vector<1x128xf32>
    %899 = vector.broadcast %676 : f32 to vector<1x128xf32>
    %900 = arith.mulf %899, %1 : vector<1x128xf32>
    %901 = arith.addf %826, %900 : vector<1x128xf32>
    %902 = vector.broadcast %677 : f32 to vector<1x128xf32>
    %903 = arith.mulf %902, %3 : vector<1x128xf32>
    %904 = arith.addf %901, %903 : vector<1x128xf32>
    %905 = vector.broadcast %678 : f32 to vector<1x128xf32>
    %906 = arith.mulf %905, %5 : vector<1x128xf32>
    %907 = arith.addf %904, %906 : vector<1x128xf32>
    %908 = vector.broadcast %679 : f32 to vector<1x128xf32>
    %909 = arith.mulf %908, %7 : vector<1x128xf32>
    %910 = arith.addf %907, %909 : vector<1x128xf32>
    %911 = arith.addf %645, %680 : f32
    %912 = vector.broadcast %911 : f32 to vector<1x128xf32>
    %913 = arith.addf %838, %912 : vector<1x128xf32>
    %cst_53 = arith.constant 2.000000e+01 : f32
    %914 = vector.broadcast %cst_53 : f32 to vector<1x128xf32>
    %915 = arith.cmpf ogt, %913, %914 : vector<1x128xf32>
    %cst_54 = arith.constant 2.000000e+01 : f32
    %916 = vector.broadcast %cst_54 : f32 to vector<1x128xf32>
    %917 = arith.minimumf %913, %916 : vector<1x128xf32>
    %918 = math.exp %917 : vector<1x128xf32>
    %919 = math.log1p %918 : vector<1x128xf32>
    %920 = arith.select %915, %913, %919 : vector<1x128xi1>, vector<1x128xf32>
    %cst_55 = arith.constant 0.000000e+00 : f32
    %921 = vector.broadcast %cst_55 : f32 to vector<1x128xf32>
    %922 = arith.subf %921, %920 : vector<1x128xf32>
    %923 = arith.addf %646, %681 : f32
    %924 = vector.broadcast %923 : f32 to vector<1x128xf32>
    %925 = arith.addf %850, %924 : vector<1x128xf32>
    %cst_56 = arith.constant 2.000000e+01 : f32
    %926 = vector.broadcast %cst_56 : f32 to vector<1x128xf32>
    %927 = arith.cmpf ogt, %925, %926 : vector<1x128xf32>
    %cst_57 = arith.constant 2.000000e+01 : f32
    %928 = vector.broadcast %cst_57 : f32 to vector<1x128xf32>
    %929 = arith.minimumf %925, %928 : vector<1x128xf32>
    %930 = math.exp %929 : vector<1x128xf32>
    %931 = math.log1p %930 : vector<1x128xf32>
    %932 = arith.select %927, %925, %931 : vector<1x128xi1>, vector<1x128xf32>
    %cst_58 = arith.constant 0.000000e+00 : f32
    %933 = vector.broadcast %cst_58 : f32 to vector<1x128xf32>
    %934 = arith.subf %933, %932 : vector<1x128xf32>
    %935 = arith.addf %647, %682 : f32
    %936 = vector.broadcast %935 : f32 to vector<1x128xf32>
    %937 = arith.addf %862, %936 : vector<1x128xf32>
    %cst_59 = arith.constant 2.000000e+01 : f32
    %938 = vector.broadcast %cst_59 : f32 to vector<1x128xf32>
    %939 = arith.cmpf ogt, %937, %938 : vector<1x128xf32>
    %cst_60 = arith.constant 2.000000e+01 : f32
    %940 = vector.broadcast %cst_60 : f32 to vector<1x128xf32>
    %941 = arith.minimumf %937, %940 : vector<1x128xf32>
    %942 = math.exp %941 : vector<1x128xf32>
    %943 = math.log1p %942 : vector<1x128xf32>
    %944 = arith.select %939, %937, %943 : vector<1x128xi1>, vector<1x128xf32>
    %cst_61 = arith.constant 0.000000e+00 : f32
    %945 = vector.broadcast %cst_61 : f32 to vector<1x128xf32>
    %946 = arith.subf %945, %944 : vector<1x128xf32>
    %947 = arith.addf %648, %683 : f32
    %948 = vector.broadcast %947 : f32 to vector<1x128xf32>
    %949 = arith.addf %874, %948 : vector<1x128xf32>
    %cst_62 = arith.constant 2.000000e+01 : f32
    %950 = vector.broadcast %cst_62 : f32 to vector<1x128xf32>
    %951 = arith.cmpf ogt, %949, %950 : vector<1x128xf32>
    %cst_63 = arith.constant 2.000000e+01 : f32
    %952 = vector.broadcast %cst_63 : f32 to vector<1x128xf32>
    %953 = arith.minimumf %949, %952 : vector<1x128xf32>
    %954 = math.exp %953 : vector<1x128xf32>
    %955 = math.log1p %954 : vector<1x128xf32>
    %956 = arith.select %951, %949, %955 : vector<1x128xi1>, vector<1x128xf32>
    %cst_64 = arith.constant 0.000000e+00 : f32
    %957 = vector.broadcast %cst_64 : f32 to vector<1x128xf32>
    %958 = arith.subf %957, %956 : vector<1x128xf32>
    %959 = arith.addf %649, %684 : f32
    %960 = vector.broadcast %959 : f32 to vector<1x128xf32>
    %961 = arith.addf %886, %960 : vector<1x128xf32>
    %cst_65 = arith.constant 2.000000e+01 : f32
    %962 = vector.broadcast %cst_65 : f32 to vector<1x128xf32>
    %963 = arith.cmpf ogt, %961, %962 : vector<1x128xf32>
    %cst_66 = arith.constant 2.000000e+01 : f32
    %964 = vector.broadcast %cst_66 : f32 to vector<1x128xf32>
    %965 = arith.minimumf %961, %964 : vector<1x128xf32>
    %966 = math.exp %965 : vector<1x128xf32>
    %967 = math.log1p %966 : vector<1x128xf32>
    %968 = arith.select %963, %961, %967 : vector<1x128xi1>, vector<1x128xf32>
    %cst_67 = arith.constant 0.000000e+00 : f32
    %969 = vector.broadcast %cst_67 : f32 to vector<1x128xf32>
    %970 = arith.subf %969, %968 : vector<1x128xf32>
    %971 = arith.addf %650, %685 : f32
    %972 = vector.broadcast %971 : f32 to vector<1x128xf32>
    %973 = arith.addf %898, %972 : vector<1x128xf32>
    %cst_68 = arith.constant 2.000000e+01 : f32
    %974 = vector.broadcast %cst_68 : f32 to vector<1x128xf32>
    %975 = arith.cmpf ogt, %973, %974 : vector<1x128xf32>
    %cst_69 = arith.constant 2.000000e+01 : f32
    %976 = vector.broadcast %cst_69 : f32 to vector<1x128xf32>
    %977 = arith.minimumf %973, %976 : vector<1x128xf32>
    %978 = math.exp %977 : vector<1x128xf32>
    %979 = math.log1p %978 : vector<1x128xf32>
    %980 = arith.select %975, %973, %979 : vector<1x128xi1>, vector<1x128xf32>
    %cst_70 = arith.constant 0.000000e+00 : f32
    %981 = vector.broadcast %cst_70 : f32 to vector<1x128xf32>
    %982 = arith.subf %981, %980 : vector<1x128xf32>
    %983 = arith.addf %651, %686 : f32
    %984 = vector.broadcast %983 : f32 to vector<1x128xf32>
    %985 = arith.addf %910, %984 : vector<1x128xf32>
    %cst_71 = arith.constant 2.000000e+01 : f32
    %986 = vector.broadcast %cst_71 : f32 to vector<1x128xf32>
    %987 = arith.cmpf ogt, %985, %986 : vector<1x128xf32>
    %cst_72 = arith.constant 2.000000e+01 : f32
    %988 = vector.broadcast %cst_72 : f32 to vector<1x128xf32>
    %989 = arith.minimumf %985, %988 : vector<1x128xf32>
    %990 = math.exp %989 : vector<1x128xf32>
    %991 = math.log1p %990 : vector<1x128xf32>
    %992 = arith.select %987, %985, %991 : vector<1x128xi1>, vector<1x128xf32>
    %cst_73 = arith.constant 0.000000e+00 : f32
    %993 = vector.broadcast %cst_73 : f32 to vector<1x128xf32>
    %994 = arith.subf %993, %992 : vector<1x128xf32>
    %c217 = arith.constant 217 : index
    %995 = memref.load %arg1[%c217] : memref<412xf32, #tpu.memory_space<smem>>
    %c218 = arith.constant 218 : index
    %996 = memref.load %arg1[%c218] : memref<412xf32, #tpu.memory_space<smem>>
    %c219 = arith.constant 219 : index
    %997 = memref.load %arg1[%c219] : memref<412xf32, #tpu.memory_space<smem>>
    %c220 = arith.constant 220 : index
    %998 = memref.load %arg1[%c220] : memref<412xf32, #tpu.memory_space<smem>>
    %c221 = arith.constant 221 : index
    %999 = memref.load %arg1[%c221] : memref<412xf32, #tpu.memory_space<smem>>
    %c222 = arith.constant 222 : index
    %1000 = memref.load %arg1[%c222] : memref<412xf32, #tpu.memory_space<smem>>
    %c223 = arith.constant 223 : index
    %1001 = memref.load %arg1[%c223] : memref<412xf32, #tpu.memory_space<smem>>
    %c224 = arith.constant 224 : index
    %1002 = memref.load %arg1[%c224] : memref<412xf32, #tpu.memory_space<smem>>
    %c225 = arith.constant 225 : index
    %1003 = memref.load %arg1[%c225] : memref<412xf32, #tpu.memory_space<smem>>
    %c226 = arith.constant 226 : index
    %1004 = memref.load %arg1[%c226] : memref<412xf32, #tpu.memory_space<smem>>
    %c227 = arith.constant 227 : index
    %1005 = memref.load %arg1[%c227] : memref<412xf32, #tpu.memory_space<smem>>
    %c228 = arith.constant 228 : index
    %1006 = memref.load %arg1[%c228] : memref<412xf32, #tpu.memory_space<smem>>
    %c229 = arith.constant 229 : index
    %1007 = memref.load %arg1[%c229] : memref<412xf32, #tpu.memory_space<smem>>
    %c230 = arith.constant 230 : index
    %1008 = memref.load %arg1[%c230] : memref<412xf32, #tpu.memory_space<smem>>
    %c231 = arith.constant 231 : index
    %1009 = memref.load %arg1[%c231] : memref<412xf32, #tpu.memory_space<smem>>
    %c232 = arith.constant 232 : index
    %1010 = memref.load %arg1[%c232] : memref<412xf32, #tpu.memory_space<smem>>
    %c233 = arith.constant 233 : index
    %1011 = memref.load %arg1[%c233] : memref<412xf32, #tpu.memory_space<smem>>
    %c234 = arith.constant 234 : index
    %1012 = memref.load %arg1[%c234] : memref<412xf32, #tpu.memory_space<smem>>
    %c235 = arith.constant 235 : index
    %1013 = memref.load %arg1[%c235] : memref<412xf32, #tpu.memory_space<smem>>
    %c236 = arith.constant 236 : index
    %1014 = memref.load %arg1[%c236] : memref<412xf32, #tpu.memory_space<smem>>
    %c237 = arith.constant 237 : index
    %1015 = memref.load %arg1[%c237] : memref<412xf32, #tpu.memory_space<smem>>
    %c238 = arith.constant 238 : index
    %1016 = memref.load %arg1[%c238] : memref<412xf32, #tpu.memory_space<smem>>
    %c239 = arith.constant 239 : index
    %1017 = memref.load %arg1[%c239] : memref<412xf32, #tpu.memory_space<smem>>
    %c240 = arith.constant 240 : index
    %1018 = memref.load %arg1[%c240] : memref<412xf32, #tpu.memory_space<smem>>
    %c241 = arith.constant 241 : index
    %1019 = memref.load %arg1[%c241] : memref<412xf32, #tpu.memory_space<smem>>
    %c242 = arith.constant 242 : index
    %1020 = memref.load %arg1[%c242] : memref<412xf32, #tpu.memory_space<smem>>
    %c243 = arith.constant 243 : index
    %1021 = memref.load %arg1[%c243] : memref<412xf32, #tpu.memory_space<smem>>
    %c244 = arith.constant 244 : index
    %1022 = memref.load %arg1[%c244] : memref<412xf32, #tpu.memory_space<smem>>
    %c245 = arith.constant 245 : index
    %1023 = memref.load %arg1[%c245] : memref<412xf32, #tpu.memory_space<smem>>
    %c246 = arith.constant 246 : index
    %1024 = memref.load %arg1[%c246] : memref<412xf32, #tpu.memory_space<smem>>
    %c247 = arith.constant 247 : index
    %1025 = memref.load %arg1[%c247] : memref<412xf32, #tpu.memory_space<smem>>
    %c248 = arith.constant 248 : index
    %1026 = memref.load %arg1[%c248] : memref<412xf32, #tpu.memory_space<smem>>
    %c249 = arith.constant 249 : index
    %1027 = memref.load %arg1[%c249] : memref<412xf32, #tpu.memory_space<smem>>
    %c250 = arith.constant 250 : index
    %1028 = memref.load %arg1[%c250] : memref<412xf32, #tpu.memory_space<smem>>
    %c251 = arith.constant 251 : index
    %1029 = memref.load %arg1[%c251] : memref<412xf32, #tpu.memory_space<smem>>
    %c252 = arith.constant 252 : index
    %1030 = memref.load %arg1[%c252] : memref<412xf32, #tpu.memory_space<smem>>
    %c253 = arith.constant 253 : index
    %1031 = memref.load %arg1[%c253] : memref<412xf32, #tpu.memory_space<smem>>
    %c254 = arith.constant 254 : index
    %1032 = memref.load %arg1[%c254] : memref<412xf32, #tpu.memory_space<smem>>
    %c255 = arith.constant 255 : index
    %1033 = memref.load %arg1[%c255] : memref<412xf32, #tpu.memory_space<smem>>
    %c256 = arith.constant 256 : index
    %1034 = memref.load %arg1[%c256] : memref<412xf32, #tpu.memory_space<smem>>
    %c257 = arith.constant 257 : index
    %1035 = memref.load %arg1[%c257] : memref<412xf32, #tpu.memory_space<smem>>
    %c258 = arith.constant 258 : index
    %1036 = memref.load %arg1[%c258] : memref<412xf32, #tpu.memory_space<smem>>
    %c259 = arith.constant 259 : index
    %1037 = memref.load %arg1[%c259] : memref<412xf32, #tpu.memory_space<smem>>
    %c260 = arith.constant 260 : index
    %1038 = memref.load %arg1[%c260] : memref<412xf32, #tpu.memory_space<smem>>
    %c261 = arith.constant 261 : index
    %1039 = memref.load %arg1[%c261] : memref<412xf32, #tpu.memory_space<smem>>
    %c262 = arith.constant 262 : index
    %1040 = memref.load %arg1[%c262] : memref<412xf32, #tpu.memory_space<smem>>
    %c263 = arith.constant 263 : index
    %1041 = memref.load %arg1[%c263] : memref<412xf32, #tpu.memory_space<smem>>
    %c264 = arith.constant 264 : index
    %1042 = memref.load %arg1[%c264] : memref<412xf32, #tpu.memory_space<smem>>
    %c265 = arith.constant 265 : index
    %1043 = memref.load %arg1[%c265] : memref<412xf32, #tpu.memory_space<smem>>
    %c266 = arith.constant 266 : index
    %1044 = memref.load %arg1[%c266] : memref<412xf32, #tpu.memory_space<smem>>
    %c267 = arith.constant 267 : index
    %1045 = memref.load %arg1[%c267] : memref<412xf32, #tpu.memory_space<smem>>
    %c268 = arith.constant 268 : index
    %1046 = memref.load %arg1[%c268] : memref<412xf32, #tpu.memory_space<smem>>
    %c269 = arith.constant 269 : index
    %1047 = memref.load %arg1[%c269] : memref<412xf32, #tpu.memory_space<smem>>
    %c270 = arith.constant 270 : index
    %1048 = memref.load %arg1[%c270] : memref<412xf32, #tpu.memory_space<smem>>
    %c271 = arith.constant 271 : index
    %1049 = memref.load %arg1[%c271] : memref<412xf32, #tpu.memory_space<smem>>
    %c272 = arith.constant 272 : index
    %1050 = memref.load %arg1[%c272] : memref<412xf32, #tpu.memory_space<smem>>
    %c273 = arith.constant 273 : index
    %1051 = memref.load %arg1[%c273] : memref<412xf32, #tpu.memory_space<smem>>
    %c274 = arith.constant 274 : index
    %1052 = memref.load %arg1[%c274] : memref<412xf32, #tpu.memory_space<smem>>
    %c275 = arith.constant 275 : index
    %1053 = memref.load %arg1[%c275] : memref<412xf32, #tpu.memory_space<smem>>
    %c276 = arith.constant 276 : index
    %1054 = memref.load %arg1[%c276] : memref<412xf32, #tpu.memory_space<smem>>
    %c277 = arith.constant 277 : index
    %1055 = memref.load %arg1[%c277] : memref<412xf32, #tpu.memory_space<smem>>
    %c278 = arith.constant 278 : index
    %1056 = memref.load %arg1[%c278] : memref<412xf32, #tpu.memory_space<smem>>
    %c279 = arith.constant 279 : index
    %1057 = memref.load %arg1[%c279] : memref<412xf32, #tpu.memory_space<smem>>
    %c280 = arith.constant 280 : index
    %1058 = memref.load %arg1[%c280] : memref<412xf32, #tpu.memory_space<smem>>
    %c281 = arith.constant 281 : index
    %1059 = memref.load %arg1[%c281] : memref<412xf32, #tpu.memory_space<smem>>
    %c282 = arith.constant 282 : index
    %1060 = memref.load %arg1[%c282] : memref<412xf32, #tpu.memory_space<smem>>
    %c283 = arith.constant 283 : index
    %1061 = memref.load %arg1[%c283] : memref<412xf32, #tpu.memory_space<smem>>
    %c284 = arith.constant 284 : index
    %1062 = memref.load %arg1[%c284] : memref<412xf32, #tpu.memory_space<smem>>
    %c285 = arith.constant 285 : index
    %1063 = memref.load %arg1[%c285] : memref<412xf32, #tpu.memory_space<smem>>
    %c286 = arith.constant 286 : index
    %1064 = memref.load %arg1[%c286] : memref<412xf32, #tpu.memory_space<smem>>
    %c287 = arith.constant 287 : index
    %1065 = memref.load %arg1[%c287] : memref<412xf32, #tpu.memory_space<smem>>
    %c288 = arith.constant 288 : index
    %1066 = memref.load %arg1[%c288] : memref<412xf32, #tpu.memory_space<smem>>
    %c289 = arith.constant 289 : index
    %1067 = memref.load %arg1[%c289] : memref<412xf32, #tpu.memory_space<smem>>
    %c290 = arith.constant 290 : index
    %1068 = memref.load %arg1[%c290] : memref<412xf32, #tpu.memory_space<smem>>
    %c291 = arith.constant 291 : index
    %1069 = memref.load %arg1[%c291] : memref<412xf32, #tpu.memory_space<smem>>
    %c292 = arith.constant 292 : index
    %1070 = memref.load %arg1[%c292] : memref<412xf32, #tpu.memory_space<smem>>
    %c293 = arith.constant 293 : index
    %1071 = memref.load %arg1[%c293] : memref<412xf32, #tpu.memory_space<smem>>
    %c294 = arith.constant 294 : index
    %1072 = memref.load %arg1[%c294] : memref<412xf32, #tpu.memory_space<smem>>
    %c295 = arith.constant 295 : index
    %1073 = memref.load %arg1[%c295] : memref<412xf32, #tpu.memory_space<smem>>
    %c296 = arith.constant 296 : index
    %1074 = memref.load %arg1[%c296] : memref<412xf32, #tpu.memory_space<smem>>
    %c297 = arith.constant 297 : index
    %1075 = memref.load %arg1[%c297] : memref<412xf32, #tpu.memory_space<smem>>
    %c298 = arith.constant 298 : index
    %1076 = memref.load %arg1[%c298] : memref<412xf32, #tpu.memory_space<smem>>
    %c299 = arith.constant 299 : index
    %1077 = memref.load %arg1[%c299] : memref<412xf32, #tpu.memory_space<smem>>
    %c300 = arith.constant 300 : index
    %1078 = memref.load %arg1[%c300] : memref<412xf32, #tpu.memory_space<smem>>
    %c301 = arith.constant 301 : index
    %1079 = memref.load %arg1[%c301] : memref<412xf32, #tpu.memory_space<smem>>
    %c302 = arith.constant 302 : index
    %1080 = memref.load %arg1[%c302] : memref<412xf32, #tpu.memory_space<smem>>
    %c303 = arith.constant 303 : index
    %1081 = memref.load %arg1[%c303] : memref<412xf32, #tpu.memory_space<smem>>
    %c304 = arith.constant 304 : index
    %1082 = memref.load %arg1[%c304] : memref<412xf32, #tpu.memory_space<smem>>
    %c305 = arith.constant 305 : index
    %1083 = memref.load %arg1[%c305] : memref<412xf32, #tpu.memory_space<smem>>
    %c306 = arith.constant 306 : index
    %1084 = memref.load %arg1[%c306] : memref<412xf32, #tpu.memory_space<smem>>
    %c307 = arith.constant 307 : index
    %1085 = memref.load %arg1[%c307] : memref<412xf32, #tpu.memory_space<smem>>
    %1086 = vector.broadcast %995 : f32 to vector<1x128xf32>
    %1087 = arith.mulf %1086, %922 : vector<1x128xf32>
    %1088 = vector.broadcast %996 : f32 to vector<1x128xf32>
    %1089 = arith.mulf %1088, %934 : vector<1x128xf32>
    %1090 = arith.addf %1087, %1089 : vector<1x128xf32>
    %1091 = vector.broadcast %997 : f32 to vector<1x128xf32>
    %1092 = arith.mulf %1091, %946 : vector<1x128xf32>
    %1093 = arith.addf %1090, %1092 : vector<1x128xf32>
    %1094 = vector.broadcast %998 : f32 to vector<1x128xf32>
    %1095 = arith.mulf %1094, %958 : vector<1x128xf32>
    %1096 = arith.addf %1093, %1095 : vector<1x128xf32>
    %1097 = vector.broadcast %999 : f32 to vector<1x128xf32>
    %1098 = arith.mulf %1097, %970 : vector<1x128xf32>
    %1099 = arith.addf %1096, %1098 : vector<1x128xf32>
    %1100 = vector.broadcast %1000 : f32 to vector<1x128xf32>
    %1101 = arith.mulf %1100, %982 : vector<1x128xf32>
    %1102 = arith.addf %1099, %1101 : vector<1x128xf32>
    %1103 = vector.broadcast %1001 : f32 to vector<1x128xf32>
    %1104 = arith.mulf %1103, %994 : vector<1x128xf32>
    %1105 = arith.addf %1102, %1104 : vector<1x128xf32>
    %1106 = vector.broadcast %1002 : f32 to vector<1x128xf32>
    %1107 = arith.mulf %1106, %922 : vector<1x128xf32>
    %1108 = vector.broadcast %1003 : f32 to vector<1x128xf32>
    %1109 = arith.mulf %1108, %934 : vector<1x128xf32>
    %1110 = arith.addf %1107, %1109 : vector<1x128xf32>
    %1111 = vector.broadcast %1004 : f32 to vector<1x128xf32>
    %1112 = arith.mulf %1111, %946 : vector<1x128xf32>
    %1113 = arith.addf %1110, %1112 : vector<1x128xf32>
    %1114 = vector.broadcast %1005 : f32 to vector<1x128xf32>
    %1115 = arith.mulf %1114, %958 : vector<1x128xf32>
    %1116 = arith.addf %1113, %1115 : vector<1x128xf32>
    %1117 = vector.broadcast %1006 : f32 to vector<1x128xf32>
    %1118 = arith.mulf %1117, %970 : vector<1x128xf32>
    %1119 = arith.addf %1116, %1118 : vector<1x128xf32>
    %1120 = vector.broadcast %1007 : f32 to vector<1x128xf32>
    %1121 = arith.mulf %1120, %982 : vector<1x128xf32>
    %1122 = arith.addf %1119, %1121 : vector<1x128xf32>
    %1123 = vector.broadcast %1008 : f32 to vector<1x128xf32>
    %1124 = arith.mulf %1123, %994 : vector<1x128xf32>
    %1125 = arith.addf %1122, %1124 : vector<1x128xf32>
    %1126 = vector.broadcast %1009 : f32 to vector<1x128xf32>
    %1127 = arith.mulf %1126, %922 : vector<1x128xf32>
    %1128 = vector.broadcast %1010 : f32 to vector<1x128xf32>
    %1129 = arith.mulf %1128, %934 : vector<1x128xf32>
    %1130 = arith.addf %1127, %1129 : vector<1x128xf32>
    %1131 = vector.broadcast %1011 : f32 to vector<1x128xf32>
    %1132 = arith.mulf %1131, %946 : vector<1x128xf32>
    %1133 = arith.addf %1130, %1132 : vector<1x128xf32>
    %1134 = vector.broadcast %1012 : f32 to vector<1x128xf32>
    %1135 = arith.mulf %1134, %958 : vector<1x128xf32>
    %1136 = arith.addf %1133, %1135 : vector<1x128xf32>
    %1137 = vector.broadcast %1013 : f32 to vector<1x128xf32>
    %1138 = arith.mulf %1137, %970 : vector<1x128xf32>
    %1139 = arith.addf %1136, %1138 : vector<1x128xf32>
    %1140 = vector.broadcast %1014 : f32 to vector<1x128xf32>
    %1141 = arith.mulf %1140, %982 : vector<1x128xf32>
    %1142 = arith.addf %1139, %1141 : vector<1x128xf32>
    %1143 = vector.broadcast %1015 : f32 to vector<1x128xf32>
    %1144 = arith.mulf %1143, %994 : vector<1x128xf32>
    %1145 = arith.addf %1142, %1144 : vector<1x128xf32>
    %1146 = vector.broadcast %1016 : f32 to vector<1x128xf32>
    %1147 = arith.mulf %1146, %922 : vector<1x128xf32>
    %1148 = vector.broadcast %1017 : f32 to vector<1x128xf32>
    %1149 = arith.mulf %1148, %934 : vector<1x128xf32>
    %1150 = arith.addf %1147, %1149 : vector<1x128xf32>
    %1151 = vector.broadcast %1018 : f32 to vector<1x128xf32>
    %1152 = arith.mulf %1151, %946 : vector<1x128xf32>
    %1153 = arith.addf %1150, %1152 : vector<1x128xf32>
    %1154 = vector.broadcast %1019 : f32 to vector<1x128xf32>
    %1155 = arith.mulf %1154, %958 : vector<1x128xf32>
    %1156 = arith.addf %1153, %1155 : vector<1x128xf32>
    %1157 = vector.broadcast %1020 : f32 to vector<1x128xf32>
    %1158 = arith.mulf %1157, %970 : vector<1x128xf32>
    %1159 = arith.addf %1156, %1158 : vector<1x128xf32>
    %1160 = vector.broadcast %1021 : f32 to vector<1x128xf32>
    %1161 = arith.mulf %1160, %982 : vector<1x128xf32>
    %1162 = arith.addf %1159, %1161 : vector<1x128xf32>
    %1163 = vector.broadcast %1022 : f32 to vector<1x128xf32>
    %1164 = arith.mulf %1163, %994 : vector<1x128xf32>
    %1165 = arith.addf %1162, %1164 : vector<1x128xf32>
    %1166 = vector.broadcast %1023 : f32 to vector<1x128xf32>
    %1167 = arith.mulf %1166, %922 : vector<1x128xf32>
    %1168 = vector.broadcast %1024 : f32 to vector<1x128xf32>
    %1169 = arith.mulf %1168, %934 : vector<1x128xf32>
    %1170 = arith.addf %1167, %1169 : vector<1x128xf32>
    %1171 = vector.broadcast %1025 : f32 to vector<1x128xf32>
    %1172 = arith.mulf %1171, %946 : vector<1x128xf32>
    %1173 = arith.addf %1170, %1172 : vector<1x128xf32>
    %1174 = vector.broadcast %1026 : f32 to vector<1x128xf32>
    %1175 = arith.mulf %1174, %958 : vector<1x128xf32>
    %1176 = arith.addf %1173, %1175 : vector<1x128xf32>
    %1177 = vector.broadcast %1027 : f32 to vector<1x128xf32>
    %1178 = arith.mulf %1177, %970 : vector<1x128xf32>
    %1179 = arith.addf %1176, %1178 : vector<1x128xf32>
    %1180 = vector.broadcast %1028 : f32 to vector<1x128xf32>
    %1181 = arith.mulf %1180, %982 : vector<1x128xf32>
    %1182 = arith.addf %1179, %1181 : vector<1x128xf32>
    %1183 = vector.broadcast %1029 : f32 to vector<1x128xf32>
    %1184 = arith.mulf %1183, %994 : vector<1x128xf32>
    %1185 = arith.addf %1182, %1184 : vector<1x128xf32>
    %1186 = vector.broadcast %1030 : f32 to vector<1x128xf32>
    %1187 = arith.mulf %1186, %922 : vector<1x128xf32>
    %1188 = vector.broadcast %1031 : f32 to vector<1x128xf32>
    %1189 = arith.mulf %1188, %934 : vector<1x128xf32>
    %1190 = arith.addf %1187, %1189 : vector<1x128xf32>
    %1191 = vector.broadcast %1032 : f32 to vector<1x128xf32>
    %1192 = arith.mulf %1191, %946 : vector<1x128xf32>
    %1193 = arith.addf %1190, %1192 : vector<1x128xf32>
    %1194 = vector.broadcast %1033 : f32 to vector<1x128xf32>
    %1195 = arith.mulf %1194, %958 : vector<1x128xf32>
    %1196 = arith.addf %1193, %1195 : vector<1x128xf32>
    %1197 = vector.broadcast %1034 : f32 to vector<1x128xf32>
    %1198 = arith.mulf %1197, %970 : vector<1x128xf32>
    %1199 = arith.addf %1196, %1198 : vector<1x128xf32>
    %1200 = vector.broadcast %1035 : f32 to vector<1x128xf32>
    %1201 = arith.mulf %1200, %982 : vector<1x128xf32>
    %1202 = arith.addf %1199, %1201 : vector<1x128xf32>
    %1203 = vector.broadcast %1036 : f32 to vector<1x128xf32>
    %1204 = arith.mulf %1203, %994 : vector<1x128xf32>
    %1205 = arith.addf %1202, %1204 : vector<1x128xf32>
    %1206 = vector.broadcast %1037 : f32 to vector<1x128xf32>
    %1207 = arith.mulf %1206, %922 : vector<1x128xf32>
    %1208 = vector.broadcast %1038 : f32 to vector<1x128xf32>
    %1209 = arith.mulf %1208, %934 : vector<1x128xf32>
    %1210 = arith.addf %1207, %1209 : vector<1x128xf32>
    %1211 = vector.broadcast %1039 : f32 to vector<1x128xf32>
    %1212 = arith.mulf %1211, %946 : vector<1x128xf32>
    %1213 = arith.addf %1210, %1212 : vector<1x128xf32>
    %1214 = vector.broadcast %1040 : f32 to vector<1x128xf32>
    %1215 = arith.mulf %1214, %958 : vector<1x128xf32>
    %1216 = arith.addf %1213, %1215 : vector<1x128xf32>
    %1217 = vector.broadcast %1041 : f32 to vector<1x128xf32>
    %1218 = arith.mulf %1217, %970 : vector<1x128xf32>
    %1219 = arith.addf %1216, %1218 : vector<1x128xf32>
    %1220 = vector.broadcast %1042 : f32 to vector<1x128xf32>
    %1221 = arith.mulf %1220, %982 : vector<1x128xf32>
    %1222 = arith.addf %1219, %1221 : vector<1x128xf32>
    %1223 = vector.broadcast %1043 : f32 to vector<1x128xf32>
    %1224 = arith.mulf %1223, %994 : vector<1x128xf32>
    %1225 = arith.addf %1222, %1224 : vector<1x128xf32>
    %1226 = vector.broadcast %1051 : f32 to vector<1x128xf32>
    %1227 = arith.mulf %1226, %1 : vector<1x128xf32>
    %1228 = arith.addf %1105, %1227 : vector<1x128xf32>
    %1229 = vector.broadcast %1052 : f32 to vector<1x128xf32>
    %1230 = arith.mulf %1229, %3 : vector<1x128xf32>
    %1231 = arith.addf %1228, %1230 : vector<1x128xf32>
    %1232 = vector.broadcast %1053 : f32 to vector<1x128xf32>
    %1233 = arith.mulf %1232, %5 : vector<1x128xf32>
    %1234 = arith.addf %1231, %1233 : vector<1x128xf32>
    %1235 = vector.broadcast %1054 : f32 to vector<1x128xf32>
    %1236 = arith.mulf %1235, %7 : vector<1x128xf32>
    %1237 = arith.addf %1234, %1236 : vector<1x128xf32>
    %1238 = vector.broadcast %1055 : f32 to vector<1x128xf32>
    %1239 = arith.mulf %1238, %1 : vector<1x128xf32>
    %1240 = arith.addf %1125, %1239 : vector<1x128xf32>
    %1241 = vector.broadcast %1056 : f32 to vector<1x128xf32>
    %1242 = arith.mulf %1241, %3 : vector<1x128xf32>
    %1243 = arith.addf %1240, %1242 : vector<1x128xf32>
    %1244 = vector.broadcast %1057 : f32 to vector<1x128xf32>
    %1245 = arith.mulf %1244, %5 : vector<1x128xf32>
    %1246 = arith.addf %1243, %1245 : vector<1x128xf32>
    %1247 = vector.broadcast %1058 : f32 to vector<1x128xf32>
    %1248 = arith.mulf %1247, %7 : vector<1x128xf32>
    %1249 = arith.addf %1246, %1248 : vector<1x128xf32>
    %1250 = vector.broadcast %1059 : f32 to vector<1x128xf32>
    %1251 = arith.mulf %1250, %1 : vector<1x128xf32>
    %1252 = arith.addf %1145, %1251 : vector<1x128xf32>
    %1253 = vector.broadcast %1060 : f32 to vector<1x128xf32>
    %1254 = arith.mulf %1253, %3 : vector<1x128xf32>
    %1255 = arith.addf %1252, %1254 : vector<1x128xf32>
    %1256 = vector.broadcast %1061 : f32 to vector<1x128xf32>
    %1257 = arith.mulf %1256, %5 : vector<1x128xf32>
    %1258 = arith.addf %1255, %1257 : vector<1x128xf32>
    %1259 = vector.broadcast %1062 : f32 to vector<1x128xf32>
    %1260 = arith.mulf %1259, %7 : vector<1x128xf32>
    %1261 = arith.addf %1258, %1260 : vector<1x128xf32>
    %1262 = vector.broadcast %1063 : f32 to vector<1x128xf32>
    %1263 = arith.mulf %1262, %1 : vector<1x128xf32>
    %1264 = arith.addf %1165, %1263 : vector<1x128xf32>
    %1265 = vector.broadcast %1064 : f32 to vector<1x128xf32>
    %1266 = arith.mulf %1265, %3 : vector<1x128xf32>
    %1267 = arith.addf %1264, %1266 : vector<1x128xf32>
    %1268 = vector.broadcast %1065 : f32 to vector<1x128xf32>
    %1269 = arith.mulf %1268, %5 : vector<1x128xf32>
    %1270 = arith.addf %1267, %1269 : vector<1x128xf32>
    %1271 = vector.broadcast %1066 : f32 to vector<1x128xf32>
    %1272 = arith.mulf %1271, %7 : vector<1x128xf32>
    %1273 = arith.addf %1270, %1272 : vector<1x128xf32>
    %1274 = vector.broadcast %1067 : f32 to vector<1x128xf32>
    %1275 = arith.mulf %1274, %1 : vector<1x128xf32>
    %1276 = arith.addf %1185, %1275 : vector<1x128xf32>
    %1277 = vector.broadcast %1068 : f32 to vector<1x128xf32>
    %1278 = arith.mulf %1277, %3 : vector<1x128xf32>
    %1279 = arith.addf %1276, %1278 : vector<1x128xf32>
    %1280 = vector.broadcast %1069 : f32 to vector<1x128xf32>
    %1281 = arith.mulf %1280, %5 : vector<1x128xf32>
    %1282 = arith.addf %1279, %1281 : vector<1x128xf32>
    %1283 = vector.broadcast %1070 : f32 to vector<1x128xf32>
    %1284 = arith.mulf %1283, %7 : vector<1x128xf32>
    %1285 = arith.addf %1282, %1284 : vector<1x128xf32>
    %1286 = vector.broadcast %1071 : f32 to vector<1x128xf32>
    %1287 = arith.mulf %1286, %1 : vector<1x128xf32>
    %1288 = arith.addf %1205, %1287 : vector<1x128xf32>
    %1289 = vector.broadcast %1072 : f32 to vector<1x128xf32>
    %1290 = arith.mulf %1289, %3 : vector<1x128xf32>
    %1291 = arith.addf %1288, %1290 : vector<1x128xf32>
    %1292 = vector.broadcast %1073 : f32 to vector<1x128xf32>
    %1293 = arith.mulf %1292, %5 : vector<1x128xf32>
    %1294 = arith.addf %1291, %1293 : vector<1x128xf32>
    %1295 = vector.broadcast %1074 : f32 to vector<1x128xf32>
    %1296 = arith.mulf %1295, %7 : vector<1x128xf32>
    %1297 = arith.addf %1294, %1296 : vector<1x128xf32>
    %1298 = vector.broadcast %1075 : f32 to vector<1x128xf32>
    %1299 = arith.mulf %1298, %1 : vector<1x128xf32>
    %1300 = arith.addf %1225, %1299 : vector<1x128xf32>
    %1301 = vector.broadcast %1076 : f32 to vector<1x128xf32>
    %1302 = arith.mulf %1301, %3 : vector<1x128xf32>
    %1303 = arith.addf %1300, %1302 : vector<1x128xf32>
    %1304 = vector.broadcast %1077 : f32 to vector<1x128xf32>
    %1305 = arith.mulf %1304, %5 : vector<1x128xf32>
    %1306 = arith.addf %1303, %1305 : vector<1x128xf32>
    %1307 = vector.broadcast %1078 : f32 to vector<1x128xf32>
    %1308 = arith.mulf %1307, %7 : vector<1x128xf32>
    %1309 = arith.addf %1306, %1308 : vector<1x128xf32>
    %1310 = arith.addf %1044, %1079 : f32
    %1311 = vector.broadcast %1310 : f32 to vector<1x128xf32>
    %1312 = arith.addf %1237, %1311 : vector<1x128xf32>
    %cst_74 = arith.constant 2.000000e+01 : f32
    %1313 = vector.broadcast %cst_74 : f32 to vector<1x128xf32>
    %1314 = arith.cmpf ogt, %1312, %1313 : vector<1x128xf32>
    %cst_75 = arith.constant 2.000000e+01 : f32
    %1315 = vector.broadcast %cst_75 : f32 to vector<1x128xf32>
    %1316 = arith.minimumf %1312, %1315 : vector<1x128xf32>
    %1317 = math.exp %1316 : vector<1x128xf32>
    %1318 = math.log1p %1317 : vector<1x128xf32>
    %1319 = arith.select %1314, %1312, %1318 : vector<1x128xi1>, vector<1x128xf32>
    %cst_76 = arith.constant 0.000000e+00 : f32
    %1320 = vector.broadcast %cst_76 : f32 to vector<1x128xf32>
    %1321 = arith.subf %1320, %1319 : vector<1x128xf32>
    %1322 = arith.addf %1045, %1080 : f32
    %1323 = vector.broadcast %1322 : f32 to vector<1x128xf32>
    %1324 = arith.addf %1249, %1323 : vector<1x128xf32>
    %cst_77 = arith.constant 2.000000e+01 : f32
    %1325 = vector.broadcast %cst_77 : f32 to vector<1x128xf32>
    %1326 = arith.cmpf ogt, %1324, %1325 : vector<1x128xf32>
    %cst_78 = arith.constant 2.000000e+01 : f32
    %1327 = vector.broadcast %cst_78 : f32 to vector<1x128xf32>
    %1328 = arith.minimumf %1324, %1327 : vector<1x128xf32>
    %1329 = math.exp %1328 : vector<1x128xf32>
    %1330 = math.log1p %1329 : vector<1x128xf32>
    %1331 = arith.select %1326, %1324, %1330 : vector<1x128xi1>, vector<1x128xf32>
    %cst_79 = arith.constant 0.000000e+00 : f32
    %1332 = vector.broadcast %cst_79 : f32 to vector<1x128xf32>
    %1333 = arith.subf %1332, %1331 : vector<1x128xf32>
    %1334 = arith.addf %1046, %1081 : f32
    %1335 = vector.broadcast %1334 : f32 to vector<1x128xf32>
    %1336 = arith.addf %1261, %1335 : vector<1x128xf32>
    %cst_80 = arith.constant 2.000000e+01 : f32
    %1337 = vector.broadcast %cst_80 : f32 to vector<1x128xf32>
    %1338 = arith.cmpf ogt, %1336, %1337 : vector<1x128xf32>
    %cst_81 = arith.constant 2.000000e+01 : f32
    %1339 = vector.broadcast %cst_81 : f32 to vector<1x128xf32>
    %1340 = arith.minimumf %1336, %1339 : vector<1x128xf32>
    %1341 = math.exp %1340 : vector<1x128xf32>
    %1342 = math.log1p %1341 : vector<1x128xf32>
    %1343 = arith.select %1338, %1336, %1342 : vector<1x128xi1>, vector<1x128xf32>
    %cst_82 = arith.constant 0.000000e+00 : f32
    %1344 = vector.broadcast %cst_82 : f32 to vector<1x128xf32>
    %1345 = arith.subf %1344, %1343 : vector<1x128xf32>
    %1346 = arith.addf %1047, %1082 : f32
    %1347 = vector.broadcast %1346 : f32 to vector<1x128xf32>
    %1348 = arith.addf %1273, %1347 : vector<1x128xf32>
    %cst_83 = arith.constant 2.000000e+01 : f32
    %1349 = vector.broadcast %cst_83 : f32 to vector<1x128xf32>
    %1350 = arith.cmpf ogt, %1348, %1349 : vector<1x128xf32>
    %cst_84 = arith.constant 2.000000e+01 : f32
    %1351 = vector.broadcast %cst_84 : f32 to vector<1x128xf32>
    %1352 = arith.minimumf %1348, %1351 : vector<1x128xf32>
    %1353 = math.exp %1352 : vector<1x128xf32>
    %1354 = math.log1p %1353 : vector<1x128xf32>
    %1355 = arith.select %1350, %1348, %1354 : vector<1x128xi1>, vector<1x128xf32>
    %cst_85 = arith.constant 0.000000e+00 : f32
    %1356 = vector.broadcast %cst_85 : f32 to vector<1x128xf32>
    %1357 = arith.subf %1356, %1355 : vector<1x128xf32>
    %1358 = arith.addf %1048, %1083 : f32
    %1359 = vector.broadcast %1358 : f32 to vector<1x128xf32>
    %1360 = arith.addf %1285, %1359 : vector<1x128xf32>
    %cst_86 = arith.constant 2.000000e+01 : f32
    %1361 = vector.broadcast %cst_86 : f32 to vector<1x128xf32>
    %1362 = arith.cmpf ogt, %1360, %1361 : vector<1x128xf32>
    %cst_87 = arith.constant 2.000000e+01 : f32
    %1363 = vector.broadcast %cst_87 : f32 to vector<1x128xf32>
    %1364 = arith.minimumf %1360, %1363 : vector<1x128xf32>
    %1365 = math.exp %1364 : vector<1x128xf32>
    %1366 = math.log1p %1365 : vector<1x128xf32>
    %1367 = arith.select %1362, %1360, %1366 : vector<1x128xi1>, vector<1x128xf32>
    %cst_88 = arith.constant 0.000000e+00 : f32
    %1368 = vector.broadcast %cst_88 : f32 to vector<1x128xf32>
    %1369 = arith.subf %1368, %1367 : vector<1x128xf32>
    %1370 = arith.addf %1049, %1084 : f32
    %1371 = vector.broadcast %1370 : f32 to vector<1x128xf32>
    %1372 = arith.addf %1297, %1371 : vector<1x128xf32>
    %cst_89 = arith.constant 2.000000e+01 : f32
    %1373 = vector.broadcast %cst_89 : f32 to vector<1x128xf32>
    %1374 = arith.cmpf ogt, %1372, %1373 : vector<1x128xf32>
    %cst_90 = arith.constant 2.000000e+01 : f32
    %1375 = vector.broadcast %cst_90 : f32 to vector<1x128xf32>
    %1376 = arith.minimumf %1372, %1375 : vector<1x128xf32>
    %1377 = math.exp %1376 : vector<1x128xf32>
    %1378 = math.log1p %1377 : vector<1x128xf32>
    %1379 = arith.select %1374, %1372, %1378 : vector<1x128xi1>, vector<1x128xf32>
    %cst_91 = arith.constant 0.000000e+00 : f32
    %1380 = vector.broadcast %cst_91 : f32 to vector<1x128xf32>
    %1381 = arith.subf %1380, %1379 : vector<1x128xf32>
    %1382 = arith.addf %1050, %1085 : f32
    %1383 = vector.broadcast %1382 : f32 to vector<1x128xf32>
    %1384 = arith.addf %1309, %1383 : vector<1x128xf32>
    %cst_92 = arith.constant 2.000000e+01 : f32
    %1385 = vector.broadcast %cst_92 : f32 to vector<1x128xf32>
    %1386 = arith.cmpf ogt, %1384, %1385 : vector<1x128xf32>
    %cst_93 = arith.constant 2.000000e+01 : f32
    %1387 = vector.broadcast %cst_93 : f32 to vector<1x128xf32>
    %1388 = arith.minimumf %1384, %1387 : vector<1x128xf32>
    %1389 = math.exp %1388 : vector<1x128xf32>
    %1390 = math.log1p %1389 : vector<1x128xf32>
    %1391 = arith.select %1386, %1384, %1390 : vector<1x128xi1>, vector<1x128xf32>
    %cst_94 = arith.constant 0.000000e+00 : f32
    %1392 = vector.broadcast %cst_94 : f32 to vector<1x128xf32>
    %1393 = arith.subf %1392, %1391 : vector<1x128xf32>
    %c308 = arith.constant 308 : index
    %1394 = memref.load %arg1[%c308] : memref<412xf32, #tpu.memory_space<smem>>
    %c309 = arith.constant 309 : index
    %1395 = memref.load %arg1[%c309] : memref<412xf32, #tpu.memory_space<smem>>
    %c310 = arith.constant 310 : index
    %1396 = memref.load %arg1[%c310] : memref<412xf32, #tpu.memory_space<smem>>
    %c311 = arith.constant 311 : index
    %1397 = memref.load %arg1[%c311] : memref<412xf32, #tpu.memory_space<smem>>
    %c312 = arith.constant 312 : index
    %1398 = memref.load %arg1[%c312] : memref<412xf32, #tpu.memory_space<smem>>
    %c313 = arith.constant 313 : index
    %1399 = memref.load %arg1[%c313] : memref<412xf32, #tpu.memory_space<smem>>
    %c314 = arith.constant 314 : index
    %1400 = memref.load %arg1[%c314] : memref<412xf32, #tpu.memory_space<smem>>
    %c315 = arith.constant 315 : index
    %1401 = memref.load %arg1[%c315] : memref<412xf32, #tpu.memory_space<smem>>
    %c316 = arith.constant 316 : index
    %1402 = memref.load %arg1[%c316] : memref<412xf32, #tpu.memory_space<smem>>
    %c317 = arith.constant 317 : index
    %1403 = memref.load %arg1[%c317] : memref<412xf32, #tpu.memory_space<smem>>
    %c318 = arith.constant 318 : index
    %1404 = memref.load %arg1[%c318] : memref<412xf32, #tpu.memory_space<smem>>
    %c319 = arith.constant 319 : index
    %1405 = memref.load %arg1[%c319] : memref<412xf32, #tpu.memory_space<smem>>
    %c320 = arith.constant 320 : index
    %1406 = memref.load %arg1[%c320] : memref<412xf32, #tpu.memory_space<smem>>
    %c321 = arith.constant 321 : index
    %1407 = memref.load %arg1[%c321] : memref<412xf32, #tpu.memory_space<smem>>
    %c322 = arith.constant 322 : index
    %1408 = memref.load %arg1[%c322] : memref<412xf32, #tpu.memory_space<smem>>
    %c323 = arith.constant 323 : index
    %1409 = memref.load %arg1[%c323] : memref<412xf32, #tpu.memory_space<smem>>
    %c324 = arith.constant 324 : index
    %1410 = memref.load %arg1[%c324] : memref<412xf32, #tpu.memory_space<smem>>
    %c325 = arith.constant 325 : index
    %1411 = memref.load %arg1[%c325] : memref<412xf32, #tpu.memory_space<smem>>
    %c326 = arith.constant 326 : index
    %1412 = memref.load %arg1[%c326] : memref<412xf32, #tpu.memory_space<smem>>
    %c327 = arith.constant 327 : index
    %1413 = memref.load %arg1[%c327] : memref<412xf32, #tpu.memory_space<smem>>
    %c328 = arith.constant 328 : index
    %1414 = memref.load %arg1[%c328] : memref<412xf32, #tpu.memory_space<smem>>
    %c329 = arith.constant 329 : index
    %1415 = memref.load %arg1[%c329] : memref<412xf32, #tpu.memory_space<smem>>
    %c330 = arith.constant 330 : index
    %1416 = memref.load %arg1[%c330] : memref<412xf32, #tpu.memory_space<smem>>
    %c331 = arith.constant 331 : index
    %1417 = memref.load %arg1[%c331] : memref<412xf32, #tpu.memory_space<smem>>
    %c332 = arith.constant 332 : index
    %1418 = memref.load %arg1[%c332] : memref<412xf32, #tpu.memory_space<smem>>
    %c333 = arith.constant 333 : index
    %1419 = memref.load %arg1[%c333] : memref<412xf32, #tpu.memory_space<smem>>
    %c334 = arith.constant 334 : index
    %1420 = memref.load %arg1[%c334] : memref<412xf32, #tpu.memory_space<smem>>
    %c335 = arith.constant 335 : index
    %1421 = memref.load %arg1[%c335] : memref<412xf32, #tpu.memory_space<smem>>
    %c336 = arith.constant 336 : index
    %1422 = memref.load %arg1[%c336] : memref<412xf32, #tpu.memory_space<smem>>
    %c337 = arith.constant 337 : index
    %1423 = memref.load %arg1[%c337] : memref<412xf32, #tpu.memory_space<smem>>
    %c338 = arith.constant 338 : index
    %1424 = memref.load %arg1[%c338] : memref<412xf32, #tpu.memory_space<smem>>
    %c339 = arith.constant 339 : index
    %1425 = memref.load %arg1[%c339] : memref<412xf32, #tpu.memory_space<smem>>
    %c340 = arith.constant 340 : index
    %1426 = memref.load %arg1[%c340] : memref<412xf32, #tpu.memory_space<smem>>
    %c341 = arith.constant 341 : index
    %1427 = memref.load %arg1[%c341] : memref<412xf32, #tpu.memory_space<smem>>
    %c342 = arith.constant 342 : index
    %1428 = memref.load %arg1[%c342] : memref<412xf32, #tpu.memory_space<smem>>
    %c343 = arith.constant 343 : index
    %1429 = memref.load %arg1[%c343] : memref<412xf32, #tpu.memory_space<smem>>
    %c344 = arith.constant 344 : index
    %1430 = memref.load %arg1[%c344] : memref<412xf32, #tpu.memory_space<smem>>
    %c345 = arith.constant 345 : index
    %1431 = memref.load %arg1[%c345] : memref<412xf32, #tpu.memory_space<smem>>
    %c346 = arith.constant 346 : index
    %1432 = memref.load %arg1[%c346] : memref<412xf32, #tpu.memory_space<smem>>
    %c347 = arith.constant 347 : index
    %1433 = memref.load %arg1[%c347] : memref<412xf32, #tpu.memory_space<smem>>
    %c348 = arith.constant 348 : index
    %1434 = memref.load %arg1[%c348] : memref<412xf32, #tpu.memory_space<smem>>
    %c349 = arith.constant 349 : index
    %1435 = memref.load %arg1[%c349] : memref<412xf32, #tpu.memory_space<smem>>
    %c350 = arith.constant 350 : index
    %1436 = memref.load %arg1[%c350] : memref<412xf32, #tpu.memory_space<smem>>
    %c351 = arith.constant 351 : index
    %1437 = memref.load %arg1[%c351] : memref<412xf32, #tpu.memory_space<smem>>
    %c352 = arith.constant 352 : index
    %1438 = memref.load %arg1[%c352] : memref<412xf32, #tpu.memory_space<smem>>
    %c353 = arith.constant 353 : index
    %1439 = memref.load %arg1[%c353] : memref<412xf32, #tpu.memory_space<smem>>
    %c354 = arith.constant 354 : index
    %1440 = memref.load %arg1[%c354] : memref<412xf32, #tpu.memory_space<smem>>
    %c355 = arith.constant 355 : index
    %1441 = memref.load %arg1[%c355] : memref<412xf32, #tpu.memory_space<smem>>
    %c356 = arith.constant 356 : index
    %1442 = memref.load %arg1[%c356] : memref<412xf32, #tpu.memory_space<smem>>
    %c357 = arith.constant 357 : index
    %1443 = memref.load %arg1[%c357] : memref<412xf32, #tpu.memory_space<smem>>
    %c358 = arith.constant 358 : index
    %1444 = memref.load %arg1[%c358] : memref<412xf32, #tpu.memory_space<smem>>
    %c359 = arith.constant 359 : index
    %1445 = memref.load %arg1[%c359] : memref<412xf32, #tpu.memory_space<smem>>
    %c360 = arith.constant 360 : index
    %1446 = memref.load %arg1[%c360] : memref<412xf32, #tpu.memory_space<smem>>
    %c361 = arith.constant 361 : index
    %1447 = memref.load %arg1[%c361] : memref<412xf32, #tpu.memory_space<smem>>
    %c362 = arith.constant 362 : index
    %1448 = memref.load %arg1[%c362] : memref<412xf32, #tpu.memory_space<smem>>
    %c363 = arith.constant 363 : index
    %1449 = memref.load %arg1[%c363] : memref<412xf32, #tpu.memory_space<smem>>
    %c364 = arith.constant 364 : index
    %1450 = memref.load %arg1[%c364] : memref<412xf32, #tpu.memory_space<smem>>
    %c365 = arith.constant 365 : index
    %1451 = memref.load %arg1[%c365] : memref<412xf32, #tpu.memory_space<smem>>
    %c366 = arith.constant 366 : index
    %1452 = memref.load %arg1[%c366] : memref<412xf32, #tpu.memory_space<smem>>
    %c367 = arith.constant 367 : index
    %1453 = memref.load %arg1[%c367] : memref<412xf32, #tpu.memory_space<smem>>
    %c368 = arith.constant 368 : index
    %1454 = memref.load %arg1[%c368] : memref<412xf32, #tpu.memory_space<smem>>
    %c369 = arith.constant 369 : index
    %1455 = memref.load %arg1[%c369] : memref<412xf32, #tpu.memory_space<smem>>
    %c370 = arith.constant 370 : index
    %1456 = memref.load %arg1[%c370] : memref<412xf32, #tpu.memory_space<smem>>
    %c371 = arith.constant 371 : index
    %1457 = memref.load %arg1[%c371] : memref<412xf32, #tpu.memory_space<smem>>
    %c372 = arith.constant 372 : index
    %1458 = memref.load %arg1[%c372] : memref<412xf32, #tpu.memory_space<smem>>
    %c373 = arith.constant 373 : index
    %1459 = memref.load %arg1[%c373] : memref<412xf32, #tpu.memory_space<smem>>
    %c374 = arith.constant 374 : index
    %1460 = memref.load %arg1[%c374] : memref<412xf32, #tpu.memory_space<smem>>
    %c375 = arith.constant 375 : index
    %1461 = memref.load %arg1[%c375] : memref<412xf32, #tpu.memory_space<smem>>
    %c376 = arith.constant 376 : index
    %1462 = memref.load %arg1[%c376] : memref<412xf32, #tpu.memory_space<smem>>
    %c377 = arith.constant 377 : index
    %1463 = memref.load %arg1[%c377] : memref<412xf32, #tpu.memory_space<smem>>
    %c378 = arith.constant 378 : index
    %1464 = memref.load %arg1[%c378] : memref<412xf32, #tpu.memory_space<smem>>
    %c379 = arith.constant 379 : index
    %1465 = memref.load %arg1[%c379] : memref<412xf32, #tpu.memory_space<smem>>
    %c380 = arith.constant 380 : index
    %1466 = memref.load %arg1[%c380] : memref<412xf32, #tpu.memory_space<smem>>
    %c381 = arith.constant 381 : index
    %1467 = memref.load %arg1[%c381] : memref<412xf32, #tpu.memory_space<smem>>
    %c382 = arith.constant 382 : index
    %1468 = memref.load %arg1[%c382] : memref<412xf32, #tpu.memory_space<smem>>
    %c383 = arith.constant 383 : index
    %1469 = memref.load %arg1[%c383] : memref<412xf32, #tpu.memory_space<smem>>
    %c384 = arith.constant 384 : index
    %1470 = memref.load %arg1[%c384] : memref<412xf32, #tpu.memory_space<smem>>
    %c385 = arith.constant 385 : index
    %1471 = memref.load %arg1[%c385] : memref<412xf32, #tpu.memory_space<smem>>
    %c386 = arith.constant 386 : index
    %1472 = memref.load %arg1[%c386] : memref<412xf32, #tpu.memory_space<smem>>
    %c387 = arith.constant 387 : index
    %1473 = memref.load %arg1[%c387] : memref<412xf32, #tpu.memory_space<smem>>
    %c388 = arith.constant 388 : index
    %1474 = memref.load %arg1[%c388] : memref<412xf32, #tpu.memory_space<smem>>
    %c389 = arith.constant 389 : index
    %1475 = memref.load %arg1[%c389] : memref<412xf32, #tpu.memory_space<smem>>
    %c390 = arith.constant 390 : index
    %1476 = memref.load %arg1[%c390] : memref<412xf32, #tpu.memory_space<smem>>
    %c391 = arith.constant 391 : index
    %1477 = memref.load %arg1[%c391] : memref<412xf32, #tpu.memory_space<smem>>
    %c392 = arith.constant 392 : index
    %1478 = memref.load %arg1[%c392] : memref<412xf32, #tpu.memory_space<smem>>
    %c393 = arith.constant 393 : index
    %1479 = memref.load %arg1[%c393] : memref<412xf32, #tpu.memory_space<smem>>
    %c394 = arith.constant 394 : index
    %1480 = memref.load %arg1[%c394] : memref<412xf32, #tpu.memory_space<smem>>
    %c395 = arith.constant 395 : index
    %1481 = memref.load %arg1[%c395] : memref<412xf32, #tpu.memory_space<smem>>
    %c396 = arith.constant 396 : index
    %1482 = memref.load %arg1[%c396] : memref<412xf32, #tpu.memory_space<smem>>
    %c397 = arith.constant 397 : index
    %1483 = memref.load %arg1[%c397] : memref<412xf32, #tpu.memory_space<smem>>
    %c398 = arith.constant 398 : index
    %1484 = memref.load %arg1[%c398] : memref<412xf32, #tpu.memory_space<smem>>
    %1485 = vector.broadcast %1394 : f32 to vector<1x128xf32>
    %1486 = arith.mulf %1485, %1321 : vector<1x128xf32>
    %1487 = vector.broadcast %1395 : f32 to vector<1x128xf32>
    %1488 = arith.mulf %1487, %1333 : vector<1x128xf32>
    %1489 = arith.addf %1486, %1488 : vector<1x128xf32>
    %1490 = vector.broadcast %1396 : f32 to vector<1x128xf32>
    %1491 = arith.mulf %1490, %1345 : vector<1x128xf32>
    %1492 = arith.addf %1489, %1491 : vector<1x128xf32>
    %1493 = vector.broadcast %1397 : f32 to vector<1x128xf32>
    %1494 = arith.mulf %1493, %1357 : vector<1x128xf32>
    %1495 = arith.addf %1492, %1494 : vector<1x128xf32>
    %1496 = vector.broadcast %1398 : f32 to vector<1x128xf32>
    %1497 = arith.mulf %1496, %1369 : vector<1x128xf32>
    %1498 = arith.addf %1495, %1497 : vector<1x128xf32>
    %1499 = vector.broadcast %1399 : f32 to vector<1x128xf32>
    %1500 = arith.mulf %1499, %1381 : vector<1x128xf32>
    %1501 = arith.addf %1498, %1500 : vector<1x128xf32>
    %1502 = vector.broadcast %1400 : f32 to vector<1x128xf32>
    %1503 = arith.mulf %1502, %1393 : vector<1x128xf32>
    %1504 = arith.addf %1501, %1503 : vector<1x128xf32>
    %1505 = vector.broadcast %1401 : f32 to vector<1x128xf32>
    %1506 = arith.mulf %1505, %1321 : vector<1x128xf32>
    %1507 = vector.broadcast %1402 : f32 to vector<1x128xf32>
    %1508 = arith.mulf %1507, %1333 : vector<1x128xf32>
    %1509 = arith.addf %1506, %1508 : vector<1x128xf32>
    %1510 = vector.broadcast %1403 : f32 to vector<1x128xf32>
    %1511 = arith.mulf %1510, %1345 : vector<1x128xf32>
    %1512 = arith.addf %1509, %1511 : vector<1x128xf32>
    %1513 = vector.broadcast %1404 : f32 to vector<1x128xf32>
    %1514 = arith.mulf %1513, %1357 : vector<1x128xf32>
    %1515 = arith.addf %1512, %1514 : vector<1x128xf32>
    %1516 = vector.broadcast %1405 : f32 to vector<1x128xf32>
    %1517 = arith.mulf %1516, %1369 : vector<1x128xf32>
    %1518 = arith.addf %1515, %1517 : vector<1x128xf32>
    %1519 = vector.broadcast %1406 : f32 to vector<1x128xf32>
    %1520 = arith.mulf %1519, %1381 : vector<1x128xf32>
    %1521 = arith.addf %1518, %1520 : vector<1x128xf32>
    %1522 = vector.broadcast %1407 : f32 to vector<1x128xf32>
    %1523 = arith.mulf %1522, %1393 : vector<1x128xf32>
    %1524 = arith.addf %1521, %1523 : vector<1x128xf32>
    %1525 = vector.broadcast %1408 : f32 to vector<1x128xf32>
    %1526 = arith.mulf %1525, %1321 : vector<1x128xf32>
    %1527 = vector.broadcast %1409 : f32 to vector<1x128xf32>
    %1528 = arith.mulf %1527, %1333 : vector<1x128xf32>
    %1529 = arith.addf %1526, %1528 : vector<1x128xf32>
    %1530 = vector.broadcast %1410 : f32 to vector<1x128xf32>
    %1531 = arith.mulf %1530, %1345 : vector<1x128xf32>
    %1532 = arith.addf %1529, %1531 : vector<1x128xf32>
    %1533 = vector.broadcast %1411 : f32 to vector<1x128xf32>
    %1534 = arith.mulf %1533, %1357 : vector<1x128xf32>
    %1535 = arith.addf %1532, %1534 : vector<1x128xf32>
    %1536 = vector.broadcast %1412 : f32 to vector<1x128xf32>
    %1537 = arith.mulf %1536, %1369 : vector<1x128xf32>
    %1538 = arith.addf %1535, %1537 : vector<1x128xf32>
    %1539 = vector.broadcast %1413 : f32 to vector<1x128xf32>
    %1540 = arith.mulf %1539, %1381 : vector<1x128xf32>
    %1541 = arith.addf %1538, %1540 : vector<1x128xf32>
    %1542 = vector.broadcast %1414 : f32 to vector<1x128xf32>
    %1543 = arith.mulf %1542, %1393 : vector<1x128xf32>
    %1544 = arith.addf %1541, %1543 : vector<1x128xf32>
    %1545 = vector.broadcast %1415 : f32 to vector<1x128xf32>
    %1546 = arith.mulf %1545, %1321 : vector<1x128xf32>
    %1547 = vector.broadcast %1416 : f32 to vector<1x128xf32>
    %1548 = arith.mulf %1547, %1333 : vector<1x128xf32>
    %1549 = arith.addf %1546, %1548 : vector<1x128xf32>
    %1550 = vector.broadcast %1417 : f32 to vector<1x128xf32>
    %1551 = arith.mulf %1550, %1345 : vector<1x128xf32>
    %1552 = arith.addf %1549, %1551 : vector<1x128xf32>
    %1553 = vector.broadcast %1418 : f32 to vector<1x128xf32>
    %1554 = arith.mulf %1553, %1357 : vector<1x128xf32>
    %1555 = arith.addf %1552, %1554 : vector<1x128xf32>
    %1556 = vector.broadcast %1419 : f32 to vector<1x128xf32>
    %1557 = arith.mulf %1556, %1369 : vector<1x128xf32>
    %1558 = arith.addf %1555, %1557 : vector<1x128xf32>
    %1559 = vector.broadcast %1420 : f32 to vector<1x128xf32>
    %1560 = arith.mulf %1559, %1381 : vector<1x128xf32>
    %1561 = arith.addf %1558, %1560 : vector<1x128xf32>
    %1562 = vector.broadcast %1421 : f32 to vector<1x128xf32>
    %1563 = arith.mulf %1562, %1393 : vector<1x128xf32>
    %1564 = arith.addf %1561, %1563 : vector<1x128xf32>
    %1565 = vector.broadcast %1422 : f32 to vector<1x128xf32>
    %1566 = arith.mulf %1565, %1321 : vector<1x128xf32>
    %1567 = vector.broadcast %1423 : f32 to vector<1x128xf32>
    %1568 = arith.mulf %1567, %1333 : vector<1x128xf32>
    %1569 = arith.addf %1566, %1568 : vector<1x128xf32>
    %1570 = vector.broadcast %1424 : f32 to vector<1x128xf32>
    %1571 = arith.mulf %1570, %1345 : vector<1x128xf32>
    %1572 = arith.addf %1569, %1571 : vector<1x128xf32>
    %1573 = vector.broadcast %1425 : f32 to vector<1x128xf32>
    %1574 = arith.mulf %1573, %1357 : vector<1x128xf32>
    %1575 = arith.addf %1572, %1574 : vector<1x128xf32>
    %1576 = vector.broadcast %1426 : f32 to vector<1x128xf32>
    %1577 = arith.mulf %1576, %1369 : vector<1x128xf32>
    %1578 = arith.addf %1575, %1577 : vector<1x128xf32>
    %1579 = vector.broadcast %1427 : f32 to vector<1x128xf32>
    %1580 = arith.mulf %1579, %1381 : vector<1x128xf32>
    %1581 = arith.addf %1578, %1580 : vector<1x128xf32>
    %1582 = vector.broadcast %1428 : f32 to vector<1x128xf32>
    %1583 = arith.mulf %1582, %1393 : vector<1x128xf32>
    %1584 = arith.addf %1581, %1583 : vector<1x128xf32>
    %1585 = vector.broadcast %1429 : f32 to vector<1x128xf32>
    %1586 = arith.mulf %1585, %1321 : vector<1x128xf32>
    %1587 = vector.broadcast %1430 : f32 to vector<1x128xf32>
    %1588 = arith.mulf %1587, %1333 : vector<1x128xf32>
    %1589 = arith.addf %1586, %1588 : vector<1x128xf32>
    %1590 = vector.broadcast %1431 : f32 to vector<1x128xf32>
    %1591 = arith.mulf %1590, %1345 : vector<1x128xf32>
    %1592 = arith.addf %1589, %1591 : vector<1x128xf32>
    %1593 = vector.broadcast %1432 : f32 to vector<1x128xf32>
    %1594 = arith.mulf %1593, %1357 : vector<1x128xf32>
    %1595 = arith.addf %1592, %1594 : vector<1x128xf32>
    %1596 = vector.broadcast %1433 : f32 to vector<1x128xf32>
    %1597 = arith.mulf %1596, %1369 : vector<1x128xf32>
    %1598 = arith.addf %1595, %1597 : vector<1x128xf32>
    %1599 = vector.broadcast %1434 : f32 to vector<1x128xf32>
    %1600 = arith.mulf %1599, %1381 : vector<1x128xf32>
    %1601 = arith.addf %1598, %1600 : vector<1x128xf32>
    %1602 = vector.broadcast %1435 : f32 to vector<1x128xf32>
    %1603 = arith.mulf %1602, %1393 : vector<1x128xf32>
    %1604 = arith.addf %1601, %1603 : vector<1x128xf32>
    %1605 = vector.broadcast %1436 : f32 to vector<1x128xf32>
    %1606 = arith.mulf %1605, %1321 : vector<1x128xf32>
    %1607 = vector.broadcast %1437 : f32 to vector<1x128xf32>
    %1608 = arith.mulf %1607, %1333 : vector<1x128xf32>
    %1609 = arith.addf %1606, %1608 : vector<1x128xf32>
    %1610 = vector.broadcast %1438 : f32 to vector<1x128xf32>
    %1611 = arith.mulf %1610, %1345 : vector<1x128xf32>
    %1612 = arith.addf %1609, %1611 : vector<1x128xf32>
    %1613 = vector.broadcast %1439 : f32 to vector<1x128xf32>
    %1614 = arith.mulf %1613, %1357 : vector<1x128xf32>
    %1615 = arith.addf %1612, %1614 : vector<1x128xf32>
    %1616 = vector.broadcast %1440 : f32 to vector<1x128xf32>
    %1617 = arith.mulf %1616, %1369 : vector<1x128xf32>
    %1618 = arith.addf %1615, %1617 : vector<1x128xf32>
    %1619 = vector.broadcast %1441 : f32 to vector<1x128xf32>
    %1620 = arith.mulf %1619, %1381 : vector<1x128xf32>
    %1621 = arith.addf %1618, %1620 : vector<1x128xf32>
    %1622 = vector.broadcast %1442 : f32 to vector<1x128xf32>
    %1623 = arith.mulf %1622, %1393 : vector<1x128xf32>
    %1624 = arith.addf %1621, %1623 : vector<1x128xf32>
    %1625 = vector.broadcast %1450 : f32 to vector<1x128xf32>
    %1626 = arith.mulf %1625, %1 : vector<1x128xf32>
    %1627 = arith.addf %1504, %1626 : vector<1x128xf32>
    %1628 = vector.broadcast %1451 : f32 to vector<1x128xf32>
    %1629 = arith.mulf %1628, %3 : vector<1x128xf32>
    %1630 = arith.addf %1627, %1629 : vector<1x128xf32>
    %1631 = vector.broadcast %1452 : f32 to vector<1x128xf32>
    %1632 = arith.mulf %1631, %5 : vector<1x128xf32>
    %1633 = arith.addf %1630, %1632 : vector<1x128xf32>
    %1634 = vector.broadcast %1453 : f32 to vector<1x128xf32>
    %1635 = arith.mulf %1634, %7 : vector<1x128xf32>
    %1636 = arith.addf %1633, %1635 : vector<1x128xf32>
    %1637 = vector.broadcast %1454 : f32 to vector<1x128xf32>
    %1638 = arith.mulf %1637, %1 : vector<1x128xf32>
    %1639 = arith.addf %1524, %1638 : vector<1x128xf32>
    %1640 = vector.broadcast %1455 : f32 to vector<1x128xf32>
    %1641 = arith.mulf %1640, %3 : vector<1x128xf32>
    %1642 = arith.addf %1639, %1641 : vector<1x128xf32>
    %1643 = vector.broadcast %1456 : f32 to vector<1x128xf32>
    %1644 = arith.mulf %1643, %5 : vector<1x128xf32>
    %1645 = arith.addf %1642, %1644 : vector<1x128xf32>
    %1646 = vector.broadcast %1457 : f32 to vector<1x128xf32>
    %1647 = arith.mulf %1646, %7 : vector<1x128xf32>
    %1648 = arith.addf %1645, %1647 : vector<1x128xf32>
    %1649 = vector.broadcast %1458 : f32 to vector<1x128xf32>
    %1650 = arith.mulf %1649, %1 : vector<1x128xf32>
    %1651 = arith.addf %1544, %1650 : vector<1x128xf32>
    %1652 = vector.broadcast %1459 : f32 to vector<1x128xf32>
    %1653 = arith.mulf %1652, %3 : vector<1x128xf32>
    %1654 = arith.addf %1651, %1653 : vector<1x128xf32>
    %1655 = vector.broadcast %1460 : f32 to vector<1x128xf32>
    %1656 = arith.mulf %1655, %5 : vector<1x128xf32>
    %1657 = arith.addf %1654, %1656 : vector<1x128xf32>
    %1658 = vector.broadcast %1461 : f32 to vector<1x128xf32>
    %1659 = arith.mulf %1658, %7 : vector<1x128xf32>
    %1660 = arith.addf %1657, %1659 : vector<1x128xf32>
    %1661 = vector.broadcast %1462 : f32 to vector<1x128xf32>
    %1662 = arith.mulf %1661, %1 : vector<1x128xf32>
    %1663 = arith.addf %1564, %1662 : vector<1x128xf32>
    %1664 = vector.broadcast %1463 : f32 to vector<1x128xf32>
    %1665 = arith.mulf %1664, %3 : vector<1x128xf32>
    %1666 = arith.addf %1663, %1665 : vector<1x128xf32>
    %1667 = vector.broadcast %1464 : f32 to vector<1x128xf32>
    %1668 = arith.mulf %1667, %5 : vector<1x128xf32>
    %1669 = arith.addf %1666, %1668 : vector<1x128xf32>
    %1670 = vector.broadcast %1465 : f32 to vector<1x128xf32>
    %1671 = arith.mulf %1670, %7 : vector<1x128xf32>
    %1672 = arith.addf %1669, %1671 : vector<1x128xf32>
    %1673 = vector.broadcast %1466 : f32 to vector<1x128xf32>
    %1674 = arith.mulf %1673, %1 : vector<1x128xf32>
    %1675 = arith.addf %1584, %1674 : vector<1x128xf32>
    %1676 = vector.broadcast %1467 : f32 to vector<1x128xf32>
    %1677 = arith.mulf %1676, %3 : vector<1x128xf32>
    %1678 = arith.addf %1675, %1677 : vector<1x128xf32>
    %1679 = vector.broadcast %1468 : f32 to vector<1x128xf32>
    %1680 = arith.mulf %1679, %5 : vector<1x128xf32>
    %1681 = arith.addf %1678, %1680 : vector<1x128xf32>
    %1682 = vector.broadcast %1469 : f32 to vector<1x128xf32>
    %1683 = arith.mulf %1682, %7 : vector<1x128xf32>
    %1684 = arith.addf %1681, %1683 : vector<1x128xf32>
    %1685 = vector.broadcast %1470 : f32 to vector<1x128xf32>
    %1686 = arith.mulf %1685, %1 : vector<1x128xf32>
    %1687 = arith.addf %1604, %1686 : vector<1x128xf32>
    %1688 = vector.broadcast %1471 : f32 to vector<1x128xf32>
    %1689 = arith.mulf %1688, %3 : vector<1x128xf32>
    %1690 = arith.addf %1687, %1689 : vector<1x128xf32>
    %1691 = vector.broadcast %1472 : f32 to vector<1x128xf32>
    %1692 = arith.mulf %1691, %5 : vector<1x128xf32>
    %1693 = arith.addf %1690, %1692 : vector<1x128xf32>
    %1694 = vector.broadcast %1473 : f32 to vector<1x128xf32>
    %1695 = arith.mulf %1694, %7 : vector<1x128xf32>
    %1696 = arith.addf %1693, %1695 : vector<1x128xf32>
    %1697 = vector.broadcast %1474 : f32 to vector<1x128xf32>
    %1698 = arith.mulf %1697, %1 : vector<1x128xf32>
    %1699 = arith.addf %1624, %1698 : vector<1x128xf32>
    %1700 = vector.broadcast %1475 : f32 to vector<1x128xf32>
    %1701 = arith.mulf %1700, %3 : vector<1x128xf32>
    %1702 = arith.addf %1699, %1701 : vector<1x128xf32>
    %1703 = vector.broadcast %1476 : f32 to vector<1x128xf32>
    %1704 = arith.mulf %1703, %5 : vector<1x128xf32>
    %1705 = arith.addf %1702, %1704 : vector<1x128xf32>
    %1706 = vector.broadcast %1477 : f32 to vector<1x128xf32>
    %1707 = arith.mulf %1706, %7 : vector<1x128xf32>
    %1708 = arith.addf %1705, %1707 : vector<1x128xf32>
    %1709 = arith.addf %1443, %1478 : f32
    %1710 = vector.broadcast %1709 : f32 to vector<1x128xf32>
    %1711 = arith.addf %1636, %1710 : vector<1x128xf32>
    %cst_95 = arith.constant 2.000000e+01 : f32
    %1712 = vector.broadcast %cst_95 : f32 to vector<1x128xf32>
    %1713 = arith.cmpf ogt, %1711, %1712 : vector<1x128xf32>
    %cst_96 = arith.constant 2.000000e+01 : f32
    %1714 = vector.broadcast %cst_96 : f32 to vector<1x128xf32>
    %1715 = arith.minimumf %1711, %1714 : vector<1x128xf32>
    %1716 = math.exp %1715 : vector<1x128xf32>
    %1717 = math.log1p %1716 : vector<1x128xf32>
    %1718 = arith.select %1713, %1711, %1717 : vector<1x128xi1>, vector<1x128xf32>
    %cst_97 = arith.constant 0.000000e+00 : f32
    %1719 = vector.broadcast %cst_97 : f32 to vector<1x128xf32>
    %1720 = arith.subf %1719, %1718 : vector<1x128xf32>
    %1721 = arith.addf %1444, %1479 : f32
    %1722 = vector.broadcast %1721 : f32 to vector<1x128xf32>
    %1723 = arith.addf %1648, %1722 : vector<1x128xf32>
    %cst_98 = arith.constant 2.000000e+01 : f32
    %1724 = vector.broadcast %cst_98 : f32 to vector<1x128xf32>
    %1725 = arith.cmpf ogt, %1723, %1724 : vector<1x128xf32>
    %cst_99 = arith.constant 2.000000e+01 : f32
    %1726 = vector.broadcast %cst_99 : f32 to vector<1x128xf32>
    %1727 = arith.minimumf %1723, %1726 : vector<1x128xf32>
    %1728 = math.exp %1727 : vector<1x128xf32>
    %1729 = math.log1p %1728 : vector<1x128xf32>
    %1730 = arith.select %1725, %1723, %1729 : vector<1x128xi1>, vector<1x128xf32>
    %cst_100 = arith.constant 0.000000e+00 : f32
    %1731 = vector.broadcast %cst_100 : f32 to vector<1x128xf32>
    %1732 = arith.subf %1731, %1730 : vector<1x128xf32>
    %1733 = arith.addf %1445, %1480 : f32
    %1734 = vector.broadcast %1733 : f32 to vector<1x128xf32>
    %1735 = arith.addf %1660, %1734 : vector<1x128xf32>
    %cst_101 = arith.constant 2.000000e+01 : f32
    %1736 = vector.broadcast %cst_101 : f32 to vector<1x128xf32>
    %1737 = arith.cmpf ogt, %1735, %1736 : vector<1x128xf32>
    %cst_102 = arith.constant 2.000000e+01 : f32
    %1738 = vector.broadcast %cst_102 : f32 to vector<1x128xf32>
    %1739 = arith.minimumf %1735, %1738 : vector<1x128xf32>
    %1740 = math.exp %1739 : vector<1x128xf32>
    %1741 = math.log1p %1740 : vector<1x128xf32>
    %1742 = arith.select %1737, %1735, %1741 : vector<1x128xi1>, vector<1x128xf32>
    %cst_103 = arith.constant 0.000000e+00 : f32
    %1743 = vector.broadcast %cst_103 : f32 to vector<1x128xf32>
    %1744 = arith.subf %1743, %1742 : vector<1x128xf32>
    %1745 = arith.addf %1446, %1481 : f32
    %1746 = vector.broadcast %1745 : f32 to vector<1x128xf32>
    %1747 = arith.addf %1672, %1746 : vector<1x128xf32>
    %cst_104 = arith.constant 2.000000e+01 : f32
    %1748 = vector.broadcast %cst_104 : f32 to vector<1x128xf32>
    %1749 = arith.cmpf ogt, %1747, %1748 : vector<1x128xf32>
    %cst_105 = arith.constant 2.000000e+01 : f32
    %1750 = vector.broadcast %cst_105 : f32 to vector<1x128xf32>
    %1751 = arith.minimumf %1747, %1750 : vector<1x128xf32>
    %1752 = math.exp %1751 : vector<1x128xf32>
    %1753 = math.log1p %1752 : vector<1x128xf32>
    %1754 = arith.select %1749, %1747, %1753 : vector<1x128xi1>, vector<1x128xf32>
    %cst_106 = arith.constant 0.000000e+00 : f32
    %1755 = vector.broadcast %cst_106 : f32 to vector<1x128xf32>
    %1756 = arith.subf %1755, %1754 : vector<1x128xf32>
    %1757 = arith.addf %1447, %1482 : f32
    %1758 = vector.broadcast %1757 : f32 to vector<1x128xf32>
    %1759 = arith.addf %1684, %1758 : vector<1x128xf32>
    %cst_107 = arith.constant 2.000000e+01 : f32
    %1760 = vector.broadcast %cst_107 : f32 to vector<1x128xf32>
    %1761 = arith.cmpf ogt, %1759, %1760 : vector<1x128xf32>
    %cst_108 = arith.constant 2.000000e+01 : f32
    %1762 = vector.broadcast %cst_108 : f32 to vector<1x128xf32>
    %1763 = arith.minimumf %1759, %1762 : vector<1x128xf32>
    %1764 = math.exp %1763 : vector<1x128xf32>
    %1765 = math.log1p %1764 : vector<1x128xf32>
    %1766 = arith.select %1761, %1759, %1765 : vector<1x128xi1>, vector<1x128xf32>
    %cst_109 = arith.constant 0.000000e+00 : f32
    %1767 = vector.broadcast %cst_109 : f32 to vector<1x128xf32>
    %1768 = arith.subf %1767, %1766 : vector<1x128xf32>
    %1769 = arith.addf %1448, %1483 : f32
    %1770 = vector.broadcast %1769 : f32 to vector<1x128xf32>
    %1771 = arith.addf %1696, %1770 : vector<1x128xf32>
    %cst_110 = arith.constant 2.000000e+01 : f32
    %1772 = vector.broadcast %cst_110 : f32 to vector<1x128xf32>
    %1773 = arith.cmpf ogt, %1771, %1772 : vector<1x128xf32>
    %cst_111 = arith.constant 2.000000e+01 : f32
    %1774 = vector.broadcast %cst_111 : f32 to vector<1x128xf32>
    %1775 = arith.minimumf %1771, %1774 : vector<1x128xf32>
    %1776 = math.exp %1775 : vector<1x128xf32>
    %1777 = math.log1p %1776 : vector<1x128xf32>
    %1778 = arith.select %1773, %1771, %1777 : vector<1x128xi1>, vector<1x128xf32>
    %cst_112 = arith.constant 0.000000e+00 : f32
    %1779 = vector.broadcast %cst_112 : f32 to vector<1x128xf32>
    %1780 = arith.subf %1779, %1778 : vector<1x128xf32>
    %1781 = arith.addf %1449, %1484 : f32
    %1782 = vector.broadcast %1781 : f32 to vector<1x128xf32>
    %1783 = arith.addf %1708, %1782 : vector<1x128xf32>
    %cst_113 = arith.constant 2.000000e+01 : f32
    %1784 = vector.broadcast %cst_113 : f32 to vector<1x128xf32>
    %1785 = arith.cmpf ogt, %1783, %1784 : vector<1x128xf32>
    %cst_114 = arith.constant 2.000000e+01 : f32
    %1786 = vector.broadcast %cst_114 : f32 to vector<1x128xf32>
    %1787 = arith.minimumf %1783, %1786 : vector<1x128xf32>
    %1788 = math.exp %1787 : vector<1x128xf32>
    %1789 = math.log1p %1788 : vector<1x128xf32>
    %1790 = arith.select %1785, %1783, %1789 : vector<1x128xi1>, vector<1x128xf32>
    %cst_115 = arith.constant 0.000000e+00 : f32
    %1791 = vector.broadcast %cst_115 : f32 to vector<1x128xf32>
    %1792 = arith.subf %1791, %1790 : vector<1x128xf32>
    %c399 = arith.constant 399 : index
    %1793 = memref.load %arg1[%c399] : memref<412xf32, #tpu.memory_space<smem>>
    %c400 = arith.constant 400 : index
    %1794 = memref.load %arg1[%c400] : memref<412xf32, #tpu.memory_space<smem>>
    %c401 = arith.constant 401 : index
    %1795 = memref.load %arg1[%c401] : memref<412xf32, #tpu.memory_space<smem>>
    %c402 = arith.constant 402 : index
    %1796 = memref.load %arg1[%c402] : memref<412xf32, #tpu.memory_space<smem>>
    %c403 = arith.constant 403 : index
    %1797 = memref.load %arg1[%c403] : memref<412xf32, #tpu.memory_space<smem>>
    %c404 = arith.constant 404 : index
    %1798 = memref.load %arg1[%c404] : memref<412xf32, #tpu.memory_space<smem>>
    %c405 = arith.constant 405 : index
    %1799 = memref.load %arg1[%c405] : memref<412xf32, #tpu.memory_space<smem>>
    %c406 = arith.constant 406 : index
    %1800 = memref.load %arg1[%c406] : memref<412xf32, #tpu.memory_space<smem>>
    %c407 = arith.constant 407 : index
    %1801 = memref.load %arg1[%c407] : memref<412xf32, #tpu.memory_space<smem>>
    %c408 = arith.constant 408 : index
    %1802 = memref.load %arg1[%c408] : memref<412xf32, #tpu.memory_space<smem>>
    %c409 = arith.constant 409 : index
    %1803 = memref.load %arg1[%c409] : memref<412xf32, #tpu.memory_space<smem>>
    %c410 = arith.constant 410 : index
    %1804 = memref.load %arg1[%c410] : memref<412xf32, #tpu.memory_space<smem>>
    %c411 = arith.constant 411 : index
    %1805 = memref.load %arg1[%c411] : memref<412xf32, #tpu.memory_space<smem>>
    %1806 = vector.broadcast %1793 : f32 to vector<1x128xf32>
    %1807 = arith.mulf %1806, %1720 : vector<1x128xf32>
    %1808 = vector.broadcast %1794 : f32 to vector<1x128xf32>
    %1809 = arith.mulf %1808, %1732 : vector<1x128xf32>
    %1810 = arith.addf %1807, %1809 : vector<1x128xf32>
    %1811 = vector.broadcast %1795 : f32 to vector<1x128xf32>
    %1812 = arith.mulf %1811, %1744 : vector<1x128xf32>
    %1813 = arith.addf %1810, %1812 : vector<1x128xf32>
    %1814 = vector.broadcast %1796 : f32 to vector<1x128xf32>
    %1815 = arith.mulf %1814, %1756 : vector<1x128xf32>
    %1816 = arith.addf %1813, %1815 : vector<1x128xf32>
    %1817 = vector.broadcast %1797 : f32 to vector<1x128xf32>
    %1818 = arith.mulf %1817, %1768 : vector<1x128xf32>
    %1819 = arith.addf %1816, %1818 : vector<1x128xf32>
    %1820 = vector.broadcast %1798 : f32 to vector<1x128xf32>
    %1821 = arith.mulf %1820, %1780 : vector<1x128xf32>
    %1822 = arith.addf %1819, %1821 : vector<1x128xf32>
    %1823 = vector.broadcast %1799 : f32 to vector<1x128xf32>
    %1824 = arith.mulf %1823, %1792 : vector<1x128xf32>
    %1825 = arith.addf %1822, %1824 : vector<1x128xf32>
    %1826 = vector.broadcast %1801 : f32 to vector<1x128xf32>
    %1827 = arith.mulf %1826, %1 : vector<1x128xf32>
    %1828 = arith.addf %1825, %1827 : vector<1x128xf32>
    %1829 = vector.broadcast %1802 : f32 to vector<1x128xf32>
    %1830 = arith.mulf %1829, %3 : vector<1x128xf32>
    %1831 = arith.addf %1828, %1830 : vector<1x128xf32>
    %1832 = vector.broadcast %1803 : f32 to vector<1x128xf32>
    %1833 = arith.mulf %1832, %5 : vector<1x128xf32>
    %1834 = arith.addf %1831, %1833 : vector<1x128xf32>
    %1835 = vector.broadcast %1804 : f32 to vector<1x128xf32>
    %1836 = arith.mulf %1835, %7 : vector<1x128xf32>
    %1837 = arith.addf %1834, %1836 : vector<1x128xf32>
    %1838 = arith.addf %1800, %1805 : f32
    %1839 = vector.broadcast %1838 : f32 to vector<1x128xf32>
    %1840 = arith.addf %1837, %1839 : vector<1x128xf32>
    %cst_116 = arith.constant 2.000000e+01 : f32
    %1841 = vector.broadcast %cst_116 : f32 to vector<1x128xf32>
    %1842 = arith.cmpf ogt, %1840, %1841 : vector<1x128xf32>
    %cst_117 = arith.constant 2.000000e+01 : f32
    %1843 = vector.broadcast %cst_117 : f32 to vector<1x128xf32>
    %1844 = arith.minimumf %1840, %1843 : vector<1x128xf32>
    %1845 = math.exp %1844 : vector<1x128xf32>
    %1846 = math.log1p %1845 : vector<1x128xf32>
    %1847 = arith.select %1842, %1840, %1846 : vector<1x128xi1>, vector<1x128xf32>
    %cst_118 = arith.constant 0.000000e+00 : f32
    %1848 = vector.broadcast %cst_118 : f32 to vector<1x128xf32>
    %1849 = arith.subf %1848, %1847 : vector<1x128xf32>
    %c0_119 = arith.constant 0 : index
    %c0_120 = arith.constant 0 : index
    %1850 = vector.load %arg3[%c0_119, %c0_120] : memref<1x128xf32, #tpu.memory_space<vmem>>, vector<1x128xf32>
    tpu.vector_store %arg3[%c0_119, %c0_120], %1849 {strides = array<i32>} : memref<1x128xf32, #tpu.memory_space<vmem>>, vector<1x128xf32>,
    return
  }
  func.func @transform_0(%arg0: i32) -> i32 {
    %c0_i32 = arith.constant 0 : i32
    %c0_i32_0 = arith.constant 0 : i32
    return %c0_i32 : i32
  }
  func.func @transform_1(%arg0: i32) -> (i32, i32, i32) {
    %c0_i32 = arith.constant 0 : i32
    %c0_i32_0 = arith.constant 0 : i32
    %c0_i32_1 = arith.constant 0 : i32
    return %c0_i32, %arg0, %c0_i32_0 : i32, i32, i32
  }
  func.func @transform_2(%arg0: i32) -> (i32, i32) {
    %c0_i32 = arith.constant 0 : i32
    %c0_i32_0 = arith.constant 0 : i32
    return %arg0, %c0_i32 : i32, i32
  }
}

</mosaic_0001>

<llo_original>
// kernel: tpu_custom_call.1
$region0: #{tpu_custom_call.1}
  #allocation0 [shape = 'u32[]', space=smem, size = 0x4, offset = 0x4, fixed_abs, tag = 'smem constant byte address 0x4 - core index']
  #allocation1 [shape = 'u32[144,128]{1,0:T(1,128)}', space=vmem, size = 0x12000, scoped, tag = 'internal scratch']
  %s0 = inlined_call_operand.hbm [shape: f32[412], index: 0, kind: input, shape index: {}]
  %s1 = inlined_call_operand.hbm [shape: f32[4,1,128], index: 1, kind: input, shape index: {}]
  %s2 = inlined_call_operand.hbm [shape: f32[1,128], index: 2, kind: output, shape index: {}]
  %s3 = sld [smem:[#allocation0]]
  $region26: #{tpu_custom_call.1} parent=0
    _
  %s5 = ssub.s32 1, %s3
  %s6 = scalar_select 0, %s5, %s3
  $region1: #{tpu_custom_call.1} parent=0
    #allocation2 [shape = 'u8[2048]{0}', space=smem, size = 0x800, scoped, tag = 'input window, operand 0, single buffered']
    #allocation3 [shape = 's32[1]{0}', space=sflag, size = 0x4, scoped, tag = 'scoped memory for tpu_custom_call.1']
    #allocation4 [shape = 's32[1]{0}', space=sflag, size = 0x4, scoped, tag = 'scoped memory for tpu_custom_call.1']
    #allocation5 [shape = 's32[1]{0}', space=sflag, size = 0x4, scoped, tag = 'scoped memory for tpu_custom_call.1']
    #allocation6 [shape = 'u8[2048]{0}', space=vmem, size = 0x800, scoped, tag = 'input window, operand 1, single buffered']
    #allocation7 [shape = 'u8[512]{0}', space=vmem, size = 0x400, scoped, tag = 'output window, operand 0, single buffered']
    %7 = vsyncpa [#allocation5], 0
    %8 = vsyncpa [#allocation3], 0
    %9 = vsyncpa [#allocation4], 0
    // Predicated region
    $region2: #{tpu_custom_call.1} parent=1 // pred_check
      _
    $region3: #{tpu_custom_call.1} parent=1 // pred_check_branch
      %11 = sbr.rel (0) target = $region5
    $region4: #{tpu_custom_call.1} parent=1 // pred_region
      %s13 = ssub.s32 64, 64
      %14 = vsyncadd [#allocation5], %s13
      %17 = dma.hbm_to_smem %s0, 64, [#allocation2], [#allocation5]
    $region5: #{tpu_custom_call.1} parent=1 // pred_fallthru
      _
    // Predicated region
    $region6: #{tpu_custom_call.1} parent=1 // pred_check
      _
    $region7: #{tpu_custom_call.1} parent=1 // pred_check_branch
      %19 = sbr.rel (0) target = $region9
    $region8: #{tpu_custom_call.1} parent=1 // pred_region
      %s21 = ssub.s32 64, 64
      %22 = vsyncadd [#allocation3], %s21
      %s23 = sshll.u32 [#allocation6], 4
      %s24 = int_to_ptr.vmem [resolvable:$true] %s23
      %29 = dma.hbm_to_vmem [thread:$0]  %s1, 64, %s24, [#allocation3], 16, 16, 1
    $region9: #{tpu_custom_call.1} parent=1 // pred_fallthru
      _
    // Predicated region
    $region10: #{tpu_custom_call.1} parent=1 // pred_check
      _
    $region11: #{tpu_custom_call.1} parent=1 // pred_check_branch
      %31 = sbr.rel (0) target = $region13
    $region12: #{tpu_custom_call.1} parent=1 // pred_region
      %32 = dma.done [#allocation5], 64
    $region13: #{tpu_custom_call.1} parent=1 // pred_fallthru
      _
    // Predicated region
    $region14: #{tpu_custom_call.1} parent=1 // pred_check
      _
    $region15: #{tpu_custom_call.1} parent=1 // pred_check_branch
      %34 = sbr.rel (0) target = $region17
    $region16: #{tpu_custom_call.1} parent=1 // pred_region
      %35 = dma.done [#allocation3], 64
    $region17: #{tpu_custom_call.1} parent=1 // pred_fallthru
      _
    %36 = sfence
    %v37 = vld [vmem:[#allocation6] sm:$0x1]
    %s38 = scalar_lea.vmem [#allocation6], 1
    %v39 = vld [vmem:[%s38] sm:$0x1]
    %s40 = scalar_lea.vmem [#allocation6], 2
    %v41 = vld [vmem:[%s40] sm:$0x1]
    %s42 = scalar_lea.vmem [#allocation6], 3
    %v43 = vld [vmem:[%s42] sm:$0x1]
    %s44 = sld [smem:[#allocation2]]
    %s45 = sld [smem:[#allocation2 + $0x1]]
    %s46 = sld [smem:[#allocation2 + $0x2]]
    %s47 = sld [smem:[#allocation2 + $0x3]]
    %s48 = sld [smem:[#allocation2 + $0x4]]
    %s49 = sld [smem:[#allocation2 + $0x5]]
    %s50 = sld [smem:[#allocation2 + $0x6]]
    %s51 = sld [smem:[#allocation2 + $0x7]]
    %s52 = sld [smem:[#allocation2 + $0x8]]
    %s53 = sld [smem:[#allocation2 + $0x9]]
    %s54 = sld [smem:[#allocation2 + $0xa]]
    %s55 = sld [smem:[#allocation2 + $0xb]]
    %s56 = sld [smem:[#allocation2 + $0xc]]
    %s57 = sld [smem:[#allocation2 + $0xd]]
    %s58 = sld [smem:[#allocation2 + $0xe]]
    %s59 = sld [smem:[#allocation2 + $0xf]]
    %s60 = sld [smem:[#allocation2 + $0x10]]
    %s61 = sld [smem:[#allocation2 + $0x11]]
    %s62 = sld [smem:[#allocation2 + $0x12]]
    %s63 = sld [smem:[#allocation2 + $0x13]]
    %s64 = sld [smem:[#allocation2 + $0x14]]
    %s65 = sld [smem:[#allocation2 + $0x15]]
    %s66 = sld [smem:[#allocation2 + $0x16]]
    %s67 = sld [smem:[#allocation2 + $0x17]]
    %s68 = sld [smem:[#allocation2 + $0x18]]
    %s69 = sld [smem:[#allocation2 + $0x19]]
    %s70 = sld [smem:[#allocation2 + $0x1a]]
    %s71 = sld [smem:[#allocation2 + $0x1b]]
    %s72 = sld [smem:[#allocation2 + $0x1c]]
    %s73 = sld [smem:[#allocation2 + $0x1d]]
    %s74 = sld [smem:[#allocation2 + $0x1e]]
    %s75 = sld [smem:[#allocation2 + $0x1f]]
    %s76 = sld [smem:[#allocation2 + $0x20]]
    %s77 = sld [smem:[#allocation2 + $0x21]]
    %s78 = sld [smem:[#allocation2 + $0x22]]
    %v79 = vstv %s44
    %v80 = vmul.f32 %v79, %v37
    %v81 = vstv %s45
    %v82 = vmul.f32 %v81, %v39
    %v83 = vadd.f32 %v80, %v82
    %v84 = vstv %s46
    %v85 = vmul.f32 %v84, %v41
    %v86 = vadd.f32 %v83, %v85
    %v87 = vstv %s47
    %v88 = vmul.f32 %v87, %v43
    %v89 = vadd.f32 %v86, %v88
    %v90 = vstv %s48
    %v91 = vmul.f32 %v90, %v37
    %v92 = vstv %s49
    %v93 = vmul.f32 %v92, %v39
    %v94 = vadd.f32 %v91, %v93
    %v95 = vstv %s50
    %v96 = vmul.f32 %v95, %v41
    %v97 = vadd.f32 %v94, %v96
    %v98 = vstv %s51
    %v99 = vmul.f32 %v98, %v43
    %v100 = vadd.f32 %v97, %v99
    %v101 = vstv %s52
    %v102 = vmul.f32 %v101, %v37
    %v103 = vstv %s53
    %v104 = vmul.f32 %v103, %v39
    %v105 = vadd.f32 %v102, %v104
    %v106 = vstv %s54
    %v107 = vmul.f32 %v106, %v41
    %v108 = vadd.f32 %v105, %v107
    %v109 = vstv %s55
    %v110 = vmul.f32 %v109, %v43
    %v111 = vadd.f32 %v108, %v110
    %v112 = vstv %s56
    %v113 = vmul.f32 %v112, %v37
    %v114 = vstv %s57
    %v115 = vmul.f32 %v114, %v39
    %v116 = vadd.f32 %v113, %v115
    %v117 = vstv %s58
    %v118 = vmul.f32 %v117, %v41
    %v119 = vadd.f32 %v116, %v118
    %v120 = vstv %s59
    %v121 = vmul.f32 %v120, %v43
    %v122 = vadd.f32 %v119, %v121
    %v123 = vstv %s60
    %v124 = vmul.f32 %v123, %v37
    %v125 = vstv %s61
    %v126 = vmul.f32 %v125, %v39
    %v127 = vadd.f32 %v124, %v126
    %v128 = vstv %s62
    %v129 = vmul.f32 %v128, %v41
    %v130 = vadd.f32 %v127, %v129
    %v131 = vstv %s63
    %v132 = vmul.f32 %v131, %v43
    %v133 = vadd.f32 %v130, %v132
    %v134 = vstv %s64
    %v135 = vmul.f32 %v134, %v37
    %v136 = vstv %s65
    %v137 = vmul.f32 %v136, %v39
    %v138 = vadd.f32 %v135, %v137
    %v139 = vstv %s66
    %v140 = vmul.f32 %v139, %v41
    %v141 = vadd.f32 %v138, %v140
    %v142 = vstv %s67
    %v143 = vmul.f32 %v142, %v43
    %v144 = vadd.f32 %v141, %v143
    %v145 = vstv %s68
    %v146 = vmul.f32 %v145, %v37
    %v147 = vstv %s69
    %v148 = vmul.f32 %v147, %v39
    %v149 = vadd.f32 %v146, %v148
    %v150 = vstv %s70
    %v151 = vmul.f32 %v150, %v41
    %v152 = vadd.f32 %v149, %v151
    %v153 = vstv %s71
    %v154 = vmul.f32 %v153, %v43
    %v155 = vadd.f32 %v152, %v154
    %v156 = vstv %s72
    %v157 = vadd.f32 %v89, %v156
    %vm158 = vcmp.gt.f32.partialorder %v157, 20.0
    %v159 = vmin.f32 %v157, 20.0
    %v160 = vmul.f32 %v159, 1.442695
    %v161 = vpow.pop %v160
    %v162 = vadd.f32 %v161, 1.0
    %v163 = vlog2.pop %v162
    %v164 = vmul.f32 %v163, 0.6931472
    %v165 = vmul.f32 -0.5, %v161
    %v166 = vadd.f32 %v165, 1.0
    %v167 = vmul.f32 %v166, %v161
    %v168 = vand.u32 2147483647, %v161
    %vm169 = vcmp.lt.f32.partialorder %v168, 0.0004427343
    %v170 = vsel %vm169, %v167, %v164
    %v171 = vsel %vm158, %v157, %v170
    %v172 = vsub.f32 0.0, %v171
    %v173 = vstv %s73
    %v174 = vadd.f32 %v100, %v173
    %vm175 = vcmp.gt.f32.partialorder %v174, 20.0
    %v176 = vmin.f32 %v174, 20.0
    %v177 = vmul.f32 %v176, 1.442695
    %v178 = vpow.pop %v177
    %v179 = vadd.f32 %v178, 1.0
    %v180 = vlog2.pop %v179
    %v181 = vmul.f32 %v180, 0.6931472
    %v182 = vmul.f32 -0.5, %v178
    %v183 = vadd.f32 %v182, 1.0
    %v184 = vmul.f32 %v183, %v178
    %v185 = vand.u32 2147483647, %v178
    %vm186 = vcmp.lt.f32.partialorder %v185, 0.0004427343
    %v187 = vsel %vm186, %v184, %v181
    %v188 = vsel %vm175, %v174, %v187
    %v189 = vsub.f32 0.0, %v188
    %v190 = vstv %s74
    %v191 = vadd.f32 %v111, %v190
    %vm192 = vcmp.gt.f32.partialorder %v191, 20.0
    %v193 = vmin.f32 %v191, 20.0
    %v194 = vmul.f32 %v193, 1.442695
    %v195 = vpow.pop %v194
    %v196 = vadd.f32 %v195, 1.0
    %v197 = vlog2.pop %v196
    %v198 = vmul.f32 %v197, 0.6931472
    %v199 = vmul.f32 -0.5, %v195
    %v200 = vadd.f32 %v199, 1.0
    %v201 = vmul.f32 %v200, %v195
    %v202 = vand.u32 2147483647, %v195
    %vm203 = vcmp.lt.f32.partialorder %v202, 0.0004427343
    %v204 = vsel %vm203, %v201, %v198
    %v205 = vsel %vm192, %v191, %v204
    %v206 = vsub.f32 0.0, %v205
    %v207 = vstv %s75
    %v208 = vadd.f32 %v122, %v207
    %vm209 = vcmp.gt.f32.partialorder %v208, 20.0
    %v210 = vmin.f32 %v208, 20.0
    %v211 = vmul.f32 %v210, 1.442695
    %v212 = vpow.pop %v211
    %v213 = vadd.f32 %v212, 1.0
    %v214 = vlog2.pop %v213
    %v215 = vmul.f32 %v214, 0.6931472
    %v216 = vmul.f32 -0.5, %v212
    %v217 = vadd.f32 %v216, 1.0
    %v218 = vmul.f32 %v217, %v212
    %v219 = vand.u32 2147483647, %v212
    %vm220 = vcmp.lt.f32.partialorder %v219, 0.0004427343
    %v221 = vsel %vm220, %v218, %v215
    %v222 = vsel %vm209, %v208, %v221
    %v223 = vsub.f32 0.0, %v222
    %v224 = vstv %s76
    %v225 = vadd.f32 %v133, %v224
    %vm226 = vcmp.gt.f32.partialorder %v225, 20.0
    %v227 = vmin.f32 %v225, 20.0
    %v228 = vmul.f32 %v227, 1.442695
    %v229 = vpow.pop %v228
    %v230 = vadd.f32 %v229, 1.0
    %v231 = vlog2.pop %v230
    %v232 = vmul.f32 %v231, 0.6931472
    %v233 = vmul.f32 -0.5, %v229
    %v234 = vadd.f32 %v233, 1.0
    %v235 = vmul.f32 %v234, %v229
    %v236 = vand.u32 2147483647, %v229
    %vm237 = vcmp.lt.f32.partialorder %v236, 0.0004427343
    %v238 = vsel %vm237, %v235, %v232
    %v239 = vsel %vm226, %v225, %v238
    %v240 = vsub.f32 0.0, %v239
    %v241 = vstv %s77
    %v242 = vadd.f32 %v144, %v241
    %vm243 = vcmp.gt.f32.partialorder %v242, 20.0
    %v244 = vmin.f32 %v242, 20.0
    %v245 = vmul.f32 %v244, 1.442695
    %v246 = vpow.pop %v245
    %v247 = vadd.f32 %v246, 1.0
    %v248 = vlog2.pop %v247
    %v249 = vmul.f32 %v248, 0.6931472
    %v250 = vmul.f32 -0.5, %v246
    %v251 = vadd.f32 %v250, 1.0
    %v252 = vmul.f32 %v251, %v246
    %v253 = vand.u32 2147483647, %v246
    %vm254 = vcmp.lt.f32.partialorder %v253, 0.0004427343
    %v255 = vsel %vm254, %v252, %v249
    %v256 = vsel %vm243, %v242, %v255
    %v257 = vsub.f32 0.0, %v256
    %v258 = vstv %s78
    %v259 = vadd.f32 %v155, %v258
    %vm260 = vcmp.gt.f32.partialorder %v259, 20.0
    %v261 = vmin.f32 %v259, 20.0
    %v262 = vmul.f32 %v261, 1.442695
    %v263 = vpow.pop %v262
    %v264 = vadd.f32 %v263, 1.0
    %v265 = vlog2.pop %v264
    %v266 = vmul.f32 %v265, 0.6931472
    %v267 = vmul.f32 -0.5, %v263
    %v268 = vadd.f32 %v267, 1.0
    %v269 = vmul.f32 %v268, %v263
    %v270 = vand.u32 2147483647, %v263
    %vm271 = vcmp.lt.f32.partialorder %v270, 0.0004427343
    %v272 = vsel %vm271, %v269, %v266
    %v273 = vsel %vm260, %v259, %v272
    %v274 = vsub.f32 0.0, %v273
    %s275 = sld [smem:[#allocation2 + $0x23]]
    %s276 = sld [smem:[#allocation2 + $0x24]]
    %s277 = sld [smem:[#allocation2 + $0x25]]
    %s278 = sld [smem:[#allocation2 + $0x26]]
    %s279 = sld [smem:[#allocation2 + $0x27]]
    %s280 = sld [smem:[#allocation2 + $0x28]]
    %s281 = sld [smem:[#allocation2 + $0x29]]
    %s282 = sld [smem:[#allocation2 + $0x2a]]
    %s283 = sld [smem:[#allocation2 + $0x2b]]
    %s284 = sld [smem:[#allocation2 + $0x2c]]
    %s285 = sld [smem:[#allocation2 + $0x2d]]
    %s286 = sld [smem:[#allocation2 + $0x2e]]
    %s287 = sld [smem:[#allocation2 + $0x2f]]
    %s288 = sld [smem:[#allocation2 + $0x30]]
    %s289 = sld [smem:[#allocation2 + $0x31]]
    %s290 = sld [smem:[#allocation2 + $0x32]]
    %s291 = sld [smem:[#allocation2 + $0x33]]
    %s292 = sld [smem:[#allocation2 + $0x34]]
    %s293 = sld [smem:[#allocation2 + $0x35]]
    %s294 = sld [smem:[#allocation2 + $0x36]]
    %s295 = sld [smem:[#allocation2 + $0x37]]
    %s296 = sld [smem:[#allocation2 + $0x38]]
    %s297 = sld [smem:[#allocation2 + $0x39]]
    %s298 = sld [smem:[#allocation2 + $0x3a]]
    %s299 = sld [smem:[#allocation2 + $0x3b]]
    %s300 = sld [smem:[#allocation2 + $0x3c]]
    %s301 = sld [smem:[#allocation2 + $0x3d]]
    %s302 = sld [smem:[#allocation2 + $0x3e]]
    %s303 = sld [smem:[#allocation2 + $0x3f]]
    %s304 = sld [smem:[#allocation2 + $0x40]]
    %s305 = sld [smem:[#allocation2 + $0x41]]
    %s306 = sld [smem:[#allocation2 + $0x42]]
    %s307 = sld [smem:[#allocation2 + $0x43]]
    %s308 = sld [smem:[#allocation2 + $0x44]]
    %s309 = sld [smem:[#allocation2 + $0x45]]
    %s310 = sld [smem:[#allocation2 + $0x46]]
    %s311 = sld [smem:[#allocation2 + $0x47]]
    %s312 = sld [smem:[#allocation2 + $0x48]]
    %s313 = sld [smem:[#allocation2 + $0x49]]
    %s314 = sld [smem:[#allocation2 + $0x4a]]
    %s315 = sld [smem:[#allocation2 + $0x4b]]
    %s316 = sld [smem:[#allocation2 + $0x4c]]
    %s317 = sld [smem:[#allocation2 + $0x4d]]
    %s318 = sld [smem:[#allocation2 + $0x4e]]
    %s319 = sld [smem:[#allocation2 + $0x4f]]
    %s320 = sld [smem:[#allocation2 + $0x50]]
    %s321 = sld [smem:[#allocation2 + $0x51]]
    %s322 = sld [smem:[#allocation2 + $0x52]]
    %s323 = sld [smem:[#allocation2 + $0x53]]
    %s324 = sld [smem:[#allocation2 + $0x54]]
    %s325 = sld [smem:[#allocation2 + $0x55]]
    %s326 = sld [smem:[#allocation2 + $0x56]]
    %s327 = sld [smem:[#allocation2 + $0x57]]
    %s328 = sld [smem:[#allocation2 + $0x58]]
    %s329 = sld [smem:[#allocation2 + $0x59]]
    %s330 = sld [smem:[#allocation2 + $0x5a]]
    %s331 = sld [smem:[#allocation2 + $0x5b]]
    %s332 = sld [smem:[#allocation2 + $0x5c]]
    %s333 = sld [smem:[#allocation2 + $0x5d]]
    %s334 = sld [smem:[#allocation2 + $0x5e]]
    %s335 = sld [smem:[#allocation2 + $0x5f]]
    %s336 = sld [smem:[#allocation2 + $0x60]]
    %s337 = sld [smem:[#allocation2 + $0x61]]
    %s338 = sld [smem:[#allocation2 + $0x62]]
    %s339 = sld [smem:[#allocation2 + $0x63]]
    %s340 = sld [smem:[#allocation2 + $0x64]]
    %s341 = sld [smem:[#allocation2 + $0x65]]
    %s342 = sld [smem:[#allocation2 + $0x66]]
    %s343 = sld [smem:[#allocation2 + $0x67]]
    %s344 = sld [smem:[#allocation2 + $0x68]]
    %s345 = sld [smem:[#allocation2 + $0x69]]
    %s346 = sld [smem:[#allocation2 + $0x6a]]
    %s347 = sld [smem:[#allocation2 + $0x6b]]
    %s348 = sld [smem:[#allocation2 + $0x6c]]
    %s349 = sld [smem:[#allocation2 + $0x6d]]
    %s350 = sld [smem:[#allocation2 + $0x6e]]
    %s351 = sld [smem:[#allocation2 + $0x6f]]
    %s352 = sld [smem:[#allocation2 + $0x70]]
    %s353 = sld [smem:[#allocation2 + $0x71]]
    %s354 = sld [smem:[#allocation2 + $0x72]]
    %s355 = sld [smem:[#allocation2 + $0x73]]
    %s356 = sld [smem:[#allocation2 + $0x74]]
    %s357 = sld [smem:[#allocation2 + $0x75]]
    %s358 = sld [smem:[#allocation2 + $0x76]]
    %s359 = sld [smem:[#allocation2 + $0x77]]
    %s360 = sld [smem:[#allocation2 + $0x78]]
    %s361 = sld [smem:[#allocation2 + $0x79]]
    %s362 = sld [smem:[#allocation2 + $0x7a]]
    %s363 = sld [smem:[#allocation2 + $0x7b]]
    %s364 = sld [smem:[#allocation2 + $0x7c]]
    %s365 = sld [smem:[#allocation2 + $0x7d]]
    %v366 = vstv %s275
    %v367 = vmul.f32 %v366, %v172
    %v368 = vstv %s276
    %v369 = vmul.f32 %v368, %v189
    %v370 = vadd.f32 %v367, %v369
    %v371 = vstv %s277
    %v372 = vmul.f32 %v371, %v206
    %v373 = vadd.f32 %v370, %v372
    %v374 = vstv %s278
    %v375 = vmul.f32 %v374, %v223
    %v376 = vadd.f32 %v373, %v375
    %v377 = vstv %s279
    %v378 = vmul.f32 %v377, %v240
    %v379 = vadd.f32 %v376, %v378
    %v380 = vstv %s280
    %v381 = vmul.f32 %v380, %v257
    %v382 = vadd.f32 %v379, %v381
    %v383 = vstv %s281
    %v384 = vmul.f32 %v383, %v274
    %v385 = vadd.f32 %v382, %v384
    %v386 = vstv %s282
    %v387 = vmul.f32 %v386, %v172
    %v388 = vstv %s283
    %v389 = vmul.f32 %v388, %v189
    %v390 = vadd.f32 %v387, %v389
    %v391 = vstv %s284
    %v392 = vmul.f32 %v391, %v206
    %v393 = vadd.f32 %v390, %v392
    %v394 = vstv %s285
    %v395 = vmul.f32 %v394, %v223
    %v396 = vadd.f32 %v393, %v395
    %v397 = vstv %s286
    %v398 = vmul.f32 %v397, %v240
    %v399 = vadd.f32 %v396, %v398
    %v400 = vstv %s287
    %v401 = vmul.f32 %v400, %v257
    %v402 = vadd.f32 %v399, %v401
    %v403 = vstv %s288
    %v404 = vmul.f32 %v403, %v274
    %v405 = vadd.f32 %v402, %v404
    %v406 = vstv %s289
    %v407 = vmul.f32 %v406, %v172
    %v408 = vstv %s290
    %v409 = vmul.f32 %v408, %v189
    %v410 = vadd.f32 %v407, %v409
    %v411 = vstv %s291
    %v412 = vmul.f32 %v411, %v206
    %v413 = vadd.f32 %v410, %v412
    %v414 = vstv %s292
    %v415 = vmul.f32 %v414, %v223
    %v416 = vadd.f32 %v413, %v415
    %v417 = vstv %s293
    %v418 = vmul.f32 %v417, %v240
    %v419 = vadd.f32 %v416, %v418
    %v420 = vstv %s294
    %v421 = vmul.f32 %v420, %v257
    %v422 = vadd.f32 %v419, %v421
    %v423 = vstv %s295
    %v424 = vmul.f32 %v423, %v274
    %v425 = vadd.f32 %v422, %v424
    %v426 = vstv %s296
    %v427 = vmul.f32 %v426, %v172
    %v428 = vstv %s297
    %v429 = vmul.f32 %v428, %v189
    %v430 = vadd.f32 %v427, %v429
    %v431 = vstv %s298
    %v432 = vmul.f32 %v431, %v206
    %v433 = vadd.f32 %v430, %v432
    %v434 = vstv %s299
    %v435 = vmul.f32 %v434, %v223
    %v436 = vadd.f32 %v433, %v435
    %v437 = vstv %s300
    %v438 = vmul.f32 %v437, %v240
    %v439 = vadd.f32 %v436, %v438
    %v440 = vstv %s301
    %v441 = vmul.f32 %v440, %v257
    %v442 = vadd.f32 %v439, %v441
    %v443 = vstv %s302
    %v444 = vmul.f32 %v443, %v274
    %v445 = vadd.f32 %v442, %v444
    %v446 = vstv %s303
    %v447 = vmul.f32 %v446, %v172
    %v448 = vstv %s304
    %v449 = vmul.f32 %v448, %v189
    %v450 = vadd.f32 %v447, %v449
    %v451 = vstv %s305
    %v452 = vmul.f32 %v451, %v206
    %v453 = vadd.f32 %v450, %v452
    %v454 = vstv %s306
    %v455 = vmul.f32 %v454, %v223
    %v456 = vadd.f32 %v453, %v455
    %v457 = vstv %s307
    %v458 = vmul.f32 %v457, %v240
    %v459 = vadd.f32 %v456, %v458
    %v460 = vstv %s308
    %v461 = vmul.f32 %v460, %v257
    %v462 = vadd.f32 %v459, %v461
    %v463 = vstv %s309
    %v464 = vmul.f32 %v463, %v274
    %v465 = vadd.f32 %v462, %v464
    %v466 = vstv %s310
    %v467 = vmul.f32 %v466, %v172
    %v468 = vstv %s311
    %v469 = vmul.f32 %v468, %v189
    %v470 = vadd.f32 %v467, %v469
    %v471 = vstv %s312
    %v472 = vmul.f32 %v471, %v206
    %v473 = vadd.f32 %v470, %v472
    %v474 = vstv %s313
    %v475 = vmul.f32 %v474, %v223
    %v476 = vadd.f32 %v473, %v475
    %v477 = vstv %s314
    %v478 = vmul.f32 %v477, %v240
    %v479 = vadd.f32 %v476, %v478
    %v480 = vstv %s315
    %v481 = vmul.f32 %v480, %v257
    %v482 = vadd.f32 %v479, %v481
    %v483 = vstv %s316
    %v484 = vmul.f32 %v483, %v274
    %v485 = vadd.f32 %v482, %v484
    %v486 = vstv %s317
    %v487 = vmul.f32 %v486, %v172
    %v488 = vstv %s318
    %v489 = vmul.f32 %v488, %v189
    %v490 = vadd.f32 %v487, %v489
    %v491 = vstv %s319
    %v492 = vmul.f32 %v491, %v206
    %v493 = vadd.f32 %v490, %v492
    %v494 = vstv %s320
    %v495 = vmul.f32 %v494, %v223
    %v496 = vadd.f32 %v493, %v495
    %v497 = vstv %s321
    %v498 = vmul.f32 %v497, %v240
    %v499 = vadd.f32 %v496, %v498
    %v500 = vstv %s322
    %v501 = vmul.f32 %v500, %v257
    %v502 = vadd.f32 %v499, %v501
    %v503 = vstv %s323
    %v504 = vmul.f32 %v503, %v274
    %v505 = vadd.f32 %v502, %v504
    %v506 = vstv %s331
    %v507 = vmul.f32 %v506, %v37
    %v508 = vadd.f32 %v385, %v507
    %v509 = vstv %s332
    %v510 = vmul.f32 %v509, %v39
    %v511 = vadd.f32 %v508, %v510
    %v512 = vstv %s333
    %v513 = vmul.f32 %v512, %v41
    %v514 = vadd.f32 %v511, %v513
    %v515 = vstv %s334
    %v516 = vmul.f32 %v515, %v43
    %v517 = vadd.f32 %v514, %v516
    %v518 = vstv %s335
    %v519 = vmul.f32 %v518, %v37
    %v520 = vadd.f32 %v405, %v519
    %v521 = vstv %s336
    %v522 = vmul.f32 %v521, %v39
    %v523 = vadd.f32 %v520, %v522
    %v524 = vstv %s337
    %v525 = vmul.f32 %v524, %v41
    %v526 = vadd.f32 %v523, %v525
    %v527 = vstv %s338
    %v528 = vmul.f32 %v527, %v43
    %v529 = vadd.f32 %v526, %v528
    %v530 = vstv %s339
    %v531 = vmul.f32 %v530, %v37
    %v532 = vadd.f32 %v425, %v531
    %v533 = vstv %s340
    %v534 = vmul.f32 %v533, %v39
    %v535 = vadd.f32 %v532, %v534
    %v536 = vstv %s341
    %v537 = vmul.f32 %v536, %v41
    %v538 = vadd.f32 %v535, %v537
    %v539 = vstv %s342
    %v540 = vmul.f32 %v539, %v43
    %v541 = vadd.f32 %v538, %v540
    %v542 = vstv %s343
    %v543 = vmul.f32 %v542, %v37
    %v544 = vadd.f32 %v445, %v543
    %v545 = vstv %s344
    %v546 = vmul.f32 %v545, %v39
    %v547 = vadd.f32 %v544, %v546
    %v548 = vstv %s345
    %v549 = vmul.f32 %v548, %v41
    %v550 = vadd.f32 %v547, %v549
    %v551 = vstv %s346
    %v552 = vmul.f32 %v551, %v43
    %v553 = vadd.f32 %v550, %v552
    %v554 = vstv %s347
    %v555 = vmul.f32 %v554, %v37
    %v556 = vadd.f32 %v465, %v555
    %v557 = vstv %s348
    %v558 = vmul.f32 %v557, %v39
    %v559 = vadd.f32 %v556, %v558
    %v560 = vstv %s349
    %v561 = vmul.f32 %v560, %v41
    %v562 = vadd.f32 %v559, %v561
    %v563 = vstv %s350
    %v564 = vmul.f32 %v563, %v43
    %v565 = vadd.f32 %v562, %v564
    %v566 = vstv %s351
    %v567 = vmul.f32 %v566, %v37
    %v568 = vadd.f32 %v485, %v567
    %v569 = vstv %s352
    %v570 = vmul.f32 %v569, %v39
    %v571 = vadd.f32 %v568, %v570
    %v572 = vstv %s353
    %v573 = vmul.f32 %v572, %v41
    %v574 = vadd.f32 %v571, %v573
    %v575 = vstv %s354
    %v576 = vmul.f32 %v575, %v43
    %v577 = vadd.f32 %v574, %v576
    %v578 = vstv %s355
    %v579 = vmul.f32 %v578, %v37
    %v580 = vadd.f32 %v505, %v579
    %v581 = vstv %s356
    %v582 = vmul.f32 %v581, %v39
    %v583 = vadd.f32 %v580, %v582
    %v584 = vstv %s357
    %v585 = vmul.f32 %v584, %v41
    %v586 = vadd.f32 %v583, %v585
    %v587 = vstv %s358
    %v588 = vmul.f32 %v587, %v43
    %v589 = vadd.f32 %v586, %v588
    %s590 = sadd.f32 %s324, %s359
    %v591 = vstv %s590
    %v592 = vadd.f32 %v517, %v591
    %vm593 = vcmp.gt.f32.partialorder %v592, 20.0
    %v594 = vmin.f32 %v592, 20.0
    %v595 = vmul.f32 %v594, 1.442695
    %v596 = vpow.pop %v595
    %v597 = vadd.f32 %v596, 1.0
    %v598 = vlog2.pop %v597
    %v599 = vmul.f32 %v598, 0.6931472
    %v600 = vmul.f32 -0.5, %v596
    %v601 = vadd.f32 %v600, 1.0
    %v602 = vmul.f32 %v601, %v596
    %v603 = vand.u32 2147483647, %v596
    %vm604 = vcmp.lt.f32.partialorder %v603, 0.0004427343
    %v605 = vsel %vm604, %v602, %v599
    %v606 = vsel %vm593, %v592, %v605
    %v607 = vsub.f32 0.0, %v606
    %s608 = sadd.f32 %s325, %s360
    %v609 = vstv %s608
    %v610 = vadd.f32 %v529, %v609
    %vm611 = vcmp.gt.f32.partialorder %v610, 20.0
    %v612 = vmin.f32 %v610, 20.0
    %v613 = vmul.f32 %v612, 1.442695
    %v614 = vpow.pop %v613
    %v615 = vadd.f32 %v614, 1.0
    %v616 = vlog2.pop %v615
    %v617 = vmul.f32 %v616, 0.6931472
    %v618 = vmul.f32 -0.5, %v614
    %v619 = vadd.f32 %v618, 1.0
    %v620 = vmul.f32 %v619, %v614
    %v621 = vand.u32 2147483647, %v614
    %vm622 = vcmp.lt.f32.partialorder %v621, 0.0004427343
    %v623 = vsel %vm622, %v620, %v617
    %v624 = vsel %vm611, %v610, %v623
    %v625 = vsub.f32 0.0, %v624
    %s626 = sadd.f32 %s326, %s361
    %v627 = vstv %s626
    %v628 = vadd.f32 %v541, %v627
    %vm629 = vcmp.gt.f32.partialorder %v628, 20.0
    %v630 = vmin.f32 %v628, 20.0
    %v631 = vmul.f32 %v630, 1.442695
    %v632 = vpow.pop %v631
    %v633 = vadd.f32 %v632, 1.0
    %v634 = vlog2.pop %v633
    %v635 = vmul.f32 %v634, 0.6931472
    %v636 = vmul.f32 -0.5, %v632
    %v637 = vadd.f32 %v636, 1.0
    %v638 = vmul.f32 %v637, %v632
    %v639 = vand.u32 2147483647, %v632
    %vm640 = vcmp.lt.f32.partialorder %v639, 0.0004427343
    %v641 = vsel %vm640, %v638, %v635
    %v642 = vsel %vm629, %v628, %v641
    %v643 = vsub.f32 0.0, %v642
    %s644 = sadd.f32 %s327, %s362
    %v645 = vstv %s644
    %v646 = vadd.f32 %v553, %v645
    %vm647 = vcmp.gt.f32.partialorder %v646, 20.0
    %v648 = vmin.f32 %v646, 20.0
    %v649 = vmul.f32 %v648, 1.442695
    %v650 = vpow.pop %v649
    %v651 = vadd.f32 %v650, 1.0
    %v652 = vlog2.pop %v651
    %v653 = vmul.f32 %v652, 0.6931472
    %v654 = vmul.f32 -0.5, %v650
    %v655 = vadd.f32 %v654, 1.0
    %v656 = vmul.f32 %v655, %v650
    %v657 = vand.u32 2147483647, %v650
    %vm658 = vcmp.lt.f32.partialorder %v657, 0.0004427343
    %v659 = vsel %vm658, %v656, %v653
    %v660 = vsel %vm647, %v646, %v659
    %v661 = vsub.f32 0.0, %v660
    %s662 = sadd.f32 %s328, %s363
    %v663 = vstv %s662
    %v664 = vadd.f32 %v565, %v663
    %vm665 = vcmp.gt.f32.partialorder %v664, 20.0
    %v666 = vmin.f32 %v664, 20.0
    %v667 = vmul.f32 %v666, 1.442695
    %v668 = vpow.pop %v667
    %v669 = vadd.f32 %v668, 1.0
    %v670 = vlog2.pop %v669
    %v671 = vmul.f32 %v670, 0.6931472
    %v672 = vmul.f32 -0.5, %v668
    %v673 = vadd.f32 %v672, 1.0
    %v674 = vmul.f32 %v673, %v668
    %v675 = vand.u32 2147483647, %v668
    %vm676 = vcmp.lt.f32.partialorder %v675, 0.0004427343
    %v677 = vsel %vm676, %v674, %v671
    %v678 = vsel %vm665, %v664, %v677
    %v679 = vsub.f32 0.0, %v678
    %s680 = sadd.f32 %s329, %s364
    %v681 = vstv %s680
    %v682 = vadd.f32 %v577, %v681
    %vm683 = vcmp.gt.f32.partialorder %v682, 20.0
    %v684 = vmin.f32 %v682, 20.0
    %v685 = vmul.f32 %v684, 1.442695
    %v686 = vpow.pop %v685
    %v687 = vadd.f32 %v686, 1.0
    %v688 = vlog2.pop %v687
    %v689 = vmul.f32 %v688, 0.6931472
    %v690 = vmul.f32 -0.5, %v686
    %v691 = vadd.f32 %v690, 1.0
    %v692 = vmul.f32 %v691, %v686
    %v693 = vand.u32 2147483647, %v686
    %vm694 = vcmp.lt.f32.partialorder %v693, 0.0004427343
    %v695 = vsel %vm694, %v692, %v689
    %v696 = vsel %vm683, %v682, %v695
    %v697 = vsub.f32 0.0, %v696
    %s698 = sadd.f32 %s330, %s365
    %v699 = vstv %s698
    %v700 = vadd.f32 %v589, %v699
    %vm701 = vcmp.gt.f32.partialorder %v700, 20.0
    %v702 = vmin.f32 %v700, 20.0
    %v703 = vmul.f32 %v702, 1.442695
    %v704 = vpow.pop %v703
    %v705 = vadd.f32 %v704, 1.0
    %v706 = vlog2.pop %v705
    %v707 = vmul.f32 %v706, 0.6931472
    %v708 = vmul.f32 -0.5, %v704
    %v709 = vadd.f32 %v708, 1.0
    %v710 = vmul.f32 %v709, %v704
    %v711 = vand.u32 2147483647, %v704
    %vm712 = vcmp.lt.f32.partialorder %v711, 0.0004427343
    %v713 = vsel %vm712, %v710, %v707
    %v714 = vsel %vm701, %v700, %v713
    %v715 = vsub.f32 0.0, %v714
    %s716 = sld [smem:[#allocation2 + $0x7e]]
    %s717 = sld [smem:[#allocation2 + $0x7f]]
    %s718 = sld [smem:[#allocation2 + $0x80]]
    %s719 = sld [smem:[#allocation2 + $0x81]]
    %s720 = sld [smem:[#allocation2 + $0x82]]
    %s721 = sld [smem:[#allocation2 + $0x83]]
    %s722 = sld [smem:[#allocation2 + $0x84]]
    %s723 = sld [smem:[#allocation2 + $0x85]]
    %s724 = sld [smem:[#allocation2 + $0x86]]
    %s725 = sld [smem:[#allocation2 + $0x87]]
    %s726 = sld [smem:[#allocation2 + $0x88]]
    %s727 = sld [smem:[#allocation2 + $0x89]]
    %s728 = sld [smem:[#allocation2 + $0x8a]]
    %s729 = sld [smem:[#allocation2 + $0x8b]]
    %s730 = sld [smem:[#allocation2 + $0x8c]]
    %s731 = sld [smem:[#allocation2 + $0x8d]]
    %s732 = sld [smem:[#allocation2 + $0x8e]]
    %s733 = sld [smem:[#allocation2 + $0x8f]]
    %s734 = sld [smem:[#allocation2 + $0x90]]
    %s735 = sld [smem:[#allocation2 + $0x91]]
    %s736 = sld [smem:[#allocation2 + $0x92]]
    %s737 = sld [smem:[#allocation2 + $0x93]]
    %s738 = sld [smem:[#allocation2 + $0x94]]
    %s739 = sld [smem:[#allocation2 + $0x95]]
    %s740 = sld [smem:[#allocation2 + $0x96]]
    %s741 = sld [smem:[#allocation2 + $0x97]]
    %s742 = sld [smem:[#allocation2 + $0x98]]
    %s743 = sld [smem:[#allocation2 + $0x99]]
    %s744 = sld [smem:[#allocation2 + $0x9a]]
    %s745 = sld [smem:[#allocation2 + $0x9b]]
    %s746 = sld [smem:[#allocation2 + $0x9c]]
    %s747 = sld [smem:[#allocation2 + $0x9d]]
    %s748 = sld [smem:[#allocation2 + $0x9e]]
    %s749 = sld [smem:[#allocation2 + $0x9f]]
    %s750 = sld [smem:[#allocation2 + $0xa0]]
    %s751 = sld [smem:[#allocation2 + $0xa1]]
    %s752 = sld [smem:[#allocation2 + $0xa2]]
    %s753 = sld [smem:[#allocation2 + $0xa3]]
    %s754 = sld [smem:[#allocation2 + $0xa4]]
    %s755 = sld [smem:[#allocation2 + $0xa5]]
    %s756 = sld [smem:[#allocation2 + $0xa6]]
    %s757 = sld [smem:[#allocation2 + $0xa7]]
    %s758 = sld [smem:[#allocation2 + $0xa8]]
    %s759 = sld [smem:[#allocation2 + $0xa9]]
    %s760 = sld [smem:[#allocation2 + $0xaa]]
    %s761 = sld [smem:[#allocation2 + $0xab]]
    %s762 = sld [smem:[#allocation2 + $0xac]]
    %s763 = sld [smem:[#allocation2 + $0xad]]
    %s764 = sld [smem:[#allocation2 + $0xae]]
    %s765 = sld [smem:[#allocation2 + $0xaf]]
    %s766 = sld [smem:[#allocation2 + $0xb0]]
    %s767 = sld [smem:[#allocation2 + $0xb1]]
    %s768 = sld [smem:[#allocation2 + $0xb2]]
    %s769 = sld [smem:[#allocation2 + $0xb3]]
    %s770 = sld [smem:[#allocation2 + $0xb4]]
    %s771 = sld [smem:[#allocation2 + $0xb5]]
    %s772 = sld [smem:[#allocation2 + $0xb6]]
    %s773 = sld [smem:[#allocation2 + $0xb7]]
    %s774 = sld [smem:[#allocation2 + $0xb8]]
    %s775 = sld [smem:[#allocation2 + $0xb9]]
    %s776 = sld [smem:[#allocation2 + $0xba]]
    %s777 = sld [smem:[#allocation2 + $0xbb]]
    %s778 = sld [smem:[#allocation2 + $0xbc]]
    %s779 = sld [smem:[#allocation2 + $0xbd]]
    %s780 = sld [smem:[#allocation2 + $0xbe]]
    %s781 = sld [smem:[#allocation2 + $0xbf]]
    %s782 = sld [smem:[#allocation2 + $0xc0]]
    %s783 = sld [smem:[#allocation2 + $0xc1]]
    %s784 = sld [smem:[#allocation2 + $0xc2]]
    %s785 = sld [smem:[#allocation2 + $0xc3]]
    %s786 = sld [smem:[#allocation2 + $0xc4]]
    %s787 = sld [smem:[#allocation2 + $0xc5]]
    %s788 = sld [smem:[#allocation2 + $0xc6]]
    %s789 = sld [smem:[#allocation2 + $0xc7]]
    %s790 = sld [smem:[#allocation2 + $0xc8]]
    %s791 = sld [smem:[#allocation2 + $0xc9]]
    %s792 = sld [smem:[#allocation2 + $0xca]]
    %s793 = sld [smem:[#allocation2 + $0xcb]]
    %s794 = sld [smem:[#allocation2 + $0xcc]]
    %s795 = sld [smem:[#allocation2 + $0xcd]]
    %s796 = sld [smem:[#allocation2 + $0xce]]
    %s797 = sld [smem:[#allocation2 + $0xcf]]
    %s798 = sld [smem:[#allocation2 + $0xd0]]
    %s799 = sld [smem:[#allocation2 + $0xd1]]
    %s800 = sld [smem:[#allocation2 + $0xd2]]
    %s801 = sld [smem:[#allocation2 + $0xd3]]
    %s802 = sld [smem:[#allocation2 + $0xd4]]
    %s803 = sld [smem:[#allocation2 + $0xd5]]
    %s804 = sld [smem:[#allocation2 + $0xd6]]
    %s805 = sld [smem:[#allocation2 + $0xd7]]
    %s806 = sld [smem:[#allocation2 + $0xd8]]
    %v807 = vstv %s716
    %v808 = vmul.f32 %v807, %v607
    %v809 = vstv %s717
    %v810 = vmul.f32 %v809, %v625
    %v811 = vadd.f32 %v808, %v810
    %v812 = vstv %s718
    %v813 = vmul.f32 %v812, %v643
    %v814 = vadd.f32 %v811, %v813
    %v815 = vstv %s719
    %v816 = vmul.f32 %v815, %v661
    %v817 = vadd.f32 %v814, %v816
    %v818 = vstv %s720
    %v819 = vmul.f32 %v818, %v679
    %v820 = vadd.f32 %v817, %v819
    %v821 = vstv %s721
    %v822 = vmul.f32 %v821, %v697
    %v823 = vadd.f32 %v820, %v822
    %v824 = vstv %s722
    %v825 = vmul.f32 %v824, %v715
    %v826 = vadd.f32 %v823, %v825
    %v827 = vstv %s723
    %v828 = vmul.f32 %v827, %v607
    %v829 = vstv %s724
    %v830 = vmul.f32 %v829, %v625
    %v831 = vadd.f32 %v828, %v830
    %v832 = vstv %s725
    %v833 = vmul.f32 %v832, %v643
    %v834 = vadd.f32 %v831, %v833
    %v835 = vstv %s726
    %v836 = vmul.f32 %v835, %v661
    %v837 = vadd.f32 %v834, %v836
    %v838 = vstv %s727
    %v839 = vmul.f32 %v838, %v679
    %v840 = vadd.f32 %v837, %v839
    %v841 = vstv %s728
    %v842 = vmul.f32 %v841, %v697
    %v843 = vadd.f32 %v840, %v842
    %v844 = vstv %s729
    %v845 = vmul.f32 %v844, %v715
    %v846 = vadd.f32 %v843, %v845
    %v847 = vstv %s730
    %v848 = vmul.f32 %v847, %v607
    %v849 = vstv %s731
    %v850 = vmul.f32 %v849, %v625
    %v851 = vadd.f32 %v848, %v850
    %v852 = vstv %s732
    %v853 = vmul.f32 %v852, %v643
    %v854 = vadd.f32 %v851, %v853
    %v855 = vstv %s733
    %v856 = vmul.f32 %v855, %v661
    %v857 = vadd.f32 %v854, %v856
    %v858 = vstv %s734
    %v859 = vmul.f32 %v858, %v679
    %v860 = vadd.f32 %v857, %v859
    %v861 = vstv %s735
    %v862 = vmul.f32 %v861, %v697
    %v863 = vadd.f32 %v860, %v862
    %v864 = vstv %s736
    %v865 = vmul.f32 %v864, %v715
    %v866 = vadd.f32 %v863, %v865
    %v867 = vstv %s737
    %v868 = vmul.f32 %v867, %v607
    %v869 = vstv %s738
    %v870 = vmul.f32 %v869, %v625
    %v871 = vadd.f32 %v868, %v870
    %v872 = vstv %s739
    %v873 = vmul.f32 %v872, %v643
    %v874 = vadd.f32 %v871, %v873
    %v875 = vstv %s740
    %v876 = vmul.f32 %v875, %v661
    %v877 = vadd.f32 %v874, %v876
    %v878 = vstv %s741
    %v879 = vmul.f32 %v878, %v679
    %v880 = vadd.f32 %v877, %v879
    %v881 = vstv %s742
    %v882 = vmul.f32 %v881, %v697
    %v883 = vadd.f32 %v880, %v882
    %v884 = vstv %s743
    %v885 = vmul.f32 %v884, %v715
    %v886 = vadd.f32 %v883, %v885
    %v887 = vstv %s744
    %v888 = vmul.f32 %v887, %v607
    %v889 = vstv %s745
    %v890 = vmul.f32 %v889, %v625
    %v891 = vadd.f32 %v888, %v890
    %v892 = vstv %s746
    %v893 = vmul.f32 %v892, %v643
    %v894 = vadd.f32 %v891, %v893
    %v895 = vstv %s747
    %v896 = vmul.f32 %v895, %v661
    %v897 = vadd.f32 %v894, %v896
    %v898 = vstv %s748
    %v899 = vmul.f32 %v898, %v679
    %v900 = vadd.f32 %v897, %v899
    %v901 = vstv %s749
    %v902 = vmul.f32 %v901, %v697
    %v903 = vadd.f32 %v900, %v902
    %v904 = vstv %s750
    %v905 = vmul.f32 %v904, %v715
    %v906 = vadd.f32 %v903, %v905
    %v907 = vstv %s751
    %v908 = vmul.f32 %v907, %v607
    %v909 = vstv %s752
    %v910 = vmul.f32 %v909, %v625
    %v911 = vadd.f32 %v908, %v910
    %v912 = vstv %s753
    %v913 = vmul.f32 %v912, %v643
    %v914 = vadd.f32 %v911, %v913
    %v915 = vstv %s754
    %v916 = vmul.f32 %v915, %v661
    %v917 = vadd.f32 %v914, %v916
    %v918 = vstv %s755
    %v919 = vmul.f32 %v918, %v679
    %v920 = vadd.f32 %v917, %v919
    %v921 = vstv %s756
    %v922 = vmul.f32 %v921, %v697
    %v923 = vadd.f32 %v920, %v922
    %v924 = vstv %s757
    %v925 = vmul.f32 %v924, %v715
    %v926 = vadd.f32 %v923, %v925
    %v927 = vstv %s758
    %v928 = vmul.f32 %v927, %v607
    %v929 = vstv %s759
    %v930 = vmul.f32 %v929, %v625
    %v931 = vadd.f32 %v928, %v930
    %v932 = vstv %s760
    %v933 = vmul.f32 %v932, %v643
    %v934 = vadd.f32 %v931, %v933
    %v935 = vstv %s761
    %v936 = vmul.f32 %v935, %v661
    %v937 = vadd.f32 %v934, %v936
    %v938 = vstv %s762
    %v939 = vmul.f32 %v938, %v679
    %v940 = vadd.f32 %v937, %v939
    %v941 = vstv %s763
    %v942 = vmul.f32 %v941, %v697
    %v943 = vadd.f32 %v940, %v942
    %v944 = vstv %s764
    %v945 = vmul.f32 %v944, %v715
    %v946 = vadd.f32 %v943, %v945
    %v947 = vstv %s772
    %v948 = vmul.f32 %v947, %v37
    %v949 = vadd.f32 %v826, %v948
    %v950 = vstv %s773
    %v951 = vmul.f32 %v950, %v39
    %v952 = vadd.f32 %v949, %v951
    %v953 = vstv %s774
    %v954 = vmul.f32 %v953, %v41
    %v955 = vadd.f32 %v952, %v954
    %v956 = vstv %s775
    %v957 = vmul.f32 %v956, %v43
    %v958 = vadd.f32 %v955, %v957
    %v959 = vstv %s776
    %v960 = vmul.f32 %v959, %v37
    %v961 = vadd.f32 %v846, %v960
    %v962 = vstv %s777
    %v963 = vmul.f32 %v962, %v39
    %v964 = vadd.f32 %v961, %v963
    %v965 = vstv %s778
    %v966 = vmul.f32 %v965, %v41
    %v967 = vadd.f32 %v964, %v966
    %v968 = vstv %s779
    %v969 = vmul.f32 %v968, %v43
    %v970 = vadd.f32 %v967, %v969
    %v971 = vstv %s780
    %v972 = vmul.f32 %v971, %v37
    %v973 = vadd.f32 %v866, %v972
    %v974 = vstv %s781
    %v975 = vmul.f32 %v974, %v39
    %v976 = vadd.f32 %v973, %v975
    %v977 = vstv %s782
    %v978 = vmul.f32 %v977, %v41
    %v979 = vadd.f32 %v976, %v978
    %v980 = vstv %s783
    %v981 = vmul.f32 %v980, %v43
    %v982 = vadd.f32 %v979, %v981
    %v983 = vstv %s784
    %v984 = vmul.f32 %v983, %v37
    %v985 = vadd.f32 %v886, %v984
    %v986 = vstv %s785
    %v987 = vmul.f32 %v986, %v39
    %v988 = vadd.f32 %v985, %v987
    %v989 = vstv %s786
    %v990 = vmul.f32 %v989, %v41
    %v991 = vadd.f32 %v988, %v990
    %v992 = vstv %s787
    %v993 = vmul.f32 %v992, %v43
    %v994 = vadd.f32 %v991, %v993
    %v995 = vstv %s788
    %v996 = vmul.f32 %v995, %v37
    %v997 = vadd.f32 %v906, %v996
    %v998 = vstv %s789
    %v999 = vmul.f32 %v998, %v39
    %v1000 = vadd.f32 %v997, %v999
    %v1001 = vstv %s790
    %v1002 = vmul.f32 %v1001, %v41
    %v1003 = vadd.f32 %v1000, %v1002
    %v1004 = vstv %s791
    %v1005 = vmul.f32 %v1004, %v43
    %v1006 = vadd.f32 %v1003, %v1005
    %v1007 = vstv %s792
    %v1008 = vmul.f32 %v1007, %v37
    %v1009 = vadd.f32 %v926, %v1008
    %v1010 = vstv %s793
    %v1011 = vmul.f32 %v1010, %v39
    %v1012 = vadd.f32 %v1009, %v1011
    %v1013 = vstv %s794
    %v1014 = vmul.f32 %v1013, %v41
    %v1015 = vadd.f32 %v1012, %v1014
    %v1016 = vstv %s795
    %v1017 = vmul.f32 %v1016, %v43
    %v1018 = vadd.f32 %v1015, %v1017
    %v1019 = vstv %s796
    %v1020 = vmul.f32 %v1019, %v37
    %v1021 = vadd.f32 %v946, %v1020
    %v1022 = vstv %s797
    %v1023 = vmul.f32 %v1022, %v39
    %v1024 = vadd.f32 %v1021, %v1023
    %v1025 = vstv %s798
    %v1026 = vmul.f32 %v1025, %v41
    %v1027 = vadd.f32 %v1024, %v1026
    %v1028 = vstv %s799
    %v1029 = vmul.f32 %v1028, %v43
    %v1030 = vadd.f32 %v1027, %v1029
    %s1031 = sadd.f32 %s765, %s800
    %v1032 = vstv %s1031
    %v1033 = vadd.f32 %v958, %v1032
    %vm1034 = vcmp.gt.f32.partialorder %v1033, 20.0
    %v1035 = vmin.f32 %v1033, 20.0
    %v1036 = vmul.f32 %v1035, 1.442695
    %v1037 = vpow.pop %v1036
    %v1038 = vadd.f32 %v1037, 1.0
    %v1039 = vlog2.pop %v1038
    %v1040 = vmul.f32 %v1039, 0.6931472
    %v1041 = vmul.f32 -0.5, %v1037
    %v1042 = vadd.f32 %v1041, 1.0
    %v1043 = vmul.f32 %v1042, %v1037
    %v1044 = vand.u32 2147483647, %v1037
    %vm1045 = vcmp.lt.f32.partialorder %v1044, 0.0004427343
    %v1046 = vsel %vm1045, %v1043, %v1040
    %v1047 = vsel %vm1034, %v1033, %v1046
    %v1048 = vsub.f32 0.0, %v1047
    %s1049 = sadd.f32 %s766, %s801
    %v1050 = vstv %s1049
    %v1051 = vadd.f32 %v970, %v1050
    %vm1052 = vcmp.gt.f32.partialorder %v1051, 20.0
    %v1053 = vmin.f32 %v1051, 20.0
    %v1054 = vmul.f32 %v1053, 1.442695
    %v1055 = vpow.pop %v1054
    %v1056 = vadd.f32 %v1055, 1.0
    %v1057 = vlog2.pop %v1056
    %v1058 = vmul.f32 %v1057, 0.6931472
    %v1059 = vmul.f32 -0.5, %v1055
    %v1060 = vadd.f32 %v1059, 1.0
    %v1061 = vmul.f32 %v1060, %v1055
    %v1062 = vand.u32 2147483647, %v1055
    %vm1063 = vcmp.lt.f32.partialorder %v1062, 0.0004427343
    %v1064 = vsel %vm1063, %v1061, %v1058
    %v1065 = vsel %vm1052, %v1051, %v1064
    %v1066 = vsub.f32 0.0, %v1065
    %s1067 = sadd.f32 %s767, %s802
    %v1068 = vstv %s1067
    %v1069 = vadd.f32 %v982, %v1068
    %vm1070 = vcmp.gt.f32.partialorder %v1069, 20.0
    %v1071 = vmin.f32 %v1069, 20.0
    %v1072 = vmul.f32 %v1071, 1.442695
    %v1073 = vpow.pop %v1072
    %v1074 = vadd.f32 %v1073, 1.0
    %v1075 = vlog2.pop %v1074
    %v1076 = vmul.f32 %v1075, 0.6931472
    %v1077 = vmul.f32 -0.5, %v1073
    %v1078 = vadd.f32 %v1077, 1.0
    %v1079 = vmul.f32 %v1078, %v1073
    %v1080 = vand.u32 2147483647, %v1073
    %vm1081 = vcmp.lt.f32.partialorder %v1080, 0.0004427343
    %v1082 = vsel %vm1081, %v1079, %v1076
    %v1083 = vsel %vm1070, %v1069, %v1082
    %v1084 = vsub.f32 0.0, %v1083
    %s1085 = sadd.f32 %s768, %s803
    %v1086 = vstv %s1085
    %v1087 = vadd.f32 %v994, %v1086
    %vm1088 = vcmp.gt.f32.partialorder %v1087, 20.0
    %v1089 = vmin.f32 %v1087, 20.0
    %v1090 = vmul.f32 %v1089, 1.442695
    %v1091 = vpow.pop %v1090
    %v1092 = vadd.f32 %v1091, 1.0
    %v1093 = vlog2.pop %v1092
    %v1094 = vmul.f32 %v1093, 0.6931472
    %v1095 = vmul.f32 -0.5, %v1091
    %v1096 = vadd.f32 %v1095, 1.0
    %v1097 = vmul.f32 %v1096, %v1091
    %v1098 = vand.u32 2147483647, %v1091
    %vm1099 = vcmp.lt.f32.partialorder %v1098, 0.0004427343
    %v1100 = vsel %vm1099, %v1097, %v1094
    %v1101 = vsel %vm1088, %v1087, %v1100
    %v1102 = vsub.f32 0.0, %v1101
    %s1103 = sadd.f32 %s769, %s804
    %v1104 = vstv %s1103
    %v1105 = vadd.f32 %v1006, %v1104
    %vm1106 = vcmp.gt.f32.partialorder %v1105, 20.0
    %v1107 = vmin.f32 %v1105, 20.0
    %v1108 = vmul.f32 %v1107, 1.442695
    %v1109 = vpow.pop %v1108
    %v1110 = vadd.f32 %v1109, 1.0
    %v1111 = vlog2.pop %v1110
    %v1112 = vmul.f32 %v1111, 0.6931472
    %v1113 = vmul.f32 -0.5, %v1109
    %v1114 = vadd.f32 %v1113, 1.0
    %v1115 = vmul.f32 %v1114, %v1109
    %v1116 = vand.u32 2147483647, %v1109
    %vm1117 = vcmp.lt.f32.partialorder %v1116, 0.0004427343
    %v1118 = vsel %vm1117, %v1115, %v1112
    %v1119 = vsel %vm1106, %v1105, %v1118
    %v1120 = vsub.f32 0.0, %v1119
    %s1121 = sadd.f32 %s770, %s805
    %v1122 = vstv %s1121
    %v1123 = vadd.f32 %v1018, %v1122
    %vm1124 = vcmp.gt.f32.partialorder %v1123, 20.0
    %v1125 = vmin.f32 %v1123, 20.0
    %v1126 = vmul.f32 %v1125, 1.442695
    %v1127 = vpow.pop %v1126
    %v1128 = vadd.f32 %v1127, 1.0
    %v1129 = vlog2.pop %v1128
    %v1130 = vmul.f32 %v1129, 0.6931472
    %v1131 = vmul.f32 -0.5, %v1127
    %v1132 = vadd.f32 %v1131, 1.0
    %v1133 = vmul.f32 %v1132, %v1127
    %v1134 = vand.u32 2147483647, %v1127
    %vm1135 = vcmp.lt.f32.partialorder %v1134, 0.0004427343
    %v1136 = vsel %vm1135, %v1133, %v1130
    %v1137 = vsel %vm1124, %v1123, %v1136
    %v1138 = vsub.f32 0.0, %v1137
    %s1139 = sadd.f32 %s771, %s806
    %v1140 = vstv %s1139
    %v1141 = vadd.f32 %v1030, %v1140
    %vm1142 = vcmp.gt.f32.partialorder %v1141, 20.0
    %v1143 = vmin.f32 %v1141, 20.0
    %v1144 = vmul.f32 %v1143, 1.442695
    %v1145 = vpow.pop %v1144
    %v1146 = vadd.f32 %v1145, 1.0
    %v1147 = vlog2.pop %v1146
    %v1148 = vmul.f32 %v1147, 0.6931472
    %v1149 = vmul.f32 -0.5, %v1145
    %v1150 = vadd.f32 %v1149, 1.0
    %v1151 = vmul.f32 %v1150, %v1145
    %v1152 = vand.u32 2147483647, %v1145
    %vm1153 = vcmp.lt.f32.partialorder %v1152, 0.0004427343
    %v1154 = vsel %vm1153, %v1151, %v1148
    %v1155 = vsel %vm1142, %v1141, %v1154
    %v1156 = vsub.f32 0.0, %v1155
    %s1157 = sld [smem:[#allocation2 + $0xd9]]
    %s1158 = sld [smem:[#allocation2 + $0xda]]
    %s1159 = sld [smem:[#allocation2 + $0xdb]]
    %s1160 = sld [smem:[#allocation2 + $0xdc]]
    %s1161 = sld [smem:[#allocation2 + $0xdd]]
    %s1162 = sld [smem:[#allocation2 + $0xde]]
    %s1163 = sld [smem:[#allocation2 + $0xdf]]
    %s1164 = sld [smem:[#allocation2 + $0xe0]]
    %s1165 = sld [smem:[#allocation2 + $0xe1]]
    %s1166 = sld [smem:[#allocation2 + $0xe2]]
    %s1167 = sld [smem:[#allocation2 + $0xe3]]
    %s1168 = sld [smem:[#allocation2 + $0xe4]]
    %s1169 = sld [smem:[#allocation2 + $0xe5]]
    %s1170 = sld [smem:[#allocation2 + $0xe6]]
    %s1171 = sld [smem:[#allocation2 + $0xe7]]
    %s1172 = sld [smem:[#allocation2 + $0xe8]]
    %s1173 = sld [smem:[#allocation2 + $0xe9]]
    %s1174 = sld [smem:[#allocation2 + $0xea]]
    %s1175 = sld [smem:[#allocation2 + $0xeb]]
    %s1176 = sld [smem:[#allocation2 + $0xec]]
    %s1177 = sld [smem:[#allocation2 + $0xed]]
    %s1178 = sld [smem:[#allocation2 + $0xee]]
    %s1179 = sld [smem:[#allocation2 + $0xef]]
    %s1180 = sld [smem:[#allocation2 + $0xf0]]
    %s1181 = sld [smem:[#allocation2 + $0xf1]]
    %s1182 = sld [smem:[#allocation2 + $0xf2]]
    %s1183 = sld [smem:[#allocation2 + $0xf3]]
    %s1184 = sld [smem:[#allocation2 + $0xf4]]
    %s1185 = sld [smem:[#allocation2 + $0xf5]]
    %s1186 = sld [smem:[#allocation2 + $0xf6]]
    %s1187 = sld [smem:[#allocation2 + $0xf7]]
    %s1188 = sld [smem:[#allocation2 + $0xf8]]
    %s1189 = sld [smem:[#allocation2 + $0xf9]]
    %s1190 = sld [smem:[#allocation2 + $0xfa]]
    %s1191 = sld [smem:[#allocation2 + $0xfb]]
    %s1192 = sld [smem:[#allocation2 + $0xfc]]
    %s1193 = sld [smem:[#allocation2 + $0xfd]]
    %s1194 = sld [smem:[#allocation2 + $0xfe]]
    %s1195 = sld [smem:[#allocation2 + $0xff]]
    %s1196 = sld [smem:[#allocation2 + $0x100]]
    %s1197 = sld [smem:[#allocation2 + $0x101]]
    %s1198 = sld [smem:[#allocation2 + $0x102]]
    %s1199 = sld [smem:[#allocation2 + $0x103]]
    %s1200 = sld [smem:[#allocation2 + $0x104]]
    %s1201 = sld [smem:[#allocation2 + $0x105]]
    %s1202 = sld [smem:[#allocation2 + $0x106]]
    %s1203 = sld [smem:[#allocation2 + $0x107]]
    %s1204 = sld [smem:[#allocation2 + $0x108]]
    %s1205 = sld [smem:[#allocation2 + $0x109]]
    %s1206 = sld [smem:[#allocation2 + $0x10a]]
    %s1207 = sld [smem:[#allocation2 + $0x10b]]
    %s1208 = sld [smem:[#allocation2 + $0x10c]]
    %s1209 = sld [smem:[#allocation2 + $0x10d]]
    %s1210 = sld [smem:[#allocation2 + $0x10e]]
    %s1211 = sld [smem:[#allocation2 + $0x10f]]
    %s1212 = sld [smem:[#allocation2 + $0x110]]
    %s1213 = sld [smem:[#allocation2 + $0x111]]
    %s1214 = sld [smem:[#allocation2 + $0x112]]
    %s1215 = sld [smem:[#allocation2 + $0x113]]
    %s1216 = sld [smem:[#allocation2 + $0x114]]
    %s1217 = sld [smem:[#allocation2 + $0x115]]
    %s1218 = sld [smem:[#allocation2 + $0x116]]
    %s1219 = sld [smem:[#allocation2 + $0x117]]
    %s1220 = sld [smem:[#allocation2 + $0x118]]
    %s1221 = sld [smem:[#allocation2 + $0x119]]
    %s1222 = sld [smem:[#allocation2 + $0x11a]]
    %s1223 = sld [smem:[#allocation2 + $0x11b]]
    %s1224 = sld [smem:[#allocation2 + $0x11c]]
    %s1225 = sld [smem:[#allocation2 + $0x11d]]
    %s1226 = sld [smem:[#allocation2 + $0x11e]]
    %s1227 = sld [smem:[#allocation2 + $0x11f]]
    %s1228 = sld [smem:[#allocation2 + $0x120]]
    %s1229 = sld [smem:[#allocation2 + $0x121]]
    %s1230 = sld [smem:[#allocation2 + $0x122]]
    %s1231 = sld [smem:[#allocation2 + $0x123]]
    %s1232 = sld [smem:[#allocation2 + $0x124]]
    %s1233 = sld [smem:[#allocation2 + $0x125]]
    %s1234 = sld [smem:[#allocation2 + $0x126]]
    %s1235 = sld [smem:[#allocation2 + $0x127]]
    %s1236 = sld [smem:[#allocation2 + $0x128]]
    %s1237 = sld [smem:[#allocation2 + $0x129]]
    %s1238 = sld [smem:[#allocation2 + $0x12a]]
    %s1239 = sld [smem:[#allocation2 + $0x12b]]
    %s1240 = sld [smem:[#allocation2 + $0x12c]]
    %s1241 = sld [smem:[#allocation2 + $0x12d]]
    %s1242 = sld [smem:[#allocation2 + $0x12e]]
    %s1243 = sld [smem:[#allocation2 + $0x12f]]
    %s1244 = sld [smem:[#allocation2 + $0x130]]
    %s1245 = sld [smem:[#allocation2 + $0x131]]
    %s1246 = sld [smem:[#allocation2 + $0x132]]
    %s1247 = sld [smem:[#allocation2 + $0x133]]
    %v1248 = vstv %s1157
    %v1249 = vmul.f32 %v1248, %v1048
    %v1250 = vstv %s1158
    %v1251 = vmul.f32 %v1250, %v1066
    %v1252 = vadd.f32 %v1249, %v1251
    %v1253 = vstv %s1159
    %v1254 = vmul.f32 %v1253, %v1084
    %v1255 = vadd.f32 %v1252, %v1254
    %v1256 = vstv %s1160
    %v1257 = vmul.f32 %v1256, %v1102
    %v1258 = vadd.f32 %v1255, %v1257
    %v1259 = vstv %s1161
    %v1260 = vmul.f32 %v1259, %v1120
    %v1261 = vadd.f32 %v1258, %v1260
    %v1262 = vstv %s1162
    %v1263 = vmul.f32 %v1262, %v1138
    %v1264 = vadd.f32 %v1261, %v1263
    %v1265 = vstv %s1163
    %v1266 = vmul.f32 %v1265, %v1156
    %v1267 = vadd.f32 %v1264, %v1266
    %v1268 = vstv %s1164
    %v1269 = vmul.f32 %v1268, %v1048
    %v1270 = vstv %s1165
    %v1271 = vmul.f32 %v1270, %v1066
    %v1272 = vadd.f32 %v1269, %v1271
    %v1273 = vstv %s1166
    %v1274 = vmul.f32 %v1273, %v1084
    %v1275 = vadd.f32 %v1272, %v1274
    %v1276 = vstv %s1167
    %v1277 = vmul.f32 %v1276, %v1102
    %v1278 = vadd.f32 %v1275, %v1277
    %v1279 = vstv %s1168
    %v1280 = vmul.f32 %v1279, %v1120
    %v1281 = vadd.f32 %v1278, %v1280
    %v1282 = vstv %s1169
    %v1283 = vmul.f32 %v1282, %v1138
    %v1284 = vadd.f32 %v1281, %v1283
    %v1285 = vstv %s1170
    %v1286 = vmul.f32 %v1285, %v1156
    %v1287 = vadd.f32 %v1284, %v1286
    %v1288 = vstv %s1171
    %v1289 = vmul.f32 %v1288, %v1048
    %v1290 = vstv %s1172
    %v1291 = vmul.f32 %v1290, %v1066
    %v1292 = vadd.f32 %v1289, %v1291
    %v1293 = vstv %s1173
    %v1294 = vmul.f32 %v1293, %v1084
    %v1295 = vadd.f32 %v1292, %v1294
    %v1296 = vstv %s1174
    %v1297 = vmul.f32 %v1296, %v1102
    %v1298 = vadd.f32 %v1295, %v1297
    %v1299 = vstv %s1175
    %v1300 = vmul.f32 %v1299, %v1120
    %v1301 = vadd.f32 %v1298, %v1300
    %v1302 = vstv %s1176
    %v1303 = vmul.f32 %v1302, %v1138
    %v1304 = vadd.f32 %v1301, %v1303
    %v1305 = vstv %s1177
    %v1306 = vmul.f32 %v1305, %v1156
    %v1307 = vadd.f32 %v1304, %v1306
    %v1308 = vstv %s1178
    %v1309 = vmul.f32 %v1308, %v1048
    %v1310 = vstv %s1179
    %v1311 = vmul.f32 %v1310, %v1066
    %v1312 = vadd.f32 %v1309, %v1311
    %v1313 = vstv %s1180
    %v1314 = vmul.f32 %v1313, %v1084
    %v1315 = vadd.f32 %v1312, %v1314
    %v1316 = vstv %s1181
    %v1317 = vmul.f32 %v1316, %v1102
    %v1318 = vadd.f32 %v1315, %v1317
    %v1319 = vstv %s1182
    %v1320 = vmul.f32 %v1319, %v1120
    %v1321 = vadd.f32 %v1318, %v1320
    %v1322 = vstv %s1183
    %v1323 = vmul.f32 %v1322, %v1138
    %v1324 = vadd.f32 %v1321, %v1323
    %v1325 = vstv %s1184
    %v1326 = vmul.f32 %v1325, %v1156
    %v1327 = vadd.f32 %v1324, %v1326
    %v1328 = vstv %s1185
    %v1329 = vmul.f32 %v1328, %v1048
    %v1330 = vstv %s1186
    %v1331 = vmul.f32 %v1330, %v1066
    %v1332 = vadd.f32 %v1329, %v1331
    %v1333 = vstv %s1187
    %v1334 = vmul.f32 %v1333, %v1084
    %v1335 = vadd.f32 %v1332, %v1334
    %v1336 = vstv %s1188
    %v1337 = vmul.f32 %v1336, %v1102
    %v1338 = vadd.f32 %v1335, %v1337
    %v1339 = vstv %s1189
    %v1340 = vmul.f32 %v1339, %v1120
    %v1341 = vadd.f32 %v1338, %v1340
    %v1342 = vstv %s1190
    %v1343 = vmul.f32 %v1342, %v1138
    %v1344 = vadd.f32 %v1341, %v1343
    %v1345 = vstv %s1191
    %v1346 = vmul.f32 %v1345, %v1156
    %v1347 = vadd.f32 %v1344, %v1346
    %v1348 = vstv %s1192
    %v1349 = vmul.f32 %v1348, %v1048
    %v1350 = vstv %s1193
    %v1351 = vmul.f32 %v1350, %v1066
    %v1352 = vadd.f32 %v1349, %v1351
    %v1353 = vstv %s1194
    %v1354 = vmul.f32 %v1353, %v1084
    %v1355 = vadd.f32 %v1352, %v1354
    %v1356 = vstv %s1195
    %v1357 = vmul.f32 %v1356, %v1102
    %v1358 = vadd.f32 %v1355, %v1357
    %v1359 = vstv %s1196
    %v1360 = vmul.f32 %v1359, %v1120
    %v1361 = vadd.f32 %v1358, %v1360
    %v1362 = vstv %s1197
    %v1363 = vmul.f32 %v1362, %v1138
    %v1364 = vadd.f32 %v1361, %v1363
    %v1365 = vstv %s1198
    %v1366 = vmul.f32 %v1365, %v1156
    %v1367 = vadd.f32 %v1364, %v1366
    %v1368 = vstv %s1199
    %v1369 = vmul.f32 %v1368, %v1048
    %v1370 = vstv %s1200
    %v1371 = vmul.f32 %v1370, %v1066
    %v1372 = vadd.f32 %v1369, %v1371
    %v1373 = vstv %s1201
    %v1374 = vmul.f32 %v1373, %v1084
    %v1375 = vadd.f32 %v1372, %v1374
    %v1376 = vstv %s1202
    %v1377 = vmul.f32 %v1376, %v1102
    %v1378 = vadd.f32 %v1375, %v1377
    %v1379 = vstv %s1203
    %v1380 = vmul.f32 %v1379, %v1120
    %v1381 = vadd.f32 %v1378, %v1380
    %v1382 = vstv %s1204
    %v1383 = vmul.f32 %v1382, %v1138
    %v1384 = vadd.f32 %v1381, %v1383
    %v1385 = vstv %s1205
    %v1386 = vmul.f32 %v1385, %v1156
    %v1387 = vadd.f32 %v1384, %v1386
    %v1388 = vstv %s1213
    %v1389 = vmul.f32 %v1388, %v37
    %v1390 = vadd.f32 %v1267, %v1389
    %v1391 = vstv %s1214
    %v1392 = vmul.f32 %v1391, %v39
    %v1393 = vadd.f32 %v1390, %v1392
    %v1394 = vstv %s1215
    %v1395 = vmul.f32 %v1394, %v41
    %v1396 = vadd.f32 %v1393, %v1395
    %v1397 = vstv %s1216
    %v1398 = vmul.f32 %v1397, %v43
    %v1399 = vadd.f32 %v1396, %v1398
    %v1400 = vstv %s1217
    %v1401 = vmul.f32 %v1400, %v37
    %v1402 = vadd.f32 %v1287, %v1401
    %v1403 = vstv %s1218
    %v1404 = vmul.f32 %v1403, %v39
    %v1405 = vadd.f32 %v1402, %v1404
    %v1406 = vstv %s1219
    %v1407 = vmul.f32 %v1406, %v41
    %v1408 = vadd.f32 %v1405, %v1407
    %v1409 = vstv %s1220
    %v1410 = vmul.f32 %v1409, %v43
    %v1411 = vadd.f32 %v1408, %v1410
    %v1412 = vstv %s1221
    %v1413 = vmul.f32 %v1412, %v37
    %v1414 = vadd.f32 %v1307, %v1413
    %v1415 = vstv %s1222
    %v1416 = vmul.f32 %v1415, %v39
    %v1417 = vadd.f32 %v1414, %v1416
    %v1418 = vstv %s1223
    %v1419 = vmul.f32 %v1418, %v41
    %v1420 = vadd.f32 %v1417, %v1419
    %v1421 = vstv %s1224
    %v1422 = vmul.f32 %v1421, %v43
    %v1423 = vadd.f32 %v1420, %v1422
    %v1424 = vstv %s1225
    %v1425 = vmul.f32 %v1424, %v37
    %v1426 = vadd.f32 %v1327, %v1425
    %v1427 = vstv %s1226
    %v1428 = vmul.f32 %v1427, %v39
    %v1429 = vadd.f32 %v1426, %v1428
    %v1430 = vstv %s1227
    %v1431 = vmul.f32 %v1430, %v41
    %v1432 = vadd.f32 %v1429, %v1431
    %v1433 = vstv %s1228
    %v1434 = vmul.f32 %v1433, %v43
    %v1435 = vadd.f32 %v1432, %v1434
    %v1436 = vstv %s1229
    %v1437 = vmul.f32 %v1436, %v37
    %v1438 = vadd.f32 %v1347, %v1437
    %v1439 = vstv %s1230
    %v1440 = vmul.f32 %v1439, %v39
    %v1441 = vadd.f32 %v1438, %v1440
    %v1442 = vstv %s1231
    %v1443 = vmul.f32 %v1442, %v41
    %v1444 = vadd.f32 %v1441, %v1443
    %v1445 = vstv %s1232
    %v1446 = vmul.f32 %v1445, %v43
    %v1447 = vadd.f32 %v1444, %v1446
    %v1448 = vstv %s1233
    %v1449 = vmul.f32 %v1448, %v37
    %v1450 = vadd.f32 %v1367, %v1449
    %v1451 = vstv %s1234
    %v1452 = vmul.f32 %v1451, %v39
    %v1453 = vadd.f32 %v1450, %v1452
    %v1454 = vstv %s1235
    %v1455 = vmul.f32 %v1454, %v41
    %v1456 = vadd.f32 %v1453, %v1455
    %v1457 = vstv %s1236
    %v1458 = vmul.f32 %v1457, %v43
    %v1459 = vadd.f32 %v1456, %v1458
    %v1460 = vstv %s1237
    %v1461 = vmul.f32 %v1460, %v37
    %v1462 = vadd.f32 %v1387, %v1461
    %v1463 = vstv %s1238
    %v1464 = vmul.f32 %v1463, %v39
    %v1465 = vadd.f32 %v1462, %v1464
    %v1466 = vstv %s1239
    %v1467 = vmul.f32 %v1466, %v41
    %v1468 = vadd.f32 %v1465, %v1467
    %v1469 = vstv %s1240
    %v1470 = vmul.f32 %v1469, %v43
    %v1471 = vadd.f32 %v1468, %v1470
    %s1472 = sadd.f32 %s1206, %s1241
    %v1473 = vstv %s1472
    %v1474 = vadd.f32 %v1399, %v1473
    %vm1475 = vcmp.gt.f32.partialorder %v1474, 20.0
    %v1476 = vmin.f32 %v1474, 20.0
    %v1477 = vmul.f32 %v1476, 1.442695
    %v1478 = vpow.pop %v1477
    %v1479 = vadd.f32 %v1478, 1.0
    %v1480 = vlog2.pop %v1479
    %v1481 = vmul.f32 %v1480, 0.6931472
    %v1482 = vmul.f32 -0.5, %v1478
    %v1483 = vadd.f32 %v1482, 1.0
    %v1484 = vmul.f32 %v1483, %v1478
    %v1485 = vand.u32 2147483647, %v1478
    %vm1486 = vcmp.lt.f32.partialorder %v1485, 0.0004427343
    %v1487 = vsel %vm1486, %v1484, %v1481
    %v1488 = vsel %vm1475, %v1474, %v1487
    %v1489 = vsub.f32 0.0, %v1488
    %s1490 = sadd.f32 %s1207, %s1242
    %v1491 = vstv %s1490
    %v1492 = vadd.f32 %v1411, %v1491
    %vm1493 = vcmp.gt.f32.partialorder %v1492, 20.0
    %v1494 = vmin.f32 %v1492, 20.0
    %v1495 = vmul.f32 %v1494, 1.442695
    %v1496 = vpow.pop %v1495
    %v1497 = vadd.f32 %v1496, 1.0
    %v1498 = vlog2.pop %v1497
    %v1499 = vmul.f32 %v1498, 0.6931472
    %v1500 = vmul.f32 -0.5, %v1496
    %v1501 = vadd.f32 %v1500, 1.0
    %v1502 = vmul.f32 %v1501, %v1496
    %v1503 = vand.u32 2147483647, %v1496
    %vm1504 = vcmp.lt.f32.partialorder %v1503, 0.0004427343
    %v1505 = vsel %vm1504, %v1502, %v1499
    %v1506 = vsel %vm1493, %v1492, %v1505
    %v1507 = vsub.f32 0.0, %v1506
    %s1508 = sadd.f32 %s1208, %s1243
    %v1509 = vstv %s1508
    %v1510 = vadd.f32 %v1423, %v1509
    %vm1511 = vcmp.gt.f32.partialorder %v1510, 20.0
    %v1512 = vmin.f32 %v1510, 20.0
    %v1513 = vmul.f32 %v1512, 1.442695
    %v1514 = vpow.pop %v1513
    %v1515 = vadd.f32 %v1514, 1.0
    %v1516 = vlog2.pop %v1515
    %v1517 = vmul.f32 %v1516, 0.6931472
    %v1518 = vmul.f32 -0.5, %v1514
    %v1519 = vadd.f32 %v1518, 1.0
    %v1520 = vmul.f32 %v1519, %v1514
    %v1521 = vand.u32 2147483647, %v1514
    %vm1522 = vcmp.lt.f32.partialorder %v1521, 0.0004427343
    %v1523 = vsel %vm1522, %v1520, %v1517
    %v1524 = vsel %vm1511, %v1510, %v1523
    %v1525 = vsub.f32 0.0, %v1524
    %s1526 = sadd.f32 %s1209, %s1244
    %v1527 = vstv %s1526
    %v1528 = vadd.f32 %v1435, %v1527
    %vm1529 = vcmp.gt.f32.partialorder %v1528, 20.0
    %v1530 = vmin.f32 %v1528, 20.0
    %v1531 = vmul.f32 %v1530, 1.442695
    %v1532 = vpow.pop %v1531
    %v1533 = vadd.f32 %v1532, 1.0
    %v1534 = vlog2.pop %v1533
    %v1535 = vmul.f32 %v1534, 0.6931472
    %v1536 = vmul.f32 -0.5, %v1532
    %v1537 = vadd.f32 %v1536, 1.0
    %v1538 = vmul.f32 %v1537, %v1532
    %v1539 = vand.u32 2147483647, %v1532
    %vm1540 = vcmp.lt.f32.partialorder %v1539, 0.0004427343
    %v1541 = vsel %vm1540, %v1538, %v1535
    %v1542 = vsel %vm1529, %v1528, %v1541
    %v1543 = vsub.f32 0.0, %v1542
    %s1544 = sadd.f32 %s1210, %s1245
    %v1545 = vstv %s1544
    %v1546 = vadd.f32 %v1447, %v1545
    %vm1547 = vcmp.gt.f32.partialorder %v1546, 20.0
    %v1548 = vmin.f32 %v1546, 20.0
    %v1549 = vmul.f32 %v1548, 1.442695
    %v1550 = vpow.pop %v1549
    %v1551 = vadd.f32 %v1550, 1.0
    %v1552 = vlog2.pop %v1551
    %v1553 = vmul.f32 %v1552, 0.6931472
    %v1554 = vmul.f32 -0.5, %v1550
    %v1555 = vadd.f32 %v1554, 1.0
    %v1556 = vmul.f32 %v1555, %v1550
    %v1557 = vand.u32 2147483647, %v1550
    %vm1558 = vcmp.lt.f32.partialorder %v1557, 0.0004427343
    %v1559 = vsel %vm1558, %v1556, %v1553
    %v1560 = vsel %vm1547, %v1546, %v1559
    %v1561 = vsub.f32 0.0, %v1560
    %s1562 = sadd.f32 %s1211, %s1246
    %v1563 = vstv %s1562
    %v1564 = vadd.f32 %v1459, %v1563
    %vm1565 = vcmp.gt.f32.partialorder %v1564, 20.0
    %v1566 = vmin.f32 %v1564, 20.0
    %v1567 = vmul.f32 %v1566, 1.442695
    %v1568 = vpow.pop %v1567
    %v1569 = vadd.f32 %v1568, 1.0
    %v1570 = vlog2.pop %v1569
    %v1571 = vmul.f32 %v1570, 0.6931472
    %v1572 = vmul.f32 -0.5, %v1568
    %v1573 = vadd.f32 %v1572, 1.0
    %v1574 = vmul.f32 %v1573, %v1568
    %v1575 = vand.u32 2147483647, %v1568
    %vm1576 = vcmp.lt.f32.partialorder %v1575, 0.0004427343
    %v1577 = vsel %vm1576, %v1574, %v1571
    %v1578 = vsel %vm1565, %v1564, %v1577
    %v1579 = vsub.f32 0.0, %v1578
    %s1580 = sadd.f32 %s1212, %s1247
    %v1581 = vstv %s1580
    %v1582 = vadd.f32 %v1471, %v1581
    %vm1583 = vcmp.gt.f32.partialorder %v1582, 20.0
    %v1584 = vmin.f32 %v1582, 20.0
    %v1585 = vmul.f32 %v1584, 1.442695
    %v1586 = vpow.pop %v1585
    %v1587 = vadd.f32 %v1586, 1.0
    %v1588 = vlog2.pop %v1587
    %v1589 = vmul.f32 %v1588, 0.6931472
    %v1590 = vmul.f32 -0.5, %v1586
    %v1591 = vadd.f32 %v1590, 1.0
    %v1592 = vmul.f32 %v1591, %v1586
    %v1593 = vand.u32 2147483647, %v1586
    %vm1594 = vcmp.lt.f32.partialorder %v1593, 0.0004427343
    %v1595 = vsel %vm1594, %v1592, %v1589
    %v1596 = vsel %vm1583, %v1582, %v1595
    %v1597 = vsub.f32 0.0, %v1596
    %s1598 = sld [smem:[#allocation2 + $0x134]]
    %s1599 = sld [smem:[#allocation2 + $0x135]]
    %s1600 = sld [smem:[#allocation2 + $0x136]]
    %s1601 = sld [smem:[#allocation2 + $0x137]]
    %s1602 = sld [smem:[#allocation2 + $0x138]]
    %s1603 = sld [smem:[#allocation2 + $0x139]]
    %s1604 = sld [smem:[#allocation2 + $0x13a]]
    %s1605 = sld [smem:[#allocation2 + $0x13b]]
    %s1606 = sld [smem:[#allocation2 + $0x13c]]
    %s1607 = sld [smem:[#allocation2 + $0x13d]]
    %s1608 = sld [smem:[#allocation2 + $0x13e]]
    %s1609 = sld [smem:[#allocation2 + $0x13f]]
    %s1610 = sld [smem:[#allocation2 + $0x140]]
    %s1611 = sld [smem:[#allocation2 + $0x141]]
    %s1612 = sld [smem:[#allocation2 + $0x142]]
    %s1613 = sld [smem:[#allocation2 + $0x143]]
    %s1614 = sld [smem:[#allocation2 + $0x144]]
    %s1615 = sld [smem:[#allocation2 + $0x145]]
    %s1616 = sld [smem:[#allocation2 + $0x146]]
    %s1617 = sld [smem:[#allocation2 + $0x147]]
    %s1618 = sld [smem:[#allocation2 + $0x148]]
    %s1619 = sld [smem:[#allocation2 + $0x149]]
    %s1620 = sld [smem:[#allocation2 + $0x14a]]
    %s1621 = sld [smem:[#allocation2 + $0x14b]]
    %s1622 = sld [smem:[#allocation2 + $0x14c]]
    %s1623 = sld [smem:[#allocation2 + $0x14d]]
    %s1624 = sld [smem:[#allocation2 + $0x14e]]
    %s1625 = sld [smem:[#allocation2 + $0x14f]]
    %s1626 = sld [smem:[#allocation2 + $0x150]]
    %s1627 = sld [smem:[#allocation2 + $0x151]]
    %s1628 = sld [smem:[#allocation2 + $0x152]]
    %s1629 = sld [smem:[#allocation2 + $0x153]]
    %s1630 = sld [smem:[#allocation2 + $0x154]]
    %s1631 = sld [smem:[#allocation2 + $0x155]]
    %s1632 = sld [smem:[#allocation2 + $0x156]]
    %s1633 = sld [smem:[#allocation2 + $0x157]]
    %s1634 = sld [smem:[#allocation2 + $0x158]]
    %s1635 = sld [smem:[#allocation2 + $0x159]]
    %s1636 = sld [smem:[#allocation2 + $0x15a]]
    %s1637 = sld [smem:[#allocation2 + $0x15b]]
    %s1638 = sld [smem:[#allocation2 + $0x15c]]
    %s1639 = sld [smem:[#allocation2 + $0x15d]]
    %s1640 = sld [smem:[#allocation2 + $0x15e]]
    %s1641 = sld [smem:[#allocation2 + $0x15f]]
    %s1642 = sld [smem:[#allocation2 + $0x160]]
    %s1643 = sld [smem:[#allocation2 + $0x161]]
    %s1644 = sld [smem:[#allocation2 + $0x162]]
    %s1645 = sld [smem:[#allocation2 + $0x163]]
    %s1646 = sld [smem:[#allocation2 + $0x164]]
    %s1647 = sld [smem:[#allocation2 + $0x165]]
    %s1648 = sld [smem:[#allocation2 + $0x166]]
    %s1649 = sld [smem:[#allocation2 + $0x167]]
    %s1650 = sld [smem:[#allocation2 + $0x168]]
    %s1651 = sld [smem:[#allocation2 + $0x169]]
    %s1652 = sld [smem:[#allocation2 + $0x16a]]
    %s1653 = sld [smem:[#allocation2 + $0x16b]]
    %s1654 = sld [smem:[#allocation2 + $0x16c]]
    %s1655 = sld [smem:[#allocation2 + $0x16d]]
    %s1656 = sld [smem:[#allocation2 + $0x16e]]
    %s1657 = sld [smem:[#allocation2 + $0x16f]]
    %s1658 = sld [smem:[#allocation2 + $0x170]]
    %s1659 = sld [smem:[#allocation2 + $0x171]]
    %s1660 = sld [smem:[#allocation2 + $0x172]]
    %s1661 = sld [smem:[#allocation2 + $0x173]]
    %s1662 = sld [smem:[#allocation2 + $0x174]]
    %s1663 = sld [smem:[#allocation2 + $0x175]]
    %s1664 = sld [smem:[#allocation2 + $0x176]]
    %s1665 = sld [smem:[#allocation2 + $0x177]]
    %s1666 = sld [smem:[#allocation2 + $0x178]]
    %s1667 = sld [smem:[#allocation2 + $0x179]]
    %s1668 = sld [smem:[#allocation2 + $0x17a]]
    %s1669 = sld [smem:[#allocation2 + $0x17b]]
    %s1670 = sld [smem:[#allocation2 + $0x17c]]
    %s1671 = sld [smem:[#allocation2 + $0x17d]]
    %s1672 = sld [smem:[#allocation2 + $0x17e]]
    %s1673 = sld [smem:[#allocation2 + $0x17f]]
    %s1674 = sld [smem:[#allocation2 + $0x180]]
    %s1675 = sld [smem:[#allocation2 + $0x181]]
    %s1676 = sld [smem:[#allocation2 + $0x182]]
    %s1677 = sld [smem:[#allocation2 + $0x183]]
    %s1678 = sld [smem:[#allocation2 + $0x184]]
    %s1679 = sld [smem:[#allocation2 + $0x185]]
    %s1680 = sld [smem:[#allocation2 + $0x186]]
    %s1681 = sld [smem:[#allocation2 + $0x187]]
    %s1682 = sld [smem:[#allocation2 + $0x188]]
    %s1683 = sld [smem:[#allocation2 + $0x189]]
    %s1684 = sld [smem:[#allocation2 + $0x18a]]
    %s1685 = sld [smem:[#allocation2 + $0x18b]]
    %s1686 = sld [smem:[#allocation2 + $0x18c]]
    %s1687 = sld [smem:[#allocation2 + $0x18d]]
    %s1688 = sld [smem:[#allocation2 + $0x18e]]
    %v1689 = vstv %s1598
    %v1690 = vmul.f32 %v1689, %v1489
    %v1691 = vstv %s1599
    %v1692 = vmul.f32 %v1691, %v1507
    %v1693 = vadd.f32 %v1690, %v1692
    %v1694 = vstv %s1600
    %v1695 = vmul.f32 %v1694, %v1525
    %v1696 = vadd.f32 %v1693, %v1695
    %v1697 = vstv %s1601
    %v1698 = vmul.f32 %v1697, %v1543
    %v1699 = vadd.f32 %v1696, %v1698
    %v1700 = vstv %s1602
    %v1701 = vmul.f32 %v1700, %v1561
    %v1702 = vadd.f32 %v1699, %v1701
    %v1703 = vstv %s1603
    %v1704 = vmul.f32 %v1703, %v1579
    %v1705 = vadd.f32 %v1702, %v1704
    %v1706 = vstv %s1604
    %v1707 = vmul.f32 %v1706, %v1597
    %v1708 = vadd.f32 %v1705, %v1707
    %v1709 = vstv %s1605
    %v1710 = vmul.f32 %v1709, %v1489
    %v1711 = vstv %s1606
    %v1712 = vmul.f32 %v1711, %v1507
    %v1713 = vadd.f32 %v1710, %v1712
    %v1714 = vstv %s1607
    %v1715 = vmul.f32 %v1714, %v1525
    %v1716 = vadd.f32 %v1713, %v1715
    %v1717 = vstv %s1608
    %v1718 = vmul.f32 %v1717, %v1543
    %v1719 = vadd.f32 %v1716, %v1718
    %v1720 = vstv %s1609
    %v1721 = vmul.f32 %v1720, %v1561
    %v1722 = vadd.f32 %v1719, %v1721
    %v1723 = vstv %s1610
    %v1724 = vmul.f32 %v1723, %v1579
    %v1725 = vadd.f32 %v1722, %v1724
    %v1726 = vstv %s1611
    %v1727 = vmul.f32 %v1726, %v1597
    %v1728 = vadd.f32 %v1725, %v1727
    %v1729 = vstv %s1612
    %v1730 = vmul.f32 %v1729, %v1489
    %v1731 = vstv %s1613
    %v1732 = vmul.f32 %v1731, %v1507
    %v1733 = vadd.f32 %v1730, %v1732
    %v1734 = vstv %s1614
    %v1735 = vmul.f32 %v1734, %v1525
    %v1736 = vadd.f32 %v1733, %v1735
    %v1737 = vstv %s1615
    %v1738 = vmul.f32 %v1737, %v1543
    %v1739 = vadd.f32 %v1736, %v1738
    %v1740 = vstv %s1616
    %v1741 = vmul.f32 %v1740, %v1561
    %v1742 = vadd.f32 %v1739, %v1741
    %v1743 = vstv %s1617
    %v1744 = vmul.f32 %v1743, %v1579
    %v1745 = vadd.f32 %v1742, %v1744
    %v1746 = vstv %s1618
    %v1747 = vmul.f32 %v1746, %v1597
    %v1748 = vadd.f32 %v1745, %v1747
    %v1749 = vstv %s1619
    %v1750 = vmul.f32 %v1749, %v1489
    %v1751 = vstv %s1620
    %v1752 = vmul.f32 %v1751, %v1507
    %v1753 = vadd.f32 %v1750, %v1752
    %v1754 = vstv %s1621
    %v1755 = vmul.f32 %v1754, %v1525
    %v1756 = vadd.f32 %v1753, %v1755
    %v1757 = vstv %s1622
    %v1758 = vmul.f32 %v1757, %v1543
    %v1759 = vadd.f32 %v1756, %v1758
    %v1760 = vstv %s1623
    %v1761 = vmul.f32 %v1760, %v1561
    %v1762 = vadd.f32 %v1759, %v1761
    %v1763 = vstv %s1624
    %v1764 = vmul.f32 %v1763, %v1579
    %v1765 = vadd.f32 %v1762, %v1764
    %v1766 = vstv %s1625
    %v1767 = vmul.f32 %v1766, %v1597
    %v1768 = vadd.f32 %v1765, %v1767
    %v1769 = vstv %s1626
    %v1770 = vmul.f32 %v1769, %v1489
    %v1771 = vstv %s1627
    %v1772 = vmul.f32 %v1771, %v1507
    %v1773 = vadd.f32 %v1770, %v1772
    %v1774 = vstv %s1628
    %v1775 = vmul.f32 %v1774, %v1525
    %v1776 = vadd.f32 %v1773, %v1775
    %v1777 = vstv %s1629
    %v1778 = vmul.f32 %v1777, %v1543
    %v1779 = vadd.f32 %v1776, %v1778
    %v1780 = vstv %s1630
    %v1781 = vmul.f32 %v1780, %v1561
    %v1782 = vadd.f32 %v1779, %v1781
    %v1783 = vstv %s1631
    %v1784 = vmul.f32 %v1783, %v1579
    %v1785 = vadd.f32 %v1782, %v1784
    %v1786 = vstv %s1632
    %v1787 = vmul.f32 %v1786, %v1597
    %v1788 = vadd.f32 %v1785, %v1787
    %v1789 = vstv %s1633
    %v1790 = vmul.f32 %v1789, %v1489
    %v1791 = vstv %s1634
    %v1792 = vmul.f32 %v1791, %v1507
    %v1793 = vadd.f32 %v1790, %v1792
    %v1794 = vstv %s1635
    %v1795 = vmul.f32 %v1794, %v1525
    %v1796 = vadd.f32 %v1793, %v1795
    %v1797 = vstv %s1636
    %v1798 = vmul.f32 %v1797, %v1543
    %v1799 = vadd.f32 %v1796, %v1798
    %v1800 = vstv %s1637
    %v1801 = vmul.f32 %v1800, %v1561
    %v1802 = vadd.f32 %v1799, %v1801
    %v1803 = vstv %s1638
    %v1804 = vmul.f32 %v1803, %v1579
    %v1805 = vadd.f32 %v1802, %v1804
    %v1806 = vstv %s1639
    %v1807 = vmul.f32 %v1806, %v1597
    %v1808 = vadd.f32 %v1805, %v1807
    %v1809 = vstv %s1640
    %v1810 = vmul.f32 %v1809, %v1489
    %v1811 = vstv %s1641
    %v1812 = vmul.f32 %v1811, %v1507
    %v1813 = vadd.f32 %v1810, %v1812
    %v1814 = vstv %s1642
    %v1815 = vmul.f32 %v1814, %v1525
    %v1816 = vadd.f32 %v1813, %v1815
    %v1817 = vstv %s1643
    %v1818 = vmul.f32 %v1817, %v1543
    %v1819 = vadd.f32 %v1816, %v1818
    %v1820 = vstv %s1644
    %v1821 = vmul.f32 %v1820, %v1561
    %v1822 = vadd.f32 %v1819, %v1821
    %v1823 = vstv %s1645
    %v1824 = vmul.f32 %v1823, %v1579
    %v1825 = vadd.f32 %v1822, %v1824
    %v1826 = vstv %s1646
    %v1827 = vmul.f32 %v1826, %v1597
    %v1828 = vadd.f32 %v1825, %v1827
    %v1829 = vstv %s1654
    %v1830 = vmul.f32 %v1829, %v37
    %v1831 = vadd.f32 %v1708, %v1830
    %v1832 = vstv %s1655
    %v1833 = vmul.f32 %v1832, %v39
    %v1834 = vadd.f32 %v1831, %v1833
    %v1835 = vstv %s1656
    %v1836 = vmul.f32 %v1835, %v41
    %v1837 = vadd.f32 %v1834, %v1836
    %v1838 = vstv %s1657
    %v1839 = vmul.f32 %v1838, %v43
    %v1840 = vadd.f32 %v1837, %v1839
    %v1841 = vstv %s1658
    %v1842 = vmul.f32 %v1841, %v37
    %v1843 = vadd.f32 %v1728, %v1842
    %v1844 = vstv %s1659
    %v1845 = vmul.f32 %v1844, %v39
    %v1846 = vadd.f32 %v1843, %v1845
    %v1847 = vstv %s1660
    %v1848 = vmul.f32 %v1847, %v41
    %v1849 = vadd.f32 %v1846, %v1848
    %v1850 = vstv %s1661
    %v1851 = vmul.f32 %v1850, %v43
    %v1852 = vadd.f32 %v1849, %v1851
    %v1853 = vstv %s1662
    %v1854 = vmul.f32 %v1853, %v37
    %v1855 = vadd.f32 %v1748, %v1854
    %v1856 = vstv %s1663
    %v1857 = vmul.f32 %v1856, %v39
    %v1858 = vadd.f32 %v1855, %v1857
    %v1859 = vstv %s1664
    %v1860 = vmul.f32 %v1859, %v41
    %v1861 = vadd.f32 %v1858, %v1860
    %v1862 = vstv %s1665
    %v1863 = vmul.f32 %v1862, %v43
    %v1864 = vadd.f32 %v1861, %v1863
    %v1865 = vstv %s1666
    %v1866 = vmul.f32 %v1865, %v37
    %v1867 = vadd.f32 %v1768, %v1866
    %v1868 = vstv %s1667
    %v1869 = vmul.f32 %v1868, %v39
    %v1870 = vadd.f32 %v1867, %v1869
    %v1871 = vstv %s1668
    %v1872 = vmul.f32 %v1871, %v41
    %v1873 = vadd.f32 %v1870, %v1872
    %v1874 = vstv %s1669
    %v1875 = vmul.f32 %v1874, %v43
    %v1876 = vadd.f32 %v1873, %v1875
    %v1877 = vstv %s1670
    %v1878 = vmul.f32 %v1877, %v37
    %v1879 = vadd.f32 %v1788, %v1878
    %v1880 = vstv %s1671
    %v1881 = vmul.f32 %v1880, %v39
    %v1882 = vadd.f32 %v1879, %v1881
    %v1883 = vstv %s1672
    %v1884 = vmul.f32 %v1883, %v41
    %v1885 = vadd.f32 %v1882, %v1884
    %v1886 = vstv %s1673
    %v1887 = vmul.f32 %v1886, %v43
    %v1888 = vadd.f32 %v1885, %v1887
    %v1889 = vstv %s1674
    %v1890 = vmul.f32 %v1889, %v37
    %v1891 = vadd.f32 %v1808, %v1890
    %v1892 = vstv %s1675
    %v1893 = vmul.f32 %v1892, %v39
    %v1894 = vadd.f32 %v1891, %v1893
    %v1895 = vstv %s1676
    %v1896 = vmul.f32 %v1895, %v41
    %v1897 = vadd.f32 %v1894, %v1896
    %v1898 = vstv %s1677
    %v1899 = vmul.f32 %v1898, %v43
    %v1900 = vadd.f32 %v1897, %v1899
    %v1901 = vstv %s1678
    %v1902 = vmul.f32 %v1901, %v37
    %v1903 = vadd.f32 %v1828, %v1902
    %v1904 = vstv %s1679
    %v1905 = vmul.f32 %v1904, %v39
    %v1906 = vadd.f32 %v1903, %v1905
    %v1907 = vstv %s1680
    %v1908 = vmul.f32 %v1907, %v41
    %v1909 = vadd.f32 %v1906, %v1908
    %v1910 = vstv %s1681
    %v1911 = vmul.f32 %v1910, %v43
    %v1912 = vadd.f32 %v1909, %v1911
    %s1913 = sadd.f32 %s1647, %s1682
    %v1914 = vstv %s1913
    %v1915 = vadd.f32 %v1840, %v1914
    %vm1916 = vcmp.gt.f32.partialorder %v1915, 20.0
    %v1917 = vmin.f32 %v1915, 20.0
    %v1918 = vmul.f32 %v1917, 1.442695
    %v1919 = vpow.pop %v1918
    %v1920 = vadd.f32 %v1919, 1.0
    %v1921 = vlog2.pop %v1920
    %v1922 = vmul.f32 %v1921, 0.6931472
    %v1923 = vmul.f32 -0.5, %v1919
    %v1924 = vadd.f32 %v1923, 1.0
    %v1925 = vmul.f32 %v1924, %v1919
    %v1926 = vand.u32 2147483647, %v1919
    %vm1927 = vcmp.lt.f32.partialorder %v1926, 0.0004427343
    %v1928 = vsel %vm1927, %v1925, %v1922
    %v1929 = vsel %vm1916, %v1915, %v1928
    %v1930 = vsub.f32 0.0, %v1929
    %s1931 = sadd.f32 %s1648, %s1683
    %v1932 = vstv %s1931
    %v1933 = vadd.f32 %v1852, %v1932
    %vm1934 = vcmp.gt.f32.partialorder %v1933, 20.0
    %v1935 = vmin.f32 %v1933, 20.0
    %v1936 = vmul.f32 %v1935, 1.442695
    %v1937 = vpow.pop %v1936
    %v1938 = vadd.f32 %v1937, 1.0
    %v1939 = vlog2.pop %v1938
    %v1940 = vmul.f32 %v1939, 0.6931472
    %v1941 = vmul.f32 -0.5, %v1937
    %v1942 = vadd.f32 %v1941, 1.0
    %v1943 = vmul.f32 %v1942, %v1937
    %v1944 = vand.u32 2147483647, %v1937
    %vm1945 = vcmp.lt.f32.partialorder %v1944, 0.0004427343
    %v1946 = vsel %vm1945, %v1943, %v1940
    %v1947 = vsel %vm1934, %v1933, %v1946
    %v1948 = vsub.f32 0.0, %v1947
    %s1949 = sadd.f32 %s1649, %s1684
    %v1950 = vstv %s1949
    %v1951 = vadd.f32 %v1864, %v1950
    %vm1952 = vcmp.gt.f32.partialorder %v1951, 20.0
    %v1953 = vmin.f32 %v1951, 20.0
    %v1954 = vmul.f32 %v1953, 1.442695
    %v1955 = vpow.pop %v1954
    %v1956 = vadd.f32 %v1955, 1.0
    %v1957 = vlog2.pop %v1956
    %v1958 = vmul.f32 %v1957, 0.6931472
    %v1959 = vmul.f32 -0.5, %v1955
    %v1960 = vadd.f32 %v1959, 1.0
    %v1961 = vmul.f32 %v1960, %v1955
    %v1962 = vand.u32 2147483647, %v1955
    %vm1963 = vcmp.lt.f32.partialorder %v1962, 0.0004427343
    %v1964 = vsel %vm1963, %v1961, %v1958
    %v1965 = vsel %vm1952, %v1951, %v1964
    %v1966 = vsub.f32 0.0, %v1965
    %s1967 = sadd.f32 %s1650, %s1685
    %v1968 = vstv %s1967
    %v1969 = vadd.f32 %v1876, %v1968
    %vm1970 = vcmp.gt.f32.partialorder %v1969, 20.0
    %v1971 = vmin.f32 %v1969, 20.0
    %v1972 = vmul.f32 %v1971, 1.442695
    %v1973 = vpow.pop %v1972
    %v1974 = vadd.f32 %v1973, 1.0
    %v1975 = vlog2.pop %v1974
    %v1976 = vmul.f32 %v1975, 0.6931472
    %v1977 = vmul.f32 -0.5, %v1973
    %v1978 = vadd.f32 %v1977, 1.0
    %v1979 = vmul.f32 %v1978, %v1973
    %v1980 = vand.u32 2147483647, %v1973
    %vm1981 = vcmp.lt.f32.partialorder %v1980, 0.0004427343
    %v1982 = vsel %vm1981, %v1979, %v1976
    %v1983 = vsel %vm1970, %v1969, %v1982
    %v1984 = vsub.f32 0.0, %v1983
    %s1985 = sadd.f32 %s1651, %s1686
    %v1986 = vstv %s1985
    %v1987 = vadd.f32 %v1888, %v1986
    %vm1988 = vcmp.gt.f32.partialorder %v1987, 20.0
    %v1989 = vmin.f32 %v1987, 20.0
    %v1990 = vmul.f32 %v1989, 1.442695
    %v1991 = vpow.pop %v1990
    %v1992 = vadd.f32 %v1991, 1.0
    %v1993 = vlog2.pop %v1992
    %v1994 = vmul.f32 %v1993, 0.6931472
    %v1995 = vmul.f32 -0.5, %v1991
    %v1996 = vadd.f32 %v1995, 1.0
    %v1997 = vmul.f32 %v1996, %v1991
    %v1998 = vand.u32 2147483647, %v1991
    %vm1999 = vcmp.lt.f32.partialorder %v1998, 0.0004427343
    %v2000 = vsel %vm1999, %v1997, %v1994
    %v2001 = vsel %vm1988, %v1987, %v2000
    %v2002 = vsub.f32 0.0, %v2001
    %s2003 = sadd.f32 %s1652, %s1687
    %v2004 = vstv %s2003
    %v2005 = vadd.f32 %v1900, %v2004
    %vm2006 = vcmp.gt.f32.partialorder %v2005, 20.0
    %v2007 = vmin.f32 %v2005, 20.0
    %v2008 = vmul.f32 %v2007, 1.442695
    %v2009 = vpow.pop %v2008
    %v2010 = vadd.f32 %v2009, 1.0
    %v2011 = vlog2.pop %v2010
    %v2012 = vmul.f32 %v2011, 0.6931472
    %v2013 = vmul.f32 -0.5, %v2009
    %v2014 = vadd.f32 %v2013, 1.0
    %v2015 = vmul.f32 %v2014, %v2009
    %v2016 = vand.u32 2147483647, %v2009
    %vm2017 = vcmp.lt.f32.partialorder %v2016, 0.0004427343
    %v2018 = vsel %vm2017, %v2015, %v2012
    %v2019 = vsel %vm2006, %v2005, %v2018
    %v2020 = vsub.f32 0.0, %v2019
    %s2021 = sadd.f32 %s1653, %s1688
    %v2022 = vstv %s2021
    %v2023 = vadd.f32 %v1912, %v2022
    %vm2024 = vcmp.gt.f32.partialorder %v2023, 20.0
    %v2025 = vmin.f32 %v2023, 20.0
    %v2026 = vmul.f32 %v2025, 1.442695
    %v2027 = vpow.pop %v2026
    %v2028 = vadd.f32 %v2027, 1.0
    %v2029 = vlog2.pop %v2028
    %v2030 = vmul.f32 %v2029, 0.6931472
    %v2031 = vmul.f32 -0.5, %v2027
    %v2032 = vadd.f32 %v2031, 1.0
    %v2033 = vmul.f32 %v2032, %v2027
    %v2034 = vand.u32 2147483647, %v2027
    %vm2035 = vcmp.lt.f32.partialorder %v2034, 0.0004427343
    %v2036 = vsel %vm2035, %v2033, %v2030
    %v2037 = vsel %vm2024, %v2023, %v2036
    %v2038 = vsub.f32 0.0, %v2037
    %s2039 = sld [smem:[#allocation2 + $0x18f]]
    %s2040 = sld [smem:[#allocation2 + $0x190]]
    %s2041 = sld [smem:[#allocation2 + $0x191]]
    %s2042 = sld [smem:[#allocation2 + $0x192]]
    %s2043 = sld [smem:[#allocation2 + $0x193]]
    %s2044 = sld [smem:[#allocation2 + $0x194]]
    %s2045 = sld [smem:[#allocation2 + $0x195]]
    %s2046 = sld [smem:[#allocation2 + $0x196]]
    %s2047 = sld [smem:[#allocation2 + $0x197]]
    %s2048 = sld [smem:[#allocation2 + $0x198]]
    %s2049 = sld [smem:[#allocation2 + $0x199]]
    %s2050 = sld [smem:[#allocation2 + $0x19a]]
    %s2051 = sld [smem:[#allocation2 + $0x19b]]
    %v2052 = vstv %s2039
    %v2053 = vmul.f32 %v2052, %v1930
    %v2054 = vstv %s2040
    %v2055 = vmul.f32 %v2054, %v1948
    %v2056 = vadd.f32 %v2053, %v2055
    %v2057 = vstv %s2041
    %v2058 = vmul.f32 %v2057, %v1966
    %v2059 = vadd.f32 %v2056, %v2058
    %v2060 = vstv %s2042
    %v2061 = vmul.f32 %v2060, %v1984
    %v2062 = vadd.f32 %v2059, %v2061
    %v2063 = vstv %s2043
    %v2064 = vmul.f32 %v2063, %v2002
    %v2065 = vadd.f32 %v2062, %v2064
    %v2066 = vstv %s2044
    %v2067 = vmul.f32 %v2066, %v2020
    %v2068 = vadd.f32 %v2065, %v2067
    %v2069 = vstv %s2045
    %v2070 = vmul.f32 %v2069, %v2038
    %v2071 = vadd.f32 %v2068, %v2070
    %v2072 = vstv %s2047
    %v2073 = vmul.f32 %v2072, %v37
    %v2074 = vadd.f32 %v2071, %v2073
    %v2075 = vstv %s2048
    %v2076 = vmul.f32 %v2075, %v39
    %v2077 = vadd.f32 %v2074, %v2076
    %v2078 = vstv %s2049
    %v2079 = vmul.f32 %v2078, %v41
    %v2080 = vadd.f32 %v2077, %v2079
    %v2081 = vstv %s2050
    %v2082 = vmul.f32 %v2081, %v43
    %v2083 = vadd.f32 %v2080, %v2082
    %s2084 = sadd.f32 %s2046, %s2051
    %v2085 = vstv %s2084
    %v2086 = vadd.f32 %v2083, %v2085
    %vm2087 = vcmp.gt.f32.partialorder %v2086, 20.0
    %v2088 = vmin.f32 %v2086, 20.0
    %v2089 = vmul.f32 %v2088, 1.442695
    %v2090 = vpow.pop %v2089
    %v2091 = vadd.f32 %v2090, 1.0
    %v2092 = vlog2.pop %v2091
    %v2093 = vmul.f32 %v2092, 0.6931472
    %v2094 = vmul.f32 -0.5, %v2090
    %v2095 = vadd.f32 %v2094, 1.0
    %v2096 = vmul.f32 %v2095, %v2090
    %v2097 = vand.u32 2147483647, %v2090
    %vm2098 = vcmp.lt.f32.partialorder %v2097, 0.0004427343
    %v2099 = vsel %vm2098, %v2096, %v2093
    %v2100 = vsel %vm2087, %v2086, %v2099
    %v2101 = vsub.f32 0.0, %v2100
    %2102 = vst [vmem:[#allocation7] sm:$0x1] %v2101
    // Predicated region
    $region18: #{tpu_custom_call.1} parent=1 // pred_check
      _
    $region19: #{tpu_custom_call.1} parent=1 // pred_check_branch
      %2104 = sbr.rel (0) target = $region21
    $region20: #{tpu_custom_call.1} parent=1 // pred_region
      %s2106 = ssub.s32 16, 16
      %2107 = vsyncadd [#allocation4], %s2106
      %s2109 = sshll.u32 [#allocation7], 4
      %s2110 = int_to_ptr.vmem [resolvable:$true] %s2109
      %2112 = dma.vmem_to_hbm [thread:$0]  %s2110, 16, %s2, [#allocation4]
    $region21: #{tpu_custom_call.1} parent=1 // pred_fallthru
      _
    // Predicated region
    $region22: #{tpu_custom_call.1} parent=1 // pred_check
      _
    $region23: #{tpu_custom_call.1} parent=1 // pred_check_branch
      %2114 = sbr.rel (0) target = $region25
    $region24: #{tpu_custom_call.1} parent=1 // pred_region
      %2115 = dma.done [#allocation4], 16
    $region25: #{tpu_custom_call.1} parent=1 // pred_fallthru
      _
    %2116 = vsyncpa [#allocation3], 1
    %2117 = vsyncpa [#allocation4], 1
    %2118 = vsyncpa [#allocation5], 1

</llo_original>
